<compile_context>
chip_gen: v7x
topology: tpu7x:2x2x1
jax: 0.10.0
libtpu: 0.0.40
codegen_flags: <defaults>
</compile_context>

<pallas_src>
import jax
import jax.numpy as jnp
from jax.experimental import pallas as pl
from jax.experimental.pallas import tpu as pltpu

EPS = 1e-5
LANE_C = 128        # lane-dense padded channel count
PAD_L = 16          # pass-2 scratch interior column offset (aligned for f32 & bf16)
PAD_W = 24          # total extra scratch columns (16 left + 8 right)


# ---------------------------------------------------------------------------
# generation-aware tiling helpers
# ---------------------------------------------------------------------------
def _vmem_limit_bytes():
    cap = 64 * 1024 * 1024            # conservative default (v7x physical VMEM)
    try:
        info = pltpu.get_tpu_info()
        cap = int(getattr(info, "vmem_capacity_bytes", cap) or cap)
    except Exception:
        pass
    # ~25% headroom: 128 MiB parts (v5e/v6e) -> 96 MiB, 64 MiB parts (v7x) -> 48 MiB
    return min(cap * 3 // 4, 96 * 1024 * 1024)


def _choose_tiles(N, H, W, C, itemsize, vmem_limit):
    """Pick (batch block NB, row-strip height TH).

    Per grid step the dominant VMEM users are the activation tile, its 3
    column-shifted copies, the 9x im2col patch, the f32 conv result and the
    double-buffered input/output blocks (~20x the tile), plus the weights.
    Prefer the largest strip that fits, then the largest batch block that still
    leaves >= 2 grid steps (so v7x megacore can split the grid)."""
    budget = max(vmem_limit // 2, 8 * 1024 * 1024)
    w_bytes = 4 * 9 * C * C * itemsize

    def step_bytes(nb, th):
        return 20 * nb * (th + 4) * (W + PAD_W) * C * itemsize + w_bytes

    th_opts = sorted((d for d in range(2, H + 1, 2) if H % d == 0), reverse=True)
    th = next((d for d in th_opts if step_bytes(1, d) <= budget), th_opts[-1])
    n_strips = H // th

    nb_opts = sorted((d for d in range(1, N + 1) if N % d == 0), reverse=True)
    nb = next((d for d in nb_opts
               if step_bytes(d, th) <= budget and (N // d) * n_strips >= 2), 1)
    return nb, th


def _const_spec(block_shape, single_buffer):
    """BlockSpec for a grid-invariant operand (weights / BN scale & shift)."""
    index_map = lambda *_: (0,) * len(block_shape)
    if single_buffer:
        return pl.BlockSpec(block_shape, index_map, pipeline_mode=pl.Buffered(1))
    return pl.BlockSpec(block_shape, index_map)


# ---------------------------------------------------------------------------
# in-kernel 3x3 conv: one im2col MXU matmul per tile
# ---------------------------------------------------------------------------
def _im2col_conv3x3(padded, w_ref, rows_out, cols_out, col0):
    """3x3 'same' conv of an already zero-padded activation block.

    padded  : (NB, rows_out + 2, Wp, C) value, interior columns start at col0 + 1.
    w_ref   : (9*C, C) im2col weight (tap order kh, kw, cin).
    The 3 column-shifted operands are built once (2 sublane realigns total) and
    reused for the 3 row taps; tap accumulation happens inside the MXU via a
    single matmul with K = 9*C.  Returns f32 (NB, rows_out, cols_out, C)."""
    NB, R, Wp, C = padded.shape
    shifted = tuple(padded[:, :, col0 + dw: col0 + dw + cols_out, :]
                    for dw in range(3))
    cols = [shifted[dw][:, dh:dh + rows_out] for dh in range(3) for dw in range(3)]
    patch = jnp.concatenate(cols, axis=-1).reshape(NB * rows_out * cols_out, 9 * C)
    y = jnp.dot(patch, w_ref[...], preferred_element_type=jnp.float32)
    return y.reshape(NB, rows_out, cols_out, C)


# ---------------------------------------------------------------------------
# pass 1: conv1 on a halo'd row strip + BN1 partial sums
# ---------------------------------------------------------------------------
def conv_stats_kernel(x_ref, w_ref, y_ref, stats_ref):
    NB, R, Wp, C = x_ref.shape            # R = TH + 4 input rows, Wp = W + 2
    TO, W = R - 2, Wp - 2                 # TH + 2 output rows (incl. conv2 halo)
    y = _im2col_conv3x3(x_ref[...], w_ref, TO, W, 0)
    y_c = y.astype(y_ref.dtype)
    y_ref[...] = y_c
    # BN statistics from the *stored* values, over the TH interior rows only
    # (halo rows are owned by the neighbouring strip -> each row counted once).
    v = y_c[:, 1:TO - 1].astype(jnp.float32).reshape(-1, C)
    stats_ref[0:1, :] = jnp.sum(v, axis=0, keepdims=True)
    stats_ref[1:2, :] = jnp.sum(v * v, axis=0, keepdims=True)


# ---------------------------------------------------------------------------
# pass 2: BN1 (folded scale/shift) + ReLU -> conv2 + BN2 partial sums
# ---------------------------------------------------------------------------
def bn_relu_conv_stats_kernel(y1_ref, scale_ref, shift_ref, w_ref,
                              y2_ref, stats_ref, pad_ref):
    NB, R, W, C = y1_ref.shape            # R = TH + 2 (strip + conv2 halo rows)
    TH = R - 2
    dt = pad_ref.dtype
    h = pl.program_id(1)

    # BN1 + ReLU in f32 (v5e-safe); matmul operand cast to the compute dtype.
    a = y1_ref[...].astype(jnp.float32) * scale_ref[...] + shift_ref[...]
    a = jnp.maximum(a, 0.0).astype(dt)

    # conv2 zero padding: 8-wide column bands around the interior (aligned
    # stores) and, for the first/last strip, the halo row outside the image.
    # Done every step (not one-shot) so it stays correct under megacore splits.
    pad_ref[:, :, PAD_L - 8:PAD_L, :] = jnp.zeros((NB, R, 8, C), dt)
    pad_ref[:, :, PAD_L + W:PAD_L + W + 8, :] = jnp.zeros((NB, R, 8, C), dt)
    pad_ref[:, :, PAD_L:PAD_L + W, :] = a          # sublane-aligned interior store

    @pl.when(h == 0)
    def _():
        pad_ref[:, 0:1, PAD_L:PAD_L + W, :] = jnp.zeros((NB, 1, W, C), dt)

    @pl.when(h == pl.num_programs(1) - 1)
    def _():
        pad_ref[:, R - 1:R, PAD_L:PAD_L + W, :] = jnp.zeros((NB, 1, W, C), dt)

    y = _im2col_conv3x3(pad_ref[...], w_ref, TH, W, PAD_L - 1)
    y_c = y.astype(y2_ref.dtype)
    y2_ref[...] = y_c
    v = y_c.astype(jnp.float32).reshape(-1, C)
    stats_ref[0:1, :] = jnp.sum(v, axis=0, keepdims=True)
    stats_ref[1:2, :] = jnp.sum(v * v, axis=0, keepdims=True)


# ---------------------------------------------------------------------------
# pass 3: BN2 + ReLU + 2x2 max-pool fused epilogue (lane-dense output store)
# ---------------------------------------------------------------------------
def bn_relu_pool_kernel(y2_ref, scale_ref, shift_ref, out_ref):
    NB, TH, W, C = y2_ref.shape
    Hh, Wh = TH // 2, W // 2
    a = y2_ref[...].astype(jnp.float32) * scale_ref[...] + shift_ref[...]
    a = jnp.maximum(a, 0.0)
    a = a.reshape(NB, Hh, 2, W, C)
    a = jnp.maximum(a[:, :, 0], a[:, :, 1])        # max over row pairs
    a = a.reshape(NB, Hh * Wh, 2, C)
    a = jnp.maximum(a[:, :, 0], a[:, :, 1])        # max over column pairs
    out_ref[...] = a.reshape(NB, Hh, Wh, C).astype(out_ref.dtype)


# ---------------------------------------------------------------------------
# wrapper: NCHW in / NCHW out, PyTorch parameter conventions
# ---------------------------------------------------------------------------
def _finish_bn(stats, gamma, beta, count):
    ssum = jnp.sum(stats[:, :, 0, :], axis=(0, 1))
    ssq = jnp.sum(stats[:, :, 1, :], axis=(0, 1))
    mean = ssum / count
    # single-pass variance; clamp tiny negatives from cancellation
    var = jnp.maximum(ssq / count - mean * mean, 0.0)
    scale = gamma * jax.lax.rsqrt(var + EPS)
    shift = beta - mean * scale
    return scale.reshape(1, -1), shift.reshape(1, -1)


def residual_block(x_nchw, w1_oihw, g1, b1, w2_oihw, g2, b2,
                   *, compute_dtype=jnp.bfloat16):
    N, Cin, H, W = x_nchw.shape
    Cout = w1_oihw.shape[0]
    C = LANE_C
    assert Cin <= C and Cout <= C, "TODO(synk): add a channel grid axis (>128 ch)"
    assert H % 2 == 0 and W % 2 == 0
    itemsize = jnp.dtype(compute_dtype).itemsize

    vmem_limit = _vmem_limit_bytes()
    NB, TH = _choose_tiles(N, H, W, C, itemsize, vmem_limit)
    nH, Gn = H // TH, N // NB
    Hh, Wh = H // 2, W // 2

    # Layout prep (fused by XLA): NHWC, lane pad to 128, W halo, and halo'd row
    # strips (2 extra rows each side so pass 1 also produces pass 2's conv halo).
    x = jnp.transpose(x_nchw, (0, 2, 3, 1)).astype(jnp.float32)
    x = jnp.pad(x, ((0, 0), (2, 2), (1, 1), (0, C - Cin)))
    x_strips = jnp.stack([x[:, h * TH: h * TH + TH + 4] for h in range(nH)],
                         axis=1).astype(compute_dtype)        # (N, nH, TH+4, W+2, C)

    def prep_w(w_oihw, cin):
        w = jnp.transpose(w_oihw, (2, 3, 1, 0)).astype(jnp.float32)    # HWIO
        w = jnp.pad(w, ((0, 0), (0, 0), (0, C - cin), (0, C - w.shape[-1])))
        return w.reshape(9 * C, C).astype(compute_dtype)               # im2col weight

    w1p, w2p = prep_w(w1_oihw, Cin), prep_w(w2_oihw, Cout)

    def pad_c(v):
        return jnp.pad(v.astype(jnp.float32), (0, C - v.shape[0]))

    g1p, b1p, g2p, b2p = pad_c(g1), pad_c(b1), pad_c(g2), pad_c(b2)

    grid = (Gn, nH)
    cparams = pltpu.CompilerParams(
        dimension_semantics=("parallel", "parallel"),
        vmem_limit_bytes=vmem_limit)

    act_in1 = pl.BlockSpec((NB, None, TH + 4, W + 2, C), lambda i, h: (i, h, 0, 0, 0))
    y1_spec = pl.BlockSpec((NB, None, TH + 2, W, C), lambda i, h: (i, h, 0, 0, 0))
    y2_spec = pl.BlockSpec((NB, None, TH, W, C), lambda i, h: (i, h, 0, 0, 0))
    st_spec = pl.BlockSpec((None, None, 2, C), lambda i, h: (i, h, 0, 0))
    out_spec = pl.BlockSpec((NB, None, TH // 2, W // 2, C),
                            lambda i, h: (i, h, 0, 0, 0))

    y1_size = N * nH * (TH + 2) * W * C
    y2_size = N * H * W * C
    flops1 = 2 * N * (H + 2 * nH) * W * (9 * C) * C
    flops2 = 2 * N * H * W * (9 * C) * C

    # -------- pass 1: conv1 + BN1 partial stats --------
    def pass1(single_buf):
        return pl.pallas_call(
            conv_stats_kernel,
            grid=grid,
            in_specs=[act_in1, _const_spec((9 * C, C), single_buf)],
            out_specs=[y1_spec, st_spec],
            out_shape=[jax.ShapeDtypeStruct((N, nH, TH + 2, W, C), compute_dtype),
                       jax.ShapeDtypeStruct((Gn, nH, 2, C), jnp.float32)],
            compiler_params=cparams,
            cost_estimate=pl.CostEstimate(
                flops=flops1, transcendentals=0,
                bytes_accessed=int((x_strips.size + w1p.size + y1_size) * itemsize
                                   + Gn * nH * 2 * C * 4)),
        )(x_strips, w1p)

    single_buf = True
    try:
        y1, s1 = pass1(True)
    except Exception:        # pipeline_mode / Buffered(1) unsupported -> default buffering
        single_buf = False
        y1, s1 = pass1(False)

    scale1, shift1 = _finish_bn(s1, g1p, b1p, N * H * W)

    # -------- pass 2: BN1 + ReLU -> conv2 + BN2 partial stats --------
    y2, s2 = pl.pallas_call(
        bn_relu_conv_stats_kernel,
        grid=grid,
        in_specs=[y1_spec,
                  _const_spec((1, C), single_buf),
                  _const_spec((1, C), single_buf),
                  _const_spec((9 * C, C), single_buf)],
        out_specs=[y2_spec, st_spec],
        out_shape=[jax.ShapeDtypeStruct((N, nH, TH, W, C), compute_dtype),
                   jax.ShapeDtypeStruct((Gn, nH, 2, C), jnp.float32)],
        scratch_shapes=[pltpu.VMEM((NB, TH + 2, W + PAD_W, C), compute_dtype)],
        compiler_params=cparams,
        cost_estimate=pl.CostEstimate(
            flops=flops2, transcendentals=0,
            bytes_accessed=int((y1_size + y2_size + w2p.size) * itemsize
                               + Gn * nH * 2 * C * 4 + 2 * C * 4)),
    )(y1, scale1, shift1, w2p)

    scale2, shift2 = _finish_bn(s2, g2p, b2p, N * H * W)

    # -------- pass 3: BN2 + ReLU + 2x2 max-pool --------
    out = pl.pallas_call(
        bn_relu_pool_kernel,
        grid=grid,
        in_specs=[y2_spec,
                  _const_spec((1, C), single_buf),
                  _const_spec((1, C), single_buf)],
        out_specs=out_spec,
        out_shape=jax.ShapeDtypeStruct((N, nH, TH // 2, W // 2, C), jnp.float32),
        compiler_params=cparams,
        cost_estimate=pl.CostEstimate(
            flops=4 * N * H * W * C, transcendentals=0,
            bytes_accessed=int(y2_size * itemsize + N * Hh * Wh * C * 4)),
    )(y2, scale2, shift2)

    # merge strips, drop channel padding, back to NCHW
    out = out.reshape(N, Hh, Wh, C)[..., :Cout]
    return jnp.transpose(out, (0, 3, 1, 2))


# ---------------------------------------------------------------------------
# pure-JAX reference (same semantics as the PyTorch module in train mode)
# ---------------------------------------------------------------------------
def ref_forward(x, w1, g1, b1, w2, g2, b2):
    def conv(x, w):
        return jax.lax.conv_general_dilated(
            x, w, window_strides=(1, 1), padding=((1, 1), (1, 1)),
            dimension_numbers=("NCHW", "OIHW", "NCHW"))

    def bn_relu(x, g, b):
        mean = jnp.mean(x, axis=(0, 2, 3), keepdims=True)
        var = jnp.mean((x - mean) ** 2, axis=(0, 2, 3), keepdims=True)
        y = (x - mean) * jax.lax.rsqrt(var + EPS)
        y = y * g.reshape(1, -1, 1, 1) + b.reshape(1, -1, 1, 1)
        return jnp.maximum(y, 0.0)

    h = bn_relu(conv(x, w1), g1, b1)
    h = bn_relu(conv(h, w2), g2, b2)
    return jax.lax.reduce_window(h, -jnp.inf, jax.lax.max,
                                 (1, 1, 2, 2), (1, 1, 2, 2), "VALID")


if __name__ == "__main__":
    key = jax.random.PRNGKey(0)
    N, Cin, Cout, H, W = 2, 4, 8, 16, 16
    k1, k2, k3 = jax.random.split(key, 3)

    x = jax.random.normal(k1, (N, Cin, H, W), jnp.float32)
    w1 = jax.random.normal(k2, (Cout, Cin, 3, 3), jnp.float32) * 0.1
    w2 = jax.random.normal(k3, (Cout, Cout, 3, 3), jnp.float32) * 0.1
    # BatchNorm2d default init: weight=1, bias=0
    g1 = jnp.ones((Cout,), jnp.float32)
    b1 = jnp.zeros((Cout,), jnp.float32)
    g2 = jnp.ones((Cout,), jnp.float32)
    b2 = jnp.zeros((Cout,), jnp.float32)

    ref = ref_forward(x, w1, g1, b1, w2, g2, b2)

    # default path: bf16 matmuls / intermediates, f32 BN statistics & elementwise
    out = jax.block_until_ready(residual_block(x, w1, g1, b1, w2, g2, b2))
    assert out.shape == (N, Cout, H // 2, W // 2), out.shape
    err = float(jnp.max(jnp.abs(out - ref)))
    assert err < 1e-1, f"bf16 path max abs err {err}"

    # f32 path: reference-accurate
    out32 = jax.block_until_ready(
        residual_block(x, w1, g1, b1, w2, g2, b2, compute_dtype=jnp.float32))
    err32 = float(jnp.max(jnp.abs(out32 - ref)))
    assert err32 < 1e-3, f"f32 path max abs err {err32}"

    print("KERNEL_OK")
</pallas_src>

<mosaic_0001>
module attributes {stable_mosaic.version = 11 : i64} {
  func.func @conv_stats_kernel(%arg0: i32, %arg1: i32, %arg2: memref<1x1x20x18x128xbf16, #tpu.memory_space<vmem>>, %arg3: memref<1152x128xbf16, #tpu.memory_space<vmem>>, %arg4: memref<1x1x18x16x128xbf16, #tpu.memory_space<vmem>>, %arg5: memref<1x1x2x128xf32, #tpu.memory_space<vmem>>) attributes {dimension_semantics = [#tpu.dimension_semantics<parallel>, #tpu.dimension_semantics<parallel>], iteration_bounds = array<i64: 2, 1>, scalar_prefetch = 0 : i64, scratch_operands = 0 : i64, tpu.core_type = #tpu.core_type<tc>, window_params = [{transform_indices = @transform_0, window_bounds = array<i64: 1, 1, 20, 18, 128>}, {pipeline_mode = #tpu.pipeline_mode<synchronous>, transform_indices = @transform_1, window_bounds = array<i64: 1152, 128>}, {transform_indices = @transform_2, window_bounds = array<i64: 1, 1, 18, 16, 128>}, {transform_indices = @transform_3, window_bounds = array<i64: 1, 1, 2, 128>}]} {
    %c0 = arith.constant 0 : index
    %c0_0 = arith.constant 0 : index
    %c0_1 = arith.constant 0 : index
    %c0_2 = arith.constant 0 : index
    %c0_3 = arith.constant 0 : index
    %0 = vector.load %arg2[%c0, %c0_0, %c0_1, %c0_2, %c0_3] : memref<1x1x20x18x128xbf16, #tpu.memory_space<vmem>>, vector<1x1x20x18x128xbf16>
    %1 = vector.shape_cast %0 : vector<1x1x20x18x128xbf16> to vector<1x20x18x128xbf16>
    %2 = vector.extract_strided_slice %1 {offsets = [0, 0, 0, 0], sizes = [1, 20, 16, 128], strides = [1, 1, 1, 1]} : vector<1x20x18x128xbf16> to vector<1x20x16x128xbf16>
    %3 = vector.extract_strided_slice %1 {offsets = [0, 0, 1, 0], sizes = [1, 20, 16, 128], strides = [1, 1, 1, 1]} : vector<1x20x18x128xbf16> to vector<1x20x16x128xbf16>
    %4 = vector.extract_strided_slice %1 {offsets = [0, 0, 2, 0], sizes = [1, 20, 16, 128], strides = [1, 1, 1, 1]} : vector<1x20x18x128xbf16> to vector<1x20x16x128xbf16>
    %5 = vector.extract_strided_slice %2 {offsets = [0, 0, 0, 0], sizes = [1, 18, 16, 128], strides = [1, 1, 1, 1]} : vector<1x20x16x128xbf16> to vector<1x18x16x128xbf16>
    %6 = vector.extract_strided_slice %3 {offsets = [0, 0, 0, 0], sizes = [1, 18, 16, 128], strides = [1, 1, 1, 1]} : vector<1x20x16x128xbf16> to vector<1x18x16x128xbf16>
    %7 = vector.extract_strided_slice %4 {offsets = [0, 0, 0, 0], sizes = [1, 18, 16, 128], strides = [1, 1, 1, 1]} : vector<1x20x16x128xbf16> to vector<1x18x16x128xbf16>
    %8 = vector.extract_strided_slice %2 {offsets = [0, 1, 0, 0], sizes = [1, 18, 16, 128], strides = [1, 1, 1, 1]} : vector<1x20x16x128xbf16> to vector<1x18x16x128xbf16>
    %9 = vector.extract_strided_slice %3 {offsets = [0, 1, 0, 0], sizes = [1, 18, 16, 128], strides = [1, 1, 1, 1]} : vector<1x20x16x128xbf16> to vector<1x18x16x128xbf16>
    %10 = vector.extract_strided_slice %4 {offsets = [0, 1, 0, 0], sizes = [1, 18, 16, 128], strides = [1, 1, 1, 1]} : vector<1x20x16x128xbf16> to vector<1x18x16x128xbf16>
    %11 = vector.extract_strided_slice %2 {offsets = [0, 2, 0, 0], sizes = [1, 18, 16, 128], strides = [1, 1, 1, 1]} : vector<1x20x16x128xbf16> to vector<1x18x16x128xbf16>
    %12 = vector.extract_strided_slice %3 {offsets = [0, 2, 0, 0], sizes = [1, 18, 16, 128], strides = [1, 1, 1, 1]} : vector<1x20x16x128xbf16> to vector<1x18x16x128xbf16>
    %13 = vector.extract_strided_slice %4 {offsets = [0, 2, 0, 0], sizes = [1, 18, 16, 128], strides = [1, 1, 1, 1]} : vector<1x20x16x128xbf16> to vector<1x18x16x128xbf16>
    %14 = tpu.concatenate %5, %6, %7, %8, %9, %10, %11, %12, %13 in 3 : vector<1x18x16x128xbf16>, vector<1x18x16x128xbf16>, vector<1x18x16x128xbf16>, vector<1x18x16x128xbf16>, vector<1x18x16x128xbf16>, vector<1x18x16x128xbf16>, vector<1x18x16x128xbf16>, vector<1x18x16x128xbf16>, vector<1x18x16x128xbf16> -> vector<1x18x16x1152xbf16>
    %15 = vector.shape_cast %14 : vector<1x18x16x1152xbf16> to vector<288x1152xbf16>
    %c0_4 = arith.constant 0 : index
    %c0_5 = arith.constant 0 : index
    %16 = vector.load %arg3[%c0_4, %c0_5] : memref<1152x128xbf16, #tpu.memory_space<vmem>>, vector<1152x128xbf16>
    %cst = arith.constant dense<0.000000e+00> : vector<288x128xf32>
    %17 = tpu.matmul %15, %16, %cst {dimension_numbers = #tpu.dot_dimension_numbers<[1], [0], [0], [1], [0, 0, 1, 1], [], []>} : vector<288x1152xbf16>, vector<1152x128xbf16>, vector<288x128xf32> -> vector<288x128xf32>
    %18 = vector.shape_cast %17 : vector<288x128xf32> to vector<1x18x16x128xf32>
    %19 = arith.truncf %18 : vector<1x18x16x128xf32> to vector<1x18x16x128xbf16>
    %c0_6 = arith.constant 0 : index
    %c0_7 = arith.constant 0 : index
    %c0_8 = arith.constant 0 : index
    %c0_9 = arith.constant 0 : index
    %c0_10 = arith.constant 0 : index
    %20 = vector.load %arg4[%c0_6, %c0_7, %c0_8, %c0_9, %c0_10] : memref<1x1x18x16x128xbf16, #tpu.memory_space<vmem>>, vector<1x1x18x16x128xbf16>
    %21 = vector.shape_cast %20 : vector<1x1x18x16x128xbf16> to vector<1x18x16x128xbf16>
    %22 = vector.shape_cast %19 : vector<1x18x16x128xbf16> to vector<1x1x18x16x128xbf16>
    tpu.vector_store %arg4[%c0_6, %c0_7, %c0_8, %c0_9, %c0_10], %22 {strides = array<i32>} : memref<1x1x18x16x128xbf16, #tpu.memory_space<vmem>>, vector<1x1x18x16x128xbf16>,
    %23 = vector.extract_strided_slice %19 {offsets = [0, 1, 0, 0], sizes = [1, 16, 16, 128], strides = [1, 1, 1, 1]} : vector<1x18x16x128xbf16> to vector<1x16x16x128xbf16>
    %24 = arith.extf %23 : vector<1x16x16x128xbf16> to vector<1x16x16x128xf32>
    %25 = vector.shape_cast %24 : vector<1x16x16x128xf32> to vector<256x128xf32>
    %cst_11 = arith.constant dense<0.000000e+00> : vector<128xf32>
    %26 = vector.multi_reduction <add>, %25, %cst_11 [0] : vector<256x128xf32> to vector<128xf32>
    %27 = vector.shape_cast %26 : vector<128xf32> to vector<1x128xf32>
    %c0_12 = arith.constant 0 : index
    %c0_13 = arith.constant 0 : index
    %c0_14 = arith.constant 0 : index
    %c0_15 = arith.constant 0 : index
    %28 = vector.load %arg5[%c0_12, %c0_13, %c0_14, %c0_15] : memref<1x1x2x128xf32, #tpu.memory_space<vmem>>, vector<1x1x1x128xf32>
    %29 = vector.shape_cast %28 : vector<1x1x1x128xf32> to vector<1x128xf32>
    %30 = vector.shape_cast %27 : vector<1x128xf32> to vector<1x1x1x128xf32>
    tpu.vector_store %arg5[%c0_12, %c0_13, %c0_14, %c0_15], %30 {strides = array<i32>} : memref<1x1x2x128xf32, #tpu.memory_space<vmem>>, vector<1x1x1x128xf32>,
    %31 = arith.mulf %25, %25 : vector<256x128xf32>
    %cst_16 = arith.constant dense<0.000000e+00> : vector<128xf32>
    %32 = vector.multi_reduction <add>, %31, %cst_16 [0] : vector<256x128xf32> to vector<128xf32>
    %33 = vector.shape_cast %32 : vector<128xf32> to vector<1x128xf32>
    %c0_17 = arith.constant 0 : index
    %c0_18 = arith.constant 0 : index
    %c1 = arith.constant 1 : index
    %c0_19 = arith.constant 0 : index
    %34 = vector.load %arg5[%c0_17, %c0_18, %c1, %c0_19] : memref<1x1x2x128xf32, #tpu.memory_space<vmem>>, vector<1x1x1x128xf32>
    %35 = vector.shape_cast %34 : vector<1x1x1x128xf32> to vector<1x128xf32>
    %36 = vector.shape_cast %33 : vector<1x128xf32> to vector<1x1x1x128xf32>
    tpu.vector_store %arg5[%c0_17, %c0_18, %c1, %c0_19], %36 {strides = array<i32>} : memref<1x1x2x128xf32, #tpu.memory_space<vmem>>, vector<1x1x1x128xf32>,
    return
  }
  func.func @transform_0(%arg0: i32, %arg1: i32) -> (i32, i32, i32, i32, i32) {
    %c0_i32 = arith.constant 0 : i32
    %c0_i32_0 = arith.constant 0 : i32
    %c0_i32_1 = arith.constant 0 : i32
    %c0_i32_2 = arith.constant 0 : i32
    return %arg0, %arg1, %c0_i32, %c0_i32_0, %c0_i32_1 : i32, i32, i32, i32, i32
  }
  func.func @transform_1(%arg0: i32, %arg1: i32) -> (i32, i32) {
    %c0_i32 = arith.constant 0 : i32
    %c0_i32_0 = arith.constant 0 : i32
    %c0_i32_1 = arith.constant 0 : i32
    return %c0_i32, %c0_i32_0 : i32, i32
  }
  func.func @transform_2(%arg0: i32, %arg1: i32) -> (i32, i32, i32, i32, i32) {
    %c0_i32 = arith.constant 0 : i32
    %c0_i32_0 = arith.constant 0 : i32
    %c0_i32_1 = arith.constant 0 : i32
    %c0_i32_2 = arith.constant 0 : i32
    return %arg0, %arg1, %c0_i32, %c0_i32_0, %c0_i32_1 : i32, i32, i32, i32, i32
  }
  func.func @transform_3(%arg0: i32, %arg1: i32) -> (i32, i32, i32, i32) {
    %c0_i32 = arith.constant 0 : i32
    %c0_i32_0 = arith.constant 0 : i32
    %c0_i32_1 = arith.constant 0 : i32
    return %arg0, %arg1, %c0_i32, %c0_i32_0 : i32, i32, i32, i32
  }
}

module attributes {stable_mosaic.version = 11 : i64} {
  func.func @conv_stats_kernel(%arg0: i32, %arg1: i32, %arg2: memref<1x1x20x18x128xbf16, #tpu.memory_space<vmem>>, %arg3: memref<1152x128xbf16, #tpu.memory_space<vmem>>, %arg4: memref<1x1x18x16x128xbf16, #tpu.memory_space<vmem>>, %arg5: memref<1x1x2x128xf32, #tpu.memory_space<vmem>>) attributes {dimension_semantics = [#tpu.dimension_semantics<parallel>, #tpu.dimension_semantics<parallel>], iteration_bounds = array<i64: 2, 1>, scalar_prefetch = 0 : i64, scratch_operands = 0 : i64, tpu.core_type = #tpu.core_type<tc>, window_params = [{transform_indices = @transform_0, window_bounds = array<i64: 1, 1, 20, 18, 128>}, {pipeline_mode = #tpu.pipeline_mode<synchronous>, transform_indices = @transform_1, window_bounds = array<i64: 1152, 128>}, {transform_indices = @transform_2, window_bounds = array<i64: 1, 1, 18, 16, 128>}, {transform_indices = @transform_3, window_bounds = array<i64: 1, 1, 2, 128>}]} {
    %c0 = arith.constant 0 : index
    %c0_0 = arith.constant 0 : index
    %c0_1 = arith.constant 0 : index
    %c0_2 = arith.constant 0 : index
    %c0_3 = arith.constant 0 : index
    %0 = vector.load %arg2[%c0, %c0_0, %c0_1, %c0_2, %c0_3] : memref<1x1x20x18x128xbf16, #tpu.memory_space<vmem>>, vector<1x1x20x18x128xbf16>
    %1 = vector.shape_cast %0 : vector<1x1x20x18x128xbf16> to vector<1x20x18x128xbf16>
    %2 = vector.extract_strided_slice %1 {offsets = [0, 0, 0, 0], sizes = [1, 20, 16, 128], strides = [1, 1, 1, 1]} : vector<1x20x18x128xbf16> to vector<1x20x16x128xbf16>
    %3 = vector.extract_strided_slice %1 {offsets = [0, 0, 1, 0], sizes = [1, 20, 16, 128], strides = [1, 1, 1, 1]} : vector<1x20x18x128xbf16> to vector<1x20x16x128xbf16>
    %4 = vector.extract_strided_slice %1 {offsets = [0, 0, 2, 0], sizes = [1, 20, 16, 128], strides = [1, 1, 1, 1]} : vector<1x20x18x128xbf16> to vector<1x20x16x128xbf16>
    %5 = vector.extract_strided_slice %2 {offsets = [0, 0, 0, 0], sizes = [1, 18, 16, 128], strides = [1, 1, 1, 1]} : vector<1x20x16x128xbf16> to vector<1x18x16x128xbf16>
    %6 = vector.extract_strided_slice %3 {offsets = [0, 0, 0, 0], sizes = [1, 18, 16, 128], strides = [1, 1, 1, 1]} : vector<1x20x16x128xbf16> to vector<1x18x16x128xbf16>
    %7 = vector.extract_strided_slice %4 {offsets = [0, 0, 0, 0], sizes = [1, 18, 16, 128], strides = [1, 1, 1, 1]} : vector<1x20x16x128xbf16> to vector<1x18x16x128xbf16>
    %8 = vector.extract_strided_slice %2 {offsets = [0, 1, 0, 0], sizes = [1, 18, 16, 128], strides = [1, 1, 1, 1]} : vector<1x20x16x128xbf16> to vector<1x18x16x128xbf16>
    %9 = vector.extract_strided_slice %3 {offsets = [0, 1, 0, 0], sizes = [1, 18, 16, 128], strides = [1, 1, 1, 1]} : vector<1x20x16x128xbf16> to vector<1x18x16x128xbf16>
    %10 = vector.extract_strided_slice %4 {offsets = [0, 1, 0, 0], sizes = [1, 18, 16, 128], strides = [1, 1, 1, 1]} : vector<1x20x16x128xbf16> to vector<1x18x16x128xbf16>
    %11 = vector.extract_strided_slice %2 {offsets = [0, 2, 0, 0], sizes = [1, 18, 16, 128], strides = [1, 1, 1, 1]} : vector<1x20x16x128xbf16> to vector<1x18x16x128xbf16>
    %12 = vector.extract_strided_slice %3 {offsets = [0, 2, 0, 0], sizes = [1, 18, 16, 128], strides = [1, 1, 1, 1]} : vector<1x20x16x128xbf16> to vector<1x18x16x128xbf16>
    %13 = vector.extract_strided_slice %4 {offsets = [0, 2, 0, 0], sizes = [1, 18, 16, 128], strides = [1, 1, 1, 1]} : vector<1x20x16x128xbf16> to vector<1x18x16x128xbf16>
    %14 = tpu.concatenate %5, %6, %7, %8, %9, %10, %11, %12, %13 in 3 : vector<1x18x16x128xbf16>, vector<1x18x16x128xbf16>, vector<1x18x16x128xbf16>, vector<1x18x16x128xbf16>, vector<1x18x16x128xbf16>, vector<1x18x16x128xbf16>, vector<1x18x16x128xbf16>, vector<1x18x16x128xbf16>, vector<1x18x16x128xbf16> -> vector<1x18x16x1152xbf16>
    %15 = vector.shape_cast %14 : vector<1x18x16x1152xbf16> to vector<288x1152xbf16>
    %c0_4 = arith.constant 0 : index
    %c0_5 = arith.constant 0 : index
    %16 = vector.load %arg3[%c0_4, %c0_5] : memref<1152x128xbf16, #tpu.memory_space<vmem>>, vector<1152x128xbf16>
    %cst = arith.constant dense<0.000000e+00> : vector<288x128xf32>
    %17 = tpu.matmul %15, %16, %cst {dimension_numbers = #tpu.dot_dimension_numbers<[1], [0], [0], [1], [0, 0, 1, 1], [], []>} : vector<288x1152xbf16>, vector<1152x128xbf16>, vector<288x128xf32> -> vector<288x128xf32>
    %18 = vector.shape_cast %17 : vector<288x128xf32> to vector<1x18x16x128xf32>
    %19 = arith.truncf %18 : vector<1x18x16x128xf32> to vector<1x18x16x128xbf16>
    %c0_6 = arith.constant 0 : index
    %c0_7 = arith.constant 0 : index
    %c0_8 = arith.constant 0 : index
    %c0_9 = arith.constant 0 : index
    %c0_10 = arith.constant 0 : index
    %20 = vector.load %arg4[%c0_6, %c0_7, %c0_8, %c0_9, %c0_10] : memref<1x1x18x16x128xbf16, #tpu.memory_space<vmem>>, vector<1x1x18x16x128xbf16>
    %21 = vector.shape_cast %20 : vector<1x1x18x16x128xbf16> to vector<1x18x16x128xbf16>
    %22 = vector.shape_cast %19 : vector<1x18x16x128xbf16> to vector<1x1x18x16x128xbf16>
    tpu.vector_store %arg4[%c0_6, %c0_7, %c0_8, %c0_9, %c0_10], %22 {strides = array<i32>} : memref<1x1x18x16x128xbf16, #tpu.memory_space<vmem>>, vector<1x1x18x16x128xbf16>,
    %23 = vector.extract_strided_slice %19 {offsets = [0, 1, 0, 0], sizes = [1, 16, 16, 128], strides = [1, 1, 1, 1]} : vector<1x18x16x128xbf16> to vector<1x16x16x128xbf16>
    %24 = arith.extf %23 : vector<1x16x16x128xbf16> to vector<1x16x16x128xf32>
    %25 = vector.shape_cast %24 : vector<1x16x16x128xf32> to vector<256x128xf32>
    %cst_11 = arith.constant dense<0.000000e+00> : vector<128xf32>
    %26 = vector.multi_reduction <add>, %25, %cst_11 [0] : vector<256x128xf32> to vector<128xf32>
    %27 = vector.shape_cast %26 : vector<128xf32> to vector<1x128xf32>
    %c0_12 = arith.constant 0 : index
    %c0_13 = arith.constant 0 : index
    %c0_14 = arith.constant 0 : index
    %c0_15 = arith.constant 0 : index
    %28 = vector.load %arg5[%c0_12, %c0_13, %c0_14, %c0_15] : memref<1x1x2x128xf32, #tpu.memory_space<vmem>>, vector<1x1x1x128xf32>
    %29 = vector.shape_cast %28 : vector<1x1x1x128xf32> to vector<1x128xf32>
    %30 = vector.shape_cast %27 : vector<1x128xf32> to vector<1x1x1x128xf32>
    tpu.vector_store %arg5[%c0_12, %c0_13, %c0_14, %c0_15], %30 {strides = array<i32>} : memref<1x1x2x128xf32, #tpu.memory_space<vmem>>, vector<1x1x1x128xf32>,
    %31 = arith.mulf %25, %25 : vector<256x128xf32>
    %cst_16 = arith.constant dense<0.000000e+00> : vector<128xf32>
    %32 = vector.multi_reduction <add>, %31, %cst_16 [0] : vector<256x128xf32> to vector<128xf32>
    %33 = vector.shape_cast %32 : vector<128xf32> to vector<1x128xf32>
    %c0_17 = arith.constant 0 : index
    %c0_18 = arith.constant 0 : index
    %c1 = arith.constant 1 : index
    %c0_19 = arith.constant 0 : index
    %34 = vector.load %arg5[%c0_17, %c0_18, %c1, %c0_19] : memref<1x1x2x128xf32, #tpu.memory_space<vmem>>, vector<1x1x1x128xf32>
    %35 = vector.shape_cast %34 : vector<1x1x1x128xf32> to vector<1x128xf32>
    %36 = vector.shape_cast %33 : vector<1x128xf32> to vector<1x1x1x128xf32>
    tpu.vector_store %arg5[%c0_17, %c0_18, %c1, %c0_19], %36 {strides = array<i32>} : memref<1x1x2x128xf32, #tpu.memory_space<vmem>>, vector<1x1x1x128xf32>,
    return
  }
  func.func @transform_0(%arg0: i32, %arg1: i32) -> (i32, i32, i32, i32, i32) {
    %c0_i32 = arith.constant 0 : i32
    %c0_i32_0 = arith.constant 0 : i32
    %c0_i32_1 = arith.constant 0 : i32
    %c0_i32_2 = arith.constant 0 : i32
    return %arg0, %arg1, %c0_i32, %c0_i32_0, %c0_i32_1 : i32, i32, i32, i32, i32
  }
  func.func @transform_1(%arg0: i32, %arg1: i32) -> (i32, i32) {
    %c0_i32 = arith.constant 0 : i32
    %c0_i32_0 = arith.constant 0 : i32
    %c0_i32_1 = arith.constant 0 : i32
    return %c0_i32, %c0_i32_0 : i32, i32
  }
  func.func @transform_2(%arg0: i32, %arg1: i32) -> (i32, i32, i32, i32, i32) {
    %c0_i32 = arith.constant 0 : i32
    %c0_i32_0 = arith.constant 0 : i32
    %c0_i32_1 = arith.constant 0 : i32
    %c0_i32_2 = arith.constant 0 : i32
    return %arg0, %arg1, %c0_i32, %c0_i32_0, %c0_i32_1 : i32, i32, i32, i32, i32
  }
  func.func @transform_3(%arg0: i32, %arg1: i32) -> (i32, i32, i32, i32) {
    %c0_i32 = arith.constant 0 : i32
    %c0_i32_0 = arith.constant 0 : i32
    %c0_i32_1 = arith.constant 0 : i32
    return %arg0, %arg1, %c0_i32, %c0_i32_0 : i32, i32, i32, i32
  }
}

</mosaic_0001>

<llo_original>
// kernel: tpu_custom_call.1
$region0: #{tpu_custom_call.1}
  #allocation0 [shape = 'u32[]', space=smem, size = 0x4, offset = 0x4, fixed_abs, tag = 'smem constant byte address 0x4 - core index']
  #allocation1 [shape = 'u32[144,128]{1,0:T(1,128)}', space=vmem, size = 0x12000, scoped, tag = 'internal scratch']
  %s0 = inlined_call_operand.vmem [shape: bf16[2,1,20,18,128], index: 0, kind: input, shape index: {}]
  %s1 = inlined_call_operand.vmem [shape: bf16[1152,128], index: 1, kind: input, shape index: {}]
  %s2 = inlined_call_operand.hbm [shape: bf16[2,1,18,16,128], index: 2, kind: output, shape index: {0}]
  %s3 = inlined_call_operand.hbm [shape: f32[2,1,2,128], index: 3, kind: output, shape index: {1}]
  %4 = xla_tuple %s2, %s3
  %s5 = sld [smem:[#allocation0]]
  $region49: #{tpu_custom_call.1} parent=0
    _
  %s7 = ssub.s32 1, %s5
  %s8 = scalar_select 0, %s7, %s5
  $region1: #{tpu_custom_call.1} parent=0
    #allocation2 [shape = 'u8[147456]{0}', space=vmem, size = 0x24000, scoped, tag = 'output window, operand 0']
    #allocation3 [shape = 's32[2]{0}', space=sflag, size = 0x8, scoped, tag = 'scoped memory for tpu_custom_call.1']
    #allocation4 [shape = 'u8[2048]{0}', space=vmem, size = 0x800, scoped, tag = 'output window, operand 1']
    #allocation5 [shape = 's32[2]{0}', space=sflag, size = 0x8, scoped, tag = 'scoped memory for tpu_custom_call.1']
    %9 = vsyncpa [#allocation3], 0
    %s10 = scalar_lea.sflag [#allocation3], 1
    %11 = vsyncpa %s10, 0
    %12 = vsyncpa [#allocation5], 0
    %s13 = scalar_lea.sflag [#allocation5], 1
    %14 = vsyncpa %s13, 0
    loop: start=0, step=1, limit=4
    $region2: #{tpu_custom_call.1} parent=1 // loop_pre_header
      _
    $region3: #{tpu_custom_call.1} parent=1 // loop_header
      %s16 = sphi 0, %s20
      %p17 = scmp.ge.s32.totalorder %s16, 4
      %s23 = sphi 0, %s35
      %s24 = sphi 0, %s31
      %s25 = sphi 0, %s23
      %s26 = sphi 0, %s24
      %s27 = sphi 0, %s25
      %s28 = sphi 0, %s26
      %s40 = sphi 0, %s42
      %s43 = sphi 0, %s40
      %s44 = sphi 0, %s43
      %s60 = sphi 0, %s44
      %s64 = sphi 0, %s64
      %s66 = sphi 0, %s64
      %s67 = sphi 0, %s66
      %s81 = sphi 0, %s67
      %s89 = sphi 0, %s91
      %s92 = sphi 0, %s89
      %s93 = sphi 0, %s92
      %s109 = sphi 0, %s93
      %s117 = sphi 0, %s119
      %s120 = sphi 0, %s117
      %s121 = sphi 0, %s120
      %s137 = sphi 0, %s121
    $region4: #{tpu_custom_call.1} parent=1 // loop_header_branch
      %19 = sbr.rel (%p17) target = $region8
    $region5: #{tpu_custom_call.1} parent=1 // loop_body
      %s21 = ssub.s32 %s16, 1
      %s22 = ssub.s32 %s16, 2
      %s29 = sadd.s32 1, %s24
      %p30 = scmp.ge.s32.totalorder %s29, 1
      %s31 = scalar_select %p30, 0, %s29
      %s32 = sadd.s32 1, %s23
      %s33 = scalar_select %p30, %s32, %s23
      %p34 = scmp.ge.s32.totalorder %s33, 2
      %s35 = scalar_select %p34, 0, %s33
      %s36 = ssub.s32 %s23, %s35
      %s37 = ssub.s32 %s24, %s31
      %s38 = sor.u32 %s36, %s37
      %p39 = scmp.eq.s32.totalorder %s38, 0
      %s41 = sadd.s32 %s40, 1
      %s42 = scalar_select %p39, %s40, %s41
      %p45 = pneg %p39
      %p46 = scmp.eq.s32.totalorder %s16, 1
      %p47 = por %p45, %p46
      %p48 = scmp.ne.s32.totalorder %s40, %s43
      %p49 = scmp.eq.s32.totalorder %s16, 0
      %p50 = por %p48, %p49
      %p51 = scmp.ne.s32.totalorder %s40, %s43
      %p52 = scmp.eq.s32.totalorder %s21, 1
      %p53 = por %p51, %p52
      %p54 = scmp.ne.s32.totalorder %s43, %s44
      %p55 = scmp.eq.s32.totalorder %s21, 0
      %p56 = por %p54, %p55
      %p57 = scmp.ne.s32.totalorder %s43, %s44
      %p58 = scmp.eq.s32.totalorder %s22, 1
      %p59 = por %p57, %p58
      %p61 = scmp.ne.s32.totalorder %s44, %s60
      %p62 = scmp.eq.s32.totalorder %s22, 0
      %p63 = por %p61, %p62
      %s65 = sadd.s32 %s64, 1
      %p68 = scmp.eq.s32.totalorder %s16, 1
      %p69 = scmp.ne.s32.totalorder %s64, %s66
      %p70 = scmp.eq.s32.totalorder %s16, 0
      %p71 = por %p69, %p70
      %p72 = scmp.ne.s32.totalorder %s64, %s66
      %p73 = scmp.eq.s32.totalorder %s21, 1
      %p74 = por %p72, %p73
      %p75 = scmp.ne.s32.totalorder %s66, %s67
      %p76 = scmp.eq.s32.totalorder %s21, 0
      %p77 = por %p75, %p76
      %p78 = scmp.ne.s32.totalorder %s66, %s67
      %p79 = scmp.eq.s32.totalorder %s22, 1
      %p80 = por %p78, %p79
      %p82 = scmp.ne.s32.totalorder %s67, %s81
      %p83 = scmp.eq.s32.totalorder %s22, 0
      %p84 = por %p82, %p83
      %s85 = ssub.s32 %s23, %s35
      %s86 = ssub.s32 %s24, %s31
      %s87 = sor.u32 %s85, %s86
      %p88 = scmp.eq.s32.totalorder %s87, 0
      %s90 = sadd.s32 %s89, 1
      %s91 = scalar_select %p88, %s89, %s90
      %p94 = pneg %p88
      %p95 = scmp.eq.s32.totalorder %s16, 1
      %p96 = por %p94, %p95
      %p97 = scmp.ne.s32.totalorder %s89, %s92
      %p98 = scmp.eq.s32.totalorder %s16, 0
      %p99 = por %p97, %p98
      %p100 = scmp.ne.s32.totalorder %s89, %s92
      %p101 = scmp.eq.s32.totalorder %s21, 1
      %p102 = por %p100, %p101
      %p103 = scmp.ne.s32.totalorder %s92, %s93
      %p104 = scmp.eq.s32.totalorder %s21, 0
      %p105 = por %p103, %p104
      %p106 = scmp.ne.s32.totalorder %s92, %s93
      %p107 = scmp.eq.s32.totalorder %s22, 1
      %p108 = por %p106, %p107
      %p110 = scmp.ne.s32.totalorder %s93, %s109
      %p111 = scmp.eq.s32.totalorder %s22, 0
      %p112 = por %p110, %p111
      %s113 = ssub.s32 %s23, %s35
      %s114 = ssub.s32 %s24, %s31
      %s115 = sor.u32 %s113, %s114
      %p116 = scmp.eq.s32.totalorder %s115, 0
      %s118 = sadd.s32 %s117, 1
      %s119 = scalar_select %p116, %s117, %s118
      %p122 = pneg %p116
      %p123 = scmp.eq.s32.totalorder %s16, 1
      %p124 = por %p122, %p123
      %p125 = scmp.ne.s32.totalorder %s117, %s120
      %p126 = scmp.eq.s32.totalorder %s16, 0
      %p127 = por %p125, %p126
      %p128 = scmp.ne.s32.totalorder %s117, %s120
      %p129 = scmp.eq.s32.totalorder %s21, 1
      %p130 = por %p128, %p129
      %p131 = scmp.ne.s32.totalorder %s120, %s121
      %p132 = scmp.eq.s32.totalorder %s21, 0
      %p133 = por %p131, %p132
      %p134 = scmp.ne.s32.totalorder %s120, %s121
      %p135 = scmp.eq.s32.totalorder %s22, 1
      %p136 = por %p134, %p135
      %p138 = scmp.ne.s32.totalorder %s121, %s137
      %p139 = scmp.eq.s32.totalorder %s22, 0
      %p140 = por %p138, %p139
      %p141 = scmp.le.s32.totalorder 1, %s16
      %p142 = scmp.lt.s32.totalorder %s16, 3
      %p143 = pnand %p141, %p142
      %p144 = pneg %p143
      // Predicated region
      $region9: #{tpu_custom_call.1} parent=5 // pred_check
        _
      $region10: #{tpu_custom_call.1} parent=5 // pred_check_branch
        %146 = sbr.rel (%p143) target = $region12
      $region11: #{tpu_custom_call.1} parent=5 // pred_region
        %s147 = ssub.s32 %s16, 1
        // Predicated region
        $region13: #{tpu_custom_call.1} parent=11 // pred_check
          %p148 = pneg %p77
        $region14: #{tpu_custom_call.1} parent=11 // pred_check_branch
          %150 = sbr.rel (%p148) target = $region16
        $region15: #{tpu_custom_call.1} parent=11 // pred_region
          _
        $region16: #{tpu_custom_call.1} parent=11 // pred_fallthru
          _
      $region12: #{tpu_custom_call.1} parent=5 // pred_fallthru
        _
      %p151 = scmp.lt.s32.totalorder %s16, 2
      // Predicated region
      $region17: #{tpu_custom_call.1} parent=5 // pred_check
        %p152 = pneg %p151
      $region18: #{tpu_custom_call.1} parent=5 // pred_check_branch
        %154 = sbr.rel (%p152) target = $region20
      $region19: #{tpu_custom_call.1} parent=5 // pred_region
        // Predicated region
        $region21: #{tpu_custom_call.1} parent=19 // pred_check
          %p155 = pneg %p50
        $region22: #{tpu_custom_call.1} parent=19 // pred_check_branch
          %157 = sbr.rel (%p155) target = $region24
        $region23: #{tpu_custom_call.1} parent=19 // pred_region
          %p158 = scmp.lt.s32.totalorder %s23, 1
          %s159 = scalar_select %p158, %s23, 1
          %p160 = scmp.lt.s32.totalorder %s24, 0
          %s161 = scalar_select %p160, %s24, 0
          %s162 = smul.addr %s161, 60
          %s163 = smul.addr %s159, 60
          %s164 = sadd.s32 %s162, %s163
          %s165 = smul.addr %s164, 4
          %s166 = scalar_lea.vmem %s0, %s165
        $region24: #{tpu_custom_call.1} parent=19 // pred_fallthru
          _
      $region20: #{tpu_custom_call.1} parent=5 // pred_fallthru
        _
      %p167 = scmp.le.s32.totalorder 1, %s16
      %p168 = scmp.lt.s32.totalorder %s16, 3
      %p169 = pnand %p167, %p168
      %p170 = pneg %p169
      // Predicated region
      $region25: #{tpu_custom_call.1} parent=5 // pred_check
        _
      $region26: #{tpu_custom_call.1} parent=5 // pred_check_branch
        %172 = sbr.rel (%p169) target = $region28
      $region27: #{tpu_custom_call.1} parent=5 // pred_region
        %s173 = ssub.s32 %s16, 1
        %p174 = scmp.lt.s32.totalorder %s25, 1
        %s175 = scalar_select %p174, %s25, 1
        %p176 = scmp.lt.s32.totalorder %s26, 0
        %s177 = scalar_select %p176, %s26, 0
        %s178 = smul.addr %s177, 60
        %s179 = smul.addr %s175, 60
        %s180 = sadd.s32 %s178, %s179
        %s181 = smul.addr %s180, 4
        %s182 = scalar_lea.vmem %s0, %s181
        %p183 = pneg %p56
        %p184 = pneg %p53
        %p185 = pneg %p77
        %p186 = pneg %p74
        %p187 = pneg %p105
        %p188 = pneg %p102
        %s189 = sand.u32 %s92, 1
        %s190 = scalar_lea.sflag [#allocation3], %s189
        %s191 = sand.u32 %s92, 1
        %s192 = smul.addr %s191, 144
        %s193 = scalar_lea.vmem [#allocation2], %s192
        %p194 = pneg %p133
        %p195 = pneg %p130
        %s196 = sand.u32 %s120, 1
        %s197 = scalar_lea.sflag [#allocation5], %s196
        %s198 = sand.u32 %s120, 1
        %s199 = smul.addr %s198, 2
        %s200 = scalar_lea.vmem [#allocation4], %s199
        %p201 = scmp.lt.s32.totalorder %s25, 1
        %s202 = scalar_select %p201, %s25, 1
        %p203 = scmp.lt.s32.totalorder %s26, 0
        %s204 = scalar_select %p203, %s26, 0
        %s205 = smul.addr %s204, 60
        %s206 = smul.addr %s202, 60
        %s207 = sadd.s32 %s205, %s206
        %s208 = smul.addr %s207, 4
        %s209 = scalar_lea.vmem %s0, %s208
        %v211 = vld [vmem:[%s209] sm:$0xf]
        %v212 = vld [vmem:[%s209 + $0x4] sm:$0xf]
        %v213 = vld [vmem:[%s209 + $0x8] sm:$0x1]
        %v214 = vld [vmem:[%s209 + $0xc] sm:$0xf]
        %v215 = vld [vmem:[%s209 + $0x10] sm:$0xf]
        %v216 = vld [vmem:[%s209 + $0x14] sm:$0x1]
        %v217 = vld [vmem:[%s209 + $0x18] sm:$0xf]
        %v218 = vld [vmem:[%s209 + $0x1c] sm:$0xf]
        %v219 = vld [vmem:[%s209 + $0x20] sm:$0x1]
        %v220 = vld [vmem:[%s209 + $0x24] sm:$0xf]
        %v221 = vld [vmem:[%s209 + $0x28] sm:$0xf]
        %v222 = vld [vmem:[%s209 + $0x2c] sm:$0x1]
        %v223 = vld [vmem:[%s209 + $0x30] sm:$0xf]
        %v224 = vld [vmem:[%s209 + $0x34] sm:$0xf]
        %v225 = vld [vmem:[%s209 + $0x38] sm:$0x1]
        %v226 = vld [vmem:[%s209 + $0x3c] sm:$0xf]
        %v227 = vld [vmem:[%s209 + $0x40] sm:$0xf]
        %v228 = vld [vmem:[%s209 + $0x44] sm:$0x1]
        %v229 = vld [vmem:[%s209 + $0x48] sm:$0xf]
        %v230 = vld [vmem:[%s209 + $0x4c] sm:$0xf]
        %v231 = vld [vmem:[%s209 + $0x50] sm:$0x1]
        %v232 = vld [vmem:[%s209 + $0x54] sm:$0xf]
        %v233 = vld [vmem:[%s209 + $0x58] sm:$0xf]
        %v234 = vld [vmem:[%s209 + $0x5c] sm:$0x1]
        %v235 = vld [vmem:[%s209 + $0x60] sm:$0xf]
        %v236 = vld [vmem:[%s209 + $0x64] sm:$0xf]
        %v237 = vld [vmem:[%s209 + $0x68] sm:$0x1]
        %v238 = vld [vmem:[%s209 + $0x6c] sm:$0xf]
        %v239 = vld [vmem:[%s209 + $0x70] sm:$0xf]
        %v240 = vld [vmem:[%s209 + $0x74] sm:$0x1]
        %v241 = vld [vmem:[%s209 + $0x78] sm:$0xf]
        %v242 = vld [vmem:[%s209 + $0x7c] sm:$0xf]
        %v243 = vld [vmem:[%s209 + $0x80] sm:$0x1]
        %v244 = vld [vmem:[%s209 + $0x84] sm:$0xf]
        %v245 = vld [vmem:[%s209 + $0x88] sm:$0xf]
        %v246 = vld [vmem:[%s209 + $0x8c] sm:$0x1]
        %v247 = vld [vmem:[%s209 + $0x90] sm:$0xf]
        %v248 = vld [vmem:[%s209 + $0x94] sm:$0xf]
        %v249 = vld [vmem:[%s209 + $0x98] sm:$0x1]
        %v250 = vld [vmem:[%s209 + $0x9c] sm:$0xf]
        %v251 = vld [vmem:[%s209 + $0xa0] sm:$0xf]
        %v252 = vld [vmem:[%s209 + $0xa4] sm:$0x1]
        %v253 = vld [vmem:[%s209 + $0xa8] sm:$0xf]
        %v254 = vld [vmem:[%s209 + $0xac] sm:$0xf]
        %v255 = vld [vmem:[%s209 + $0xb0] sm:$0x1]
        %v256 = vld [vmem:[%s209 + $0xb4] sm:$0xf]
        %v257 = vld [vmem:[%s209 + $0xb8] sm:$0xf]
        %v258 = vld [vmem:[%s209 + $0xbc] sm:$0x1]
        %v259 = vld [vmem:[%s209 + $0xc0] sm:$0xf]
        %v260 = vld [vmem:[%s209 + $0xc4] sm:$0xf]
        %v261 = vld [vmem:[%s209 + $0xc8] sm:$0x1]
        %v262 = vld [vmem:[%s209 + $0xcc] sm:$0xf]
        %v263 = vld [vmem:[%s209 + $0xd0] sm:$0xf]
        %v264 = vld [vmem:[%s209 + $0xd4] sm:$0x1]
        %v265 = vld [vmem:[%s209 + $0xd8] sm:$0xf]
        %v266 = vld [vmem:[%s209 + $0xdc] sm:$0xf]
        %v267 = vld [vmem:[%s209 + $0xe0] sm:$0x1]
        %v268 = vld [vmem:[%s209 + $0xe4] sm:$0xf]
        %v269 = vld [vmem:[%s209 + $0xe8] sm:$0xf]
        %v270 = vld [vmem:[%s209 + $0xec] sm:$0x1]
        %v307 = vunpack.c.l.b16 %v211
        %v308 = vunpack.c.l.b16 %v212
        %v309 = vunpack.c.l.b16 %v214
        %v310 = vunpack.c.l.b16 %v215
        %v311 = vunpack.c.l.b16 %v217
        %v312 = vunpack.c.l.b16 %v218
        %v313 = vunpack.c.l.b16 %v220
        %v314 = vunpack.c.l.b16 %v221
        %v315 = vunpack.c.l.b16 %v223
        %v316 = vunpack.c.l.b16 %v224
        %v317 = vunpack.c.l.b16 %v226
        %v318 = vunpack.c.l.b16 %v227
        %v319 = vunpack.c.l.b16 %v229
        %v320 = vunpack.c.l.b16 %v230
        %v321 = vunpack.c.l.b16 %v232
        %v322 = vunpack.c.l.b16 %v233
        %v323 = vunpack.c.l.b16 %v235
        %v324 = vunpack.c.l.b16 %v236
        %v325 = vunpack.c.l.b16 %v238
        %v326 = vunpack.c.l.b16 %v239
        %v327 = vunpack.c.l.b16 %v241
        %v328 = vunpack.c.l.b16 %v242
        %v329 = vunpack.c.l.b16 %v244
        %v330 = vunpack.c.l.b16 %v245
        %v331 = vunpack.c.l.b16 %v247
        %v332 = vunpack.c.l.b16 %v248
        %v333 = vunpack.c.l.b16 %v250
        %v334 = vunpack.c.l.b16 %v251
        %v335 = vunpack.c.l.b16 %v253
        %v336 = vunpack.c.l.b16 %v254
        %v337 = vunpack.c.l.b16 %v256
        %v338 = vunpack.c.l.b16 %v257
        %v339 = vunpack.c.l.b16 %v259
        %v340 = vunpack.c.l.b16 %v260
        %v341 = vunpack.c.l.b16 %v262
        %v342 = vunpack.c.l.b16 %v263
        %v343 = vpack.c.b16 %v308, %v307
        %v344 = vpack.c.b16 %v310, %v309
        %v345 = vpack.c.b16 %v312, %v311
        %v346 = vpack.c.b16 %v314, %v313
        %v347 = vpack.c.b16 %v316, %v315
        %v348 = vpack.c.b16 %v318, %v317
        %v349 = vpack.c.b16 %v320, %v319
        %v350 = vpack.c.b16 %v322, %v321
        %v351 = vpack.c.b16 %v324, %v323
        %v352 = vpack.c.b16 %v326, %v325
        %v353 = vpack.c.b16 %v328, %v327
        %v354 = vpack.c.b16 %v330, %v329
        %v355 = vpack.c.b16 %v332, %v331
        %v356 = vpack.c.b16 %v334, %v333
        %v357 = vpack.c.b16 %v336, %v335
        %v358 = vpack.c.b16 %v338, %v337
        %v359 = vpack.c.b16 %v340, %v339
        %v360 = vpack.c.b16 %v342, %v341
        %v397 = vunpack.c.l.b16 %v213
        %v398 = vunpack.c.l.b16 %v216
        %v399 = vunpack.c.l.b16 %v219
        %v400 = vunpack.c.l.b16 %v222
        %v401 = vunpack.c.l.b16 %v225
        %v402 = vunpack.c.l.b16 %v228
        %v403 = vunpack.c.l.b16 %v231
        %v404 = vunpack.c.l.b16 %v234
        %v405 = vunpack.c.l.b16 %v237
        %v406 = vunpack.c.l.b16 %v240
        %v407 = vunpack.c.l.b16 %v243
        %v408 = vunpack.c.l.b16 %v246
        %v409 = vunpack.c.l.b16 %v249
        %v410 = vunpack.c.l.b16 %v252
        %v411 = vunpack.c.l.b16 %v255
        %v412 = vunpack.c.l.b16 %v258
        %v413 = vunpack.c.l.b16 %v261
        %v414 = vunpack.c.l.b16 %v264
        %v415 = vpack.c.b16 %v397, %v397
        %v416 = vpack.c.b16 %v398, %v398
        %v417 = vpack.c.b16 %v399, %v399
        %v418 = vpack.c.b16 %v400, %v400
        %v419 = vpack.c.b16 %v401, %v401
        %v420 = vpack.c.b16 %v402, %v402
        %v421 = vpack.c.b16 %v403, %v403
        %v422 = vpack.c.b16 %v404, %v404
        %v423 = vpack.c.b16 %v405, %v405
        %v424 = vpack.c.b16 %v406, %v406
        %v425 = vpack.c.b16 %v407, %v407
        %v426 = vpack.c.b16 %v408, %v408
        %v427 = vpack.c.b16 %v409, %v409
        %v428 = vpack.c.b16 %v410, %v410
        %v429 = vpack.c.b16 %v411, %v411
        %v430 = vpack.c.b16 %v412, %v412
        %v431 = vpack.c.b16 %v413, %v413
        %v432 = vpack.c.b16 %v414, %v414
        %vm433 = vsmask.f32 7424
        %v435 = vshrl.u32 %v343, 16
        %v437 = vshll.u32 %v343, 16
        %v439 = vrot.slane %v437, 1
        %v440 = vor.u32 %v435, %v439
        %v442 = vshll.u32 %v415, 16
        %v444 = vrot.slane %v442, 1
        %v445 = vsel %vm433, %v440, %v444
        %v447 = vshrl.u32 %v344, 16
        %v449 = vshll.u32 %v344, 16
        %v451 = vrot.slane %v449, 1
        %v452 = vor.u32 %v447, %v451
        %v454 = vshll.u32 %v416, 16
        %v456 = vrot.slane %v454, 1
        %v457 = vsel %vm433, %v452, %v456
        %v459 = vshrl.u32 %v345, 16
        %v461 = vshll.u32 %v345, 16
        %v463 = vrot.slane %v461, 1
        %v464 = vor.u32 %v459, %v463
        %v466 = vshll.u32 %v417, 16
        %v468 = vrot.slane %v466, 1
        %v469 = vsel %vm433, %v464, %v468
        %v471 = vshrl.u32 %v346, 16
        %v473 = vshll.u32 %v346, 16
        %v475 = vrot.slane %v473, 1
        %v476 = vor.u32 %v471, %v475
        %v478 = vshll.u32 %v418, 16
        %v480 = vrot.slane %v478, 1
        %v481 = vsel %vm433, %v476, %v480
        %v483 = vshrl.u32 %v347, 16
        %v485 = vshll.u32 %v347, 16
        %v487 = vrot.slane %v485, 1
        %v488 = vor.u32 %v483, %v487
        %v490 = vshll.u32 %v419, 16
        %v492 = vrot.slane %v490, 1
        %v493 = vsel %vm433, %v488, %v492
        %v495 = vshrl.u32 %v348, 16
        %v497 = vshll.u32 %v348, 16
        %v499 = vrot.slane %v497, 1
        %v500 = vor.u32 %v495, %v499
        %v502 = vshll.u32 %v420, 16
        %v504 = vrot.slane %v502, 1
        %v505 = vsel %vm433, %v500, %v504
        %v507 = vshrl.u32 %v349, 16
        %v509 = vshll.u32 %v349, 16
        %v511 = vrot.slane %v509, 1
        %v512 = vor.u32 %v507, %v511
        %v514 = vshll.u32 %v421, 16
        %v516 = vrot.slane %v514, 1
        %v517 = vsel %vm433, %v512, %v516
        %v519 = vshrl.u32 %v350, 16
        %v521 = vshll.u32 %v350, 16
        %v523 = vrot.slane %v521, 1
        %v524 = vor.u32 %v519, %v523
        %v526 = vshll.u32 %v422, 16
        %v528 = vrot.slane %v526, 1
        %v529 = vsel %vm433, %v524, %v528
        %v531 = vshrl.u32 %v351, 16
        %v533 = vshll.u32 %v351, 16
        %v535 = vrot.slane %v533, 1
        %v536 = vor.u32 %v531, %v535
        %v538 = vshll.u32 %v423, 16
        %v540 = vrot.slane %v538, 1
        %v541 = vsel %vm433, %v536, %v540
        %v543 = vshrl.u32 %v352, 16
        %v545 = vshll.u32 %v352, 16
        %v547 = vrot.slane %v545, 1
        %v548 = vor.u32 %v543, %v547
        %v550 = vshll.u32 %v424, 16
        %v552 = vrot.slane %v550, 1
        %v553 = vsel %vm433, %v548, %v552
        %v555 = vshrl.u32 %v353, 16
        %v557 = vshll.u32 %v353, 16
        %v559 = vrot.slane %v557, 1
        %v560 = vor.u32 %v555, %v559
        %v562 = vshll.u32 %v425, 16
        %v564 = vrot.slane %v562, 1
        %v565 = vsel %vm433, %v560, %v564
        %v567 = vshrl.u32 %v354, 16
        %v569 = vshll.u32 %v354, 16
        %v571 = vrot.slane %v569, 1
        %v572 = vor.u32 %v567, %v571
        %v574 = vshll.u32 %v426, 16
        %v576 = vrot.slane %v574, 1
        %v577 = vsel %vm433, %v572, %v576
        %v579 = vshrl.u32 %v355, 16
        %v581 = vshll.u32 %v355, 16
        %v583 = vrot.slane %v581, 1
        %v584 = vor.u32 %v579, %v583
        %v586 = vshll.u32 %v427, 16
        %v588 = vrot.slane %v586, 1
        %v589 = vsel %vm433, %v584, %v588
        %v591 = vshrl.u32 %v356, 16
        %v593 = vshll.u32 %v356, 16
        %v595 = vrot.slane %v593, 1
        %v596 = vor.u32 %v591, %v595
        %v598 = vshll.u32 %v428, 16
        %v600 = vrot.slane %v598, 1
        %v601 = vsel %vm433, %v596, %v600
        %v603 = vshrl.u32 %v357, 16
        %v605 = vshll.u32 %v357, 16
        %v607 = vrot.slane %v605, 1
        %v608 = vor.u32 %v603, %v607
        %v610 = vshll.u32 %v429, 16
        %v612 = vrot.slane %v610, 1
        %v613 = vsel %vm433, %v608, %v612
        %v615 = vshrl.u32 %v358, 16
        %v617 = vshll.u32 %v358, 16
        %v619 = vrot.slane %v617, 1
        %v620 = vor.u32 %v615, %v619
        %v622 = vshll.u32 %v430, 16
        %v624 = vrot.slane %v622, 1
        %v625 = vsel %vm433, %v620, %v624
        %v627 = vshrl.u32 %v359, 16
        %v629 = vshll.u32 %v359, 16
        %v631 = vrot.slane %v629, 1
        %v632 = vor.u32 %v627, %v631
        %v634 = vshll.u32 %v431, 16
        %v636 = vrot.slane %v634, 1
        %v637 = vsel %vm433, %v632, %v636
        %v639 = vshrl.u32 %v360, 16
        %v641 = vshll.u32 %v360, 16
        %v643 = vrot.slane %v641, 1
        %v644 = vor.u32 %v639, %v643
        %v646 = vshll.u32 %v432, 16
        %v648 = vrot.slane %v646, 1
        %v649 = vsel %vm433, %v644, %v648
        %vm668 = vcmask 1046528
        %v669 = vrot.slane %v343, 1
        %v670 = vrot.slane %v415, 1
        %v671 = vsel %vm668, %v669, %v670
        %v672 = vrot.slane %v344, 1
        %v673 = vrot.slane %v416, 1
        %v674 = vsel %vm668, %v672, %v673
        %v675 = vrot.slane %v345, 1
        %v676 = vrot.slane %v417, 1
        %v677 = vsel %vm668, %v675, %v676
        %v678 = vrot.slane %v346, 1
        %v679 = vrot.slane %v418, 1
        %v680 = vsel %vm668, %v678, %v679
        %v681 = vrot.slane %v347, 1
        %v682 = vrot.slane %v419, 1
        %v683 = vsel %vm668, %v681, %v682
        %v684 = vrot.slane %v348, 1
        %v685 = vrot.slane %v420, 1
        %v686 = vsel %vm668, %v684, %v685
        %v687 = vrot.slane %v349, 1
        %v688 = vrot.slane %v421, 1
        %v689 = vsel %vm668, %v687, %v688
        %v690 = vrot.slane %v350, 1
        %v691 = vrot.slane %v422, 1
        %v692 = vsel %vm668, %v690, %v691
        %v693 = vrot.slane %v351, 1
        %v694 = vrot.slane %v423, 1
        %v695 = vsel %vm668, %v693, %v694
        %v696 = vrot.slane %v352, 1
        %v697 = vrot.slane %v424, 1
        %v698 = vsel %vm668, %v696, %v697
        %v699 = vrot.slane %v353, 1
        %v700 = vrot.slane %v425, 1
        %v701 = vsel %vm668, %v699, %v700
        %v702 = vrot.slane %v354, 1
        %v703 = vrot.slane %v426, 1
        %v704 = vsel %vm668, %v702, %v703
        %v705 = vrot.slane %v355, 1
        %v706 = vrot.slane %v427, 1
        %v707 = vsel %vm668, %v705, %v706
        %v708 = vrot.slane %v356, 1
        %v709 = vrot.slane %v428, 1
        %v710 = vsel %vm668, %v708, %v709
        %v711 = vrot.slane %v357, 1
        %v712 = vrot.slane %v429, 1
        %v713 = vsel %vm668, %v711, %v712
        %v714 = vrot.slane %v358, 1
        %v715 = vrot.slane %v430, 1
        %v716 = vsel %vm668, %v714, %v715
        %v717 = vrot.slane %v359, 1
        %v718 = vrot.slane %v431, 1
        %v719 = vsel %vm668, %v717, %v718
        %v720 = vrot.slane %v360, 1
        %v721 = vrot.slane %v432, 1
        %v722 = vsel %vm668, %v720, %v721
        %v743 = vunpack.c.l.b16 %v265
        %v744 = vunpack.c.l.b16 %v266
        %v745 = vpack.c.b16 %v744, %v743
        %v748 = vunpack.c.l.b16 %v267
        %v749 = vpack.c.b16 %v748, %v748
        %v751 = vshrl.u32 %v745, 16
        %v753 = vshll.u32 %v745, 16
        %v755 = vrot.slane %v753, 1
        %v756 = vor.u32 %v751, %v755
        %v758 = vshll.u32 %v749, 16
        %v760 = vrot.slane %v758, 1
        %v761 = vsel %vm433, %v756, %v760
        %v763 = vrot.slane %v745, 1
        %v764 = vrot.slane %v749, 1
        %v765 = vsel %vm668, %v763, %v764
        %v769 = vunpack.c.l.b16 %v268
        %v770 = vunpack.c.l.b16 %v269
        %v771 = vpack.c.b16 %v770, %v769
        %v774 = vunpack.c.l.b16 %v270
        %v775 = vpack.c.b16 %v774, %v774
        %v777 = vshrl.u32 %v771, 16
        %v779 = vshll.u32 %v771, 16
        %v781 = vrot.slane %v779, 1
        %v782 = vor.u32 %v777, %v781
        %v784 = vshll.u32 %v775, 16
        %v786 = vrot.slane %v784, 1
        %v787 = vsel %vm433, %v782, %v786
        %v789 = vrot.slane %v771, 1
        %v790 = vrot.slane %v775, 1
        %v791 = vsel %vm668, %v789, %v790
        %v793 = vld [vmem:[%s1] sm:$0xf]
        %v794 = vld [vmem:[%s1 + $0x4] sm:$0xf]
        %v795 = vld [vmem:[%s1 + $0x8] sm:$0xf]
        %v796 = vld [vmem:[%s1 + $0xc] sm:$0xf]
        %v797 = vld [vmem:[%s1 + $0x10] sm:$0xf]
        %v798 = vld [vmem:[%s1 + $0x14] sm:$0xf]
        %v799 = vld [vmem:[%s1 + $0x18] sm:$0xf]
        %v800 = vld [vmem:[%s1 + $0x1c] sm:$0xf]
        %v801 = vld [vmem:[%s1 + $0x20] sm:$0xf]
        %v802 = vld [vmem:[%s1 + $0x24] sm:$0xf]
        %v803 = vld [vmem:[%s1 + $0x28] sm:$0xf]
        %v804 = vld [vmem:[%s1 + $0x2c] sm:$0xf]
        %v805 = vld [vmem:[%s1 + $0x30] sm:$0xf]
        %v806 = vld [vmem:[%s1 + $0x34] sm:$0xf]
        %v807 = vld [vmem:[%s1 + $0x38] sm:$0xf]
        %v808 = vld [vmem:[%s1 + $0x3c] sm:$0xf]
        %v809 = vld [vmem:[%s1 + $0x40] sm:$0xf]
        %v810 = vld [vmem:[%s1 + $0x44] sm:$0xf]
        %v811 = vld [vmem:[%s1 + $0x48] sm:$0xf]
        %v812 = vld [vmem:[%s1 + $0x4c] sm:$0xf]
        %v813 = vld [vmem:[%s1 + $0x50] sm:$0xf]
        %v814 = vld [vmem:[%s1 + $0x54] sm:$0xf]
        %v815 = vld [vmem:[%s1 + $0x58] sm:$0xf]
        %v816 = vld [vmem:[%s1 + $0x5c] sm:$0xf]
        %v817 = vld [vmem:[%s1 + $0x60] sm:$0xf]
        %v818 = vld [vmem:[%s1 + $0x64] sm:$0xf]
        %v819 = vld [vmem:[%s1 + $0x68] sm:$0xf]
        %v820 = vld [vmem:[%s1 + $0x6c] sm:$0xf]
        %v821 = vld [vmem:[%s1 + $0x70] sm:$0xf]
        %v822 = vld [vmem:[%s1 + $0x74] sm:$0xf]
        %v823 = vld [vmem:[%s1 + $0x78] sm:$0xf]
        %v824 = vld [vmem:[%s1 + $0x7c] sm:$0xf]
        %v825 = vld [vmem:[%s1 + $0x80] sm:$0xf]
        %v826 = vld [vmem:[%s1 + $0x84] sm:$0xf]
        %v827 = vld [vmem:[%s1 + $0x88] sm:$0xf]
        %v828 = vld [vmem:[%s1 + $0x8c] sm:$0xf]
        %v829 = vld [vmem:[%s1 + $0x90] sm:$0xf]
        %v830 = vld [vmem:[%s1 + $0x94] sm:$0xf]
        %v831 = vld [vmem:[%s1 + $0x98] sm:$0xf]
        %v832 = vld [vmem:[%s1 + $0x9c] sm:$0xf]
        %v833 = vld [vmem:[%s1 + $0xa0] sm:$0xf]
        %v834 = vld [vmem:[%s1 + $0xa4] sm:$0xf]
        %v835 = vld [vmem:[%s1 + $0xa8] sm:$0xf]
        %v836 = vld [vmem:[%s1 + $0xac] sm:$0xf]
        %v837 = vld [vmem:[%s1 + $0xb0] sm:$0xf]
        %v838 = vld [vmem:[%s1 + $0xb4] sm:$0xf]
        %v839 = vld [vmem:[%s1 + $0xb8] sm:$0xf]
        %v840 = vld [vmem:[%s1 + $0xbc] sm:$0xf]
        %v841 = vld [vmem:[%s1 + $0xc0] sm:$0xf]
        %v842 = vld [vmem:[%s1 + $0xc4] sm:$0xf]
        %v843 = vld [vmem:[%s1 + $0xc8] sm:$0xf]
        %v844 = vld [vmem:[%s1 + $0xcc] sm:$0xf]
        %v845 = vld [vmem:[%s1 + $0xd0] sm:$0xf]
        %v846 = vld [vmem:[%s1 + $0xd4] sm:$0xf]
        %v847 = vld [vmem:[%s1 + $0xd8] sm:$0xf]
        %v848 = vld [vmem:[%s1 + $0xdc] sm:$0xf]
        %v849 = vld [vmem:[%s1 + $0xe0] sm:$0xf]
        %v850 = vld [vmem:[%s1 + $0xe4] sm:$0xf]
        %v851 = vld [vmem:[%s1 + $0xe8] sm:$0xf]
        %v852 = vld [vmem:[%s1 + $0xec] sm:$0xf]
        %v853 = vld [vmem:[%s1 + $0xf0] sm:$0xf]
        %v854 = vld [vmem:[%s1 + $0xf4] sm:$0xf]
        %v855 = vld [vmem:[%s1 + $0xf8] sm:$0xf]
        %v856 = vld [vmem:[%s1 + $0xfc] sm:$0xf]
        %v857 = vld [vmem:[%s1 + $0x100] sm:$0xf]
        %v858 = vld [vmem:[%s1 + $0x104] sm:$0xf]
        %v859 = vld [vmem:[%s1 + $0x108] sm:$0xf]
        %v860 = vld [vmem:[%s1 + $0x10c] sm:$0xf]
        %v861 = vld [vmem:[%s1 + $0x110] sm:$0xf]
        %v862 = vld [vmem:[%s1 + $0x114] sm:$0xf]
        %v863 = vld [vmem:[%s1 + $0x118] sm:$0xf]
        %v864 = vld [vmem:[%s1 + $0x11c] sm:$0xf]
        %v865 = vld [vmem:[%s1 + $0x120] sm:$0xf]
        %v866 = vld [vmem:[%s1 + $0x124] sm:$0xf]
        %v867 = vld [vmem:[%s1 + $0x128] sm:$0xf]
        %v868 = vld [vmem:[%s1 + $0x12c] sm:$0xf]
        %v869 = vld [vmem:[%s1 + $0x130] sm:$0xf]
        %v870 = vld [vmem:[%s1 + $0x134] sm:$0xf]
        %v871 = vld [vmem:[%s1 + $0x138] sm:$0xf]
        %v872 = vld [vmem:[%s1 + $0x13c] sm:$0xf]
        %v873 = vld [vmem:[%s1 + $0x140] sm:$0xf]
        %v874 = vld [vmem:[%s1 + $0x144] sm:$0xf]
        %v875 = vld [vmem:[%s1 + $0x148] sm:$0xf]
        %v876 = vld [vmem:[%s1 + $0x14c] sm:$0xf]
        %v877 = vld [vmem:[%s1 + $0x150] sm:$0xf]
        %v878 = vld [vmem:[%s1 + $0x154] sm:$0xf]
        %v879 = vld [vmem:[%s1 + $0x158] sm:$0xf]
        %v880 = vld [vmem:[%s1 + $0x15c] sm:$0xf]
        %v881 = vld [vmem:[%s1 + $0x160] sm:$0xf]
        %v882 = vld [vmem:[%s1 + $0x164] sm:$0xf]
        %v883 = vld [vmem:[%s1 + $0x168] sm:$0xf]
        %v884 = vld [vmem:[%s1 + $0x16c] sm:$0xf]
        %v885 = vld [vmem:[%s1 + $0x170] sm:$0xf]
        %v886 = vld [vmem:[%s1 + $0x174] sm:$0xf]
        %v887 = vld [vmem:[%s1 + $0x178] sm:$0xf]
        %v888 = vld [vmem:[%s1 + $0x17c] sm:$0xf]
        %v889 = vld [vmem:[%s1 + $0x180] sm:$0xf]
        %v890 = vld [vmem:[%s1 + $0x184] sm:$0xf]
        %v891 = vld [vmem:[%s1 + $0x188] sm:$0xf]
        %v892 = vld [vmem:[%s1 + $0x18c] sm:$0xf]
        %v893 = vld [vmem:[%s1 + $0x190] sm:$0xf]
        %v894 = vld [vmem:[%s1 + $0x194] sm:$0xf]
        %v895 = vld [vmem:[%s1 + $0x198] sm:$0xf]
        %v896 = vld [vmem:[%s1 + $0x19c] sm:$0xf]
        %v897 = vld [vmem:[%s1 + $0x1a0] sm:$0xf]
        %v898 = vld [vmem:[%s1 + $0x1a4] sm:$0xf]
        %v899 = vld [vmem:[%s1 + $0x1a8] sm:$0xf]
        %v900 = vld [vmem:[%s1 + $0x1ac] sm:$0xf]
        %v901 = vld [vmem:[%s1 + $0x1b0] sm:$0xf]
        %v902 = vld [vmem:[%s1 + $0x1b4] sm:$0xf]
        %v903 = vld [vmem:[%s1 + $0x1b8] sm:$0xf]
        %v904 = vld [vmem:[%s1 + $0x1bc] sm:$0xf]
        %v905 = vld [vmem:[%s1 + $0x1c0] sm:$0xf]
        %v906 = vld [vmem:[%s1 + $0x1c4] sm:$0xf]
        %v907 = vld [vmem:[%s1 + $0x1c8] sm:$0xf]
        %v908 = vld [vmem:[%s1 + $0x1cc] sm:$0xf]
        %v909 = vld [vmem:[%s1 + $0x1d0] sm:$0xf]
        %v910 = vld [vmem:[%s1 + $0x1d4] sm:$0xf]
        %v911 = vld [vmem:[%s1 + $0x1d8] sm:$0xf]
        %v912 = vld [vmem:[%s1 + $0x1dc] sm:$0xf]
        %v913 = vld [vmem:[%s1 + $0x1e0] sm:$0xf]
        %v914 = vld [vmem:[%s1 + $0x1e4] sm:$0xf]
        %v915 = vld [vmem:[%s1 + $0x1e8] sm:$0xf]
        %v916 = vld [vmem:[%s1 + $0x1ec] sm:$0xf]
        %v917 = vld [vmem:[%s1 + $0x1f0] sm:$0xf]
        %v918 = vld [vmem:[%s1 + $0x1f4] sm:$0xf]
        %v919 = vld [vmem:[%s1 + $0x1f8] sm:$0xf]
        %v920 = vld [vmem:[%s1 + $0x1fc] sm:$0xf]
        %v921 = vld [vmem:[%s1 + $0x200] sm:$0xf]
        %v922 = vld [vmem:[%s1 + $0x204] sm:$0xf]
        %v923 = vld [vmem:[%s1 + $0x208] sm:$0xf]
        %v924 = vld [vmem:[%s1 + $0x20c] sm:$0xf]
        %v925 = vld [vmem:[%s1 + $0x210] sm:$0xf]
        %v926 = vld [vmem:[%s1 + $0x214] sm:$0xf]
        %v927 = vld [vmem:[%s1 + $0x218] sm:$0xf]
        %v928 = vld [vmem:[%s1 + $0x21c] sm:$0xf]
        %v929 = vld [vmem:[%s1 + $0x220] sm:$0xf]
        %v930 = vld [vmem:[%s1 + $0x224] sm:$0xf]
        %v931 = vld [vmem:[%s1 + $0x228] sm:$0xf]
        %v932 = vld [vmem:[%s1 + $0x22c] sm:$0xf]
        %v933 = vld [vmem:[%s1 + $0x230] sm:$0xf]
        %v934 = vld [vmem:[%s1 + $0x234] sm:$0xf]
        %v935 = vld [vmem:[%s1 + $0x238] sm:$0xf]
        %v936 = vld [vmem:[%s1 + $0x23c] sm:$0xf]
        %v1081 = vunpack.c.l.b16 %v793
        %v1082 = vunpack.c.l.b16 %v794
        %v1083 = vunpack.c.l.b16 %v795
        %v1084 = vunpack.c.l.b16 %v796
        %v1085 = vunpack.c.l.b16 %v797
        %v1086 = vunpack.c.l.b16 %v798
        %v1087 = vunpack.c.l.b16 %v799
        %v1088 = vunpack.c.l.b16 %v800
        %v1089 = vunpack.c.l.b16 %v801
        %v1090 = vunpack.c.l.b16 %v802
        %v1091 = vunpack.c.l.b16 %v803
        %v1092 = vunpack.c.l.b16 %v804
        %v1093 = vunpack.c.l.b16 %v805
        %v1094 = vunpack.c.l.b16 %v806
        %v1095 = vunpack.c.l.b16 %v807
        %v1096 = vunpack.c.l.b16 %v808
        %v1097 = vunpack.c.l.b16 %v809
        %v1098 = vunpack.c.l.b16 %v810
        %v1099 = vunpack.c.l.b16 %v811
        %v1100 = vunpack.c.l.b16 %v812
        %v1101 = vunpack.c.l.b16 %v813
        %v1102 = vunpack.c.l.b16 %v814
        %v1103 = vunpack.c.l.b16 %v815
        %v1104 = vunpack.c.l.b16 %v816
        %v1105 = vunpack.c.l.b16 %v817
        %v1106 = vunpack.c.l.b16 %v818
        %v1107 = vunpack.c.l.b16 %v819
        %v1108 = vunpack.c.l.b16 %v820
        %v1109 = vunpack.c.l.b16 %v821
        %v1110 = vunpack.c.l.b16 %v822
        %v1111 = vunpack.c.l.b16 %v823
        %v1112 = vunpack.c.l.b16 %v824
        %v1113 = vunpack.c.l.b16 %v825
        %v1114 = vunpack.c.l.b16 %v826
        %v1115 = vunpack.c.l.b16 %v827
        %v1116 = vunpack.c.l.b16 %v828
        %v1117 = vunpack.c.l.b16 %v829
        %v1118 = vunpack.c.l.b16 %v830
        %v1119 = vunpack.c.l.b16 %v831
        %v1120 = vunpack.c.l.b16 %v832
        %v1121 = vunpack.c.l.b16 %v833
        %v1122 = vunpack.c.l.b16 %v834
        %v1123 = vunpack.c.l.b16 %v835
        %v1124 = vunpack.c.l.b16 %v836
        %v1125 = vunpack.c.l.b16 %v837
        %v1126 = vunpack.c.l.b16 %v838
        %v1127 = vunpack.c.l.b16 %v839
        %v1128 = vunpack.c.l.b16 %v840
        %v1129 = vunpack.c.l.b16 %v841
        %v1130 = vunpack.c.l.b16 %v842
        %v1131 = vunpack.c.l.b16 %v843
        %v1132 = vunpack.c.l.b16 %v844
        %v1133 = vunpack.c.l.b16 %v845
        %v1134 = vunpack.c.l.b16 %v846
        %v1135 = vunpack.c.l.b16 %v847
        %v1136 = vunpack.c.l.b16 %v848
        %v1137 = vunpack.c.l.b16 %v849
        %v1138 = vunpack.c.l.b16 %v850
        %v1139 = vunpack.c.l.b16 %v851
        %v1140 = vunpack.c.l.b16 %v852
        %v1141 = vunpack.c.l.b16 %v853
        %v1142 = vunpack.c.l.b16 %v854
        %v1143 = vunpack.c.l.b16 %v855
        %v1144 = vunpack.c.l.b16 %v856
        %v1145 = vunpack.c.l.b16 %v857
        %v1146 = vunpack.c.l.b16 %v858
        %v1147 = vunpack.c.l.b16 %v859
        %v1148 = vunpack.c.l.b16 %v860
        %v1149 = vunpack.c.l.b16 %v861
        %v1150 = vunpack.c.l.b16 %v862
        %v1151 = vunpack.c.l.b16 %v863
        %v1152 = vunpack.c.l.b16 %v864
        %v1153 = vunpack.c.l.b16 %v865
        %v1154 = vunpack.c.l.b16 %v866
        %v1155 = vunpack.c.l.b16 %v867
        %v1156 = vunpack.c.l.b16 %v868
        %v1157 = vunpack.c.l.b16 %v869
        %v1158 = vunpack.c.l.b16 %v870
        %v1159 = vunpack.c.l.b16 %v871
        %v1160 = vunpack.c.l.b16 %v872
        %v1161 = vunpack.c.l.b16 %v873
        %v1162 = vunpack.c.l.b16 %v874
        %v1163 = vunpack.c.l.b16 %v875
        %v1164 = vunpack.c.l.b16 %v876
        %v1165 = vunpack.c.l.b16 %v877
        %v1166 = vunpack.c.l.b16 %v878
        %v1167 = vunpack.c.l.b16 %v879
        %v1168 = vunpack.c.l.b16 %v880
        %v1169 = vunpack.c.l.b16 %v881
        %v1170 = vunpack.c.l.b16 %v882
        %v1171 = vunpack.c.l.b16 %v883
        %v1172 = vunpack.c.l.b16 %v884
        %v1173 = vunpack.c.l.b16 %v885
        %v1174 = vunpack.c.l.b16 %v886
        %v1175 = vunpack.c.l.b16 %v887
        %v1176 = vunpack.c.l.b16 %v888
        %v1177 = vunpack.c.l.b16 %v889
        %v1178 = vunpack.c.l.b16 %v890
        %v1179 = vunpack.c.l.b16 %v891
        %v1180 = vunpack.c.l.b16 %v892
        %v1181 = vunpack.c.l.b16 %v893
        %v1182 = vunpack.c.l.b16 %v894
        %v1183 = vunpack.c.l.b16 %v895
        %v1184 = vunpack.c.l.b16 %v896
        %v1185 = vunpack.c.l.b16 %v897
        %v1186 = vunpack.c.l.b16 %v898
        %v1187 = vunpack.c.l.b16 %v899
        %v1188 = vunpack.c.l.b16 %v900
        %v1189 = vunpack.c.l.b16 %v901
        %v1190 = vunpack.c.l.b16 %v902
        %v1191 = vunpack.c.l.b16 %v903
        %v1192 = vunpack.c.l.b16 %v904
        %v1193 = vunpack.c.l.b16 %v905
        %v1194 = vunpack.c.l.b16 %v906
        %v1195 = vunpack.c.l.b16 %v907
        %v1196 = vunpack.c.l.b16 %v908
        %v1197 = vunpack.c.l.b16 %v909
        %v1198 = vunpack.c.l.b16 %v910
        %v1199 = vunpack.c.l.b16 %v911
        %v1200 = vunpack.c.l.b16 %v912
        %v1201 = vunpack.c.l.b16 %v913
        %v1202 = vunpack.c.l.b16 %v914
        %v1203 = vunpack.c.l.b16 %v915
        %v1204 = vunpack.c.l.b16 %v916
        %v1205 = vunpack.c.l.b16 %v917
        %v1206 = vunpack.c.l.b16 %v918
        %v1207 = vunpack.c.l.b16 %v919
        %v1208 = vunpack.c.l.b16 %v920
        %v1209 = vunpack.c.l.b16 %v921
        %v1210 = vunpack.c.l.b16 %v922
        %v1211 = vunpack.c.l.b16 %v923
        %v1212 = vunpack.c.l.b16 %v924
        %v1213 = vunpack.c.l.b16 %v925
        %v1214 = vunpack.c.l.b16 %v926
        %v1215 = vunpack.c.l.b16 %v927
        %v1216 = vunpack.c.l.b16 %v928
        %v1217 = vunpack.c.l.b16 %v929
        %v1218 = vunpack.c.l.b16 %v930
        %v1219 = vunpack.c.l.b16 %v931
        %v1220 = vunpack.c.l.b16 %v932
        %v1221 = vunpack.c.l.b16 %v933
        %v1222 = vunpack.c.l.b16 %v934
        %v1223 = vunpack.c.l.b16 %v935
        %v1224 = vunpack.c.l.b16 %v936
        %v1225 = vpack.c.b16 %v1082, %v1081
        %v1226 = vpack.c.b16 %v1084, %v1083
        %v1227 = vpack.c.b16 %v1086, %v1085
        %v1228 = vpack.c.b16 %v1088, %v1087
        %v1229 = vpack.c.b16 %v1090, %v1089
        %v1230 = vpack.c.b16 %v1092, %v1091
        %v1231 = vpack.c.b16 %v1094, %v1093
        %v1232 = vpack.c.b16 %v1096, %v1095
        %v1233 = vpack.c.b16 %v1098, %v1097
        %v1234 = vpack.c.b16 %v1100, %v1099
        %v1235 = vpack.c.b16 %v1102, %v1101
        %v1236 = vpack.c.b16 %v1104, %v1103
        %v1237 = vpack.c.b16 %v1106, %v1105
        %v1238 = vpack.c.b16 %v1108, %v1107
        %v1239 = vpack.c.b16 %v1110, %v1109
        %v1240 = vpack.c.b16 %v1112, %v1111
        %v1241 = vpack.c.b16 %v1114, %v1113
        %v1242 = vpack.c.b16 %v1116, %v1115
        %v1243 = vpack.c.b16 %v1118, %v1117
        %v1244 = vpack.c.b16 %v1120, %v1119
        %v1245 = vpack.c.b16 %v1122, %v1121
        %v1246 = vpack.c.b16 %v1124, %v1123
        %v1247 = vpack.c.b16 %v1126, %v1125
        %v1248 = vpack.c.b16 %v1128, %v1127
        %v1249 = vpack.c.b16 %v1130, %v1129
        %v1250 = vpack.c.b16 %v1132, %v1131
        %v1251 = vpack.c.b16 %v1134, %v1133
        %v1252 = vpack.c.b16 %v1136, %v1135
        %v1253 = vpack.c.b16 %v1138, %v1137
        %v1254 = vpack.c.b16 %v1140, %v1139
        %v1255 = vpack.c.b16 %v1142, %v1141
        %v1256 = vpack.c.b16 %v1144, %v1143
        %v1257 = vpack.c.b16 %v1146, %v1145
        %v1258 = vpack.c.b16 %v1148, %v1147
        %v1259 = vpack.c.b16 %v1150, %v1149
        %v1260 = vpack.c.b16 %v1152, %v1151
        %v1261 = vpack.c.b16 %v1154, %v1153
        %v1262 = vpack.c.b16 %v1156, %v1155
        %v1263 = vpack.c.b16 %v1158, %v1157
        %v1264 = vpack.c.b16 %v1160, %v1159
        %v1265 = vpack.c.b16 %v1162, %v1161
        %v1266 = vpack.c.b16 %v1164, %v1163
        %v1267 = vpack.c.b16 %v1166, %v1165
        %v1268 = vpack.c.b16 %v1168, %v1167
        %v1269 = vpack.c.b16 %v1170, %v1169
        %v1270 = vpack.c.b16 %v1172, %v1171
        %v1271 = vpack.c.b16 %v1174, %v1173
        %v1272 = vpack.c.b16 %v1176, %v1175
        %v1273 = vpack.c.b16 %v1178, %v1177
        %v1274 = vpack.c.b16 %v1180, %v1179
        %v1275 = vpack.c.b16 %v1182, %v1181
        %v1276 = vpack.c.b16 %v1184, %v1183
        %v1277 = vpack.c.b16 %v1186, %v1185
        %v1278 = vpack.c.b16 %v1188, %v1187
        %v1279 = vpack.c.b16 %v1190, %v1189
        %v1280 = vpack.c.b16 %v1192, %v1191
        %v1281 = vpack.c.b16 %v1194, %v1193
        %v1282 = vpack.c.b16 %v1196, %v1195
        %v1283 = vpack.c.b16 %v1198, %v1197
        %v1284 = vpack.c.b16 %v1200, %v1199
        %v1285 = vpack.c.b16 %v1202, %v1201
        %v1286 = vpack.c.b16 %v1204, %v1203
        %v1287 = vpack.c.b16 %v1206, %v1205
        %v1288 = vpack.c.b16 %v1208, %v1207
        %v1289 = vpack.c.b16 %v1210, %v1209
        %v1290 = vpack.c.b16 %v1212, %v1211
        %v1291 = vpack.c.b16 %v1214, %v1213
        %v1292 = vpack.c.b16 %v1216, %v1215
        %v1293 = vpack.c.b16 %v1218, %v1217
        %v1294 = vpack.c.b16 %v1220, %v1219
        %v1295 = vpack.c.b16 %v1222, %v1221
        %v1296 = vpack.c.b16 %v1224, %v1223
        %1369 = vmatprep.subr.bf16.mxu0 0
        %1370 = vmatpush1.bf16.msra.mxu0 %v1225
        %1371 = vmatprep.subr.bf16.mxu0 0
        %1372 = vmatpush1.bf16.msra.mxu0 %v1226
        %1373 = vmatprep.subr.bf16.mxu0 0
        %1374 = vmatpush1.bf16.msra.mxu0 %v1227
        %1375 = vmatprep.subr.bf16.mxu0 0
        %1376 = vmatpush1.bf16.msra.mxu0 %v1228
        %1377 = vmatprep.subr.bf16.mxu0 0
        %1378 = vmatpush1.bf16.msra.mxu0 %v1229
        %1379 = vmatprep.subr.bf16.mxu0 0
        %1380 = vmatpush1.bf16.msra.mxu0 %v1230
        %1381 = vmatprep.subr.bf16.mxu0 0
        %1382 = vmatpush1.bf16.msra.mxu0 %v1231
        %1383 = vmatprep.subr.bf16.mxu0 0
        %1384 = vmatpush1.bf16.msra.mxu0 %v1232
        %1385 = vmatprep.subr.bf16.mxu0 0
        %1386 = vmatpush1.bf16.msra.mxu0 %v1233
        %1387 = vmatprep.subr.bf16.mxu0 0
        %1388 = vmatpush1.bf16.msra.mxu0 %v1234
        %1389 = vmatprep.subr.bf16.mxu0 0
        %1390 = vmatpush1.bf16.msra.mxu0 %v1235
        %1391 = vmatprep.subr.bf16.mxu0 0
        %1392 = vmatpush1.bf16.msra.mxu0 %v1236
        %1393 = vmatprep.subr.bf16.mxu0 0
        %1394 = vmatpush1.bf16.msra.mxu0 %v1237
        %1395 = vmatprep.subr.bf16.mxu0 0
        %1396 = vmatpush1.bf16.msra.mxu0 %v1238
        %1397 = vmatprep.subr.bf16.mxu0 0
        %1398 = vmatpush1.bf16.msra.mxu0 %v1239
        %1399 = vmatprep.subr.bf16.mxu0 0
        %1400 = vmatpush1.bf16.msra.mxu0 %v1240
        %1401 = vmatprep.mubr.bf16.mxu0 %v445
        %1402 = vmatmul.mubr.bf16.gmra.mrb[0].mxu0 %v343
        %v1403 = vpop.f32.mrb[0].mxu0
        %v1404 = vadd.f32 0.0, %v1403
        %v1405 = vpop.f32.mrb[0].mxu0
        %v1406 = vpop.f32.mrb[0].mxu0
        %v1407 = vadd.f32 0.0, %v1406
        %v1408 = vpop.f32.mrb[0].mxu0
        %1409 = vmatprep.mubr.bf16.mxu0 %v457
        %1410 = vmatmul.mubr.bf16.gmra.mrb[0].mxu0 %v344
        %v1411 = vpop.f32.mrb[0].mxu0
        %v1412 = vadd.f32 0.0, %v1411
        %v1413 = vpop.f32.mrb[0].mxu0
        %v1414 = vpop.f32.mrb[0].mxu0
        %v1415 = vadd.f32 0.0, %v1414
        %v1416 = vpop.f32.mrb[0].mxu0
        %1417 = vmatprep.mubr.bf16.mxu0 %v469
        %1418 = vmatmul.mubr.bf16.gmra.mrb[0].mxu0 %v345
        %v1419 = vpop.f32.mrb[0].mxu0
        %v1420 = vadd.f32 0.0, %v1419
        %v1421 = vpop.f32.mrb[0].mxu0
        %v1422 = vpop.f32.mrb[0].mxu0
        %v1423 = vadd.f32 0.0, %v1422
        %v1424 = vpop.f32.mrb[0].mxu0
        %1425 = vmatprep.mubr.bf16.mxu0 %v481
        %1426 = vmatmul.mubr.bf16.gmra.mrb[0].mxu0 %v346
        %v1427 = vpop.f32.mrb[0].mxu0
        %v1428 = vadd.f32 0.0, %v1427
        %v1429 = vpop.f32.mrb[0].mxu0
        %v1430 = vpop.f32.mrb[0].mxu0
        %v1431 = vadd.f32 0.0, %v1430
        %v1432 = vpop.f32.mrb[0].mxu0
        %1433 = vmatprep.mubr.bf16.mxu0 %v493
        %1434 = vmatmul.mubr.bf16.gmra.mrb[0].mxu0 %v347
        %v1435 = vpop.f32.mrb[0].mxu0
        %v1436 = vadd.f32 0.0, %v1435
        %v1437 = vpop.f32.mrb[0].mxu0
        %v1438 = vpop.f32.mrb[0].mxu0
        %v1439 = vadd.f32 0.0, %v1438
        %v1440 = vpop.f32.mrb[0].mxu0
        %1441 = vmatprep.mubr.bf16.mxu0 %v505
        %1442 = vmatmul.mubr.bf16.gmra.mrb[0].mxu0 %v348
        %v1443 = vpop.f32.mrb[0].mxu0
        %v1444 = vadd.f32 0.0, %v1443
        %v1445 = vpop.f32.mrb[0].mxu0
        %v1446 = vpop.f32.mrb[0].mxu0
        %v1447 = vadd.f32 0.0, %v1446
        %v1448 = vpop.f32.mrb[0].mxu0
        %1449 = vmatprep.mubr.bf16.mxu0 %v517
        %1450 = vmatmul.mubr.bf16.gmra.mrb[0].mxu0 %v349
        %v1451 = vpop.f32.mrb[0].mxu0
        %v1452 = vadd.f32 0.0, %v1451
        %v1453 = vpop.f32.mrb[0].mxu0
        %v1454 = vpop.f32.mrb[0].mxu0
        %v1455 = vadd.f32 0.0, %v1454
        %v1456 = vpop.f32.mrb[0].mxu0
        %1457 = vmatprep.mubr.bf16.mxu0 %v529
        %1458 = vmatmul.mubr.bf16.gmra.mrb[0].mxu0 %v350
        %v1459 = vpop.f32.mrb[0].mxu0
        %v1460 = vadd.f32 0.0, %v1459
        %v1461 = vpop.f32.mrb[0].mxu0
        %v1462 = vpop.f32.mrb[0].mxu0
        %v1463 = vadd.f32 0.0, %v1462
        %v1464 = vpop.f32.mrb[0].mxu0
        %1465 = vmatprep.mubr.bf16.mxu0 %v541
        %1466 = vmatmul.mubr.bf16.gmra.mrb[0].mxu0 %v351
        %v1467 = vpop.f32.mrb[0].mxu0
        %v1468 = vadd.f32 0.0, %v1467
        %v1469 = vpop.f32.mrb[0].mxu0
        %v1470 = vpop.f32.mrb[0].mxu0
        %v1471 = vadd.f32 0.0, %v1470
        %v1472 = vpop.f32.mrb[0].mxu0
        %1473 = vmatprep.mubr.bf16.mxu0 %v553
        %1474 = vmatmul.mubr.bf16.gmra.mrb[0].mxu0 %v352
        %v1475 = vpop.f32.mrb[0].mxu0
        %v1476 = vadd.f32 0.0, %v1475
        %v1477 = vpop.f32.mrb[0].mxu0
        %v1478 = vpop.f32.mrb[0].mxu0
        %v1479 = vadd.f32 0.0, %v1478
        %v1480 = vpop.f32.mrb[0].mxu0
        %1481 = vmatprep.mubr.bf16.mxu0 %v565
        %1482 = vmatmul.mubr.bf16.gmra.mrb[0].mxu0 %v353
        %v1483 = vpop.f32.mrb[0].mxu0
        %v1484 = vadd.f32 0.0, %v1483
        %v1485 = vpop.f32.mrb[0].mxu0
        %v1486 = vpop.f32.mrb[0].mxu0
        %v1487 = vadd.f32 0.0, %v1486
        %v1488 = vpop.f32.mrb[0].mxu0
        %1489 = vmatprep.mubr.bf16.mxu0 %v577
        %1490 = vmatmul.mubr.bf16.gmra.mrb[0].mxu0 %v354
        %v1491 = vpop.f32.mrb[0].mxu0
        %v1492 = vadd.f32 0.0, %v1491
        %v1493 = vpop.f32.mrb[0].mxu0
        %v1494 = vpop.f32.mrb[0].mxu0
        %v1495 = vadd.f32 0.0, %v1494
        %v1496 = vpop.f32.mrb[0].mxu0
        %1497 = vmatprep.mubr.bf16.mxu0 %v589
        %1498 = vmatmul.mubr.bf16.gmra.mrb[0].mxu0 %v355
        %v1499 = vpop.f32.mrb[0].mxu0
        %v1500 = vadd.f32 0.0, %v1499
        %v1501 = vpop.f32.mrb[0].mxu0
        %v1502 = vpop.f32.mrb[0].mxu0
        %v1503 = vadd.f32 0.0, %v1502
        %v1504 = vpop.f32.mrb[0].mxu0
        %1505 = vmatprep.mubr.bf16.mxu0 %v601
        %1506 = vmatmul.mubr.bf16.gmra.mrb[0].mxu0 %v356
        %v1507 = vpop.f32.mrb[0].mxu0
        %v1508 = vadd.f32 0.0, %v1507
        %v1509 = vpop.f32.mrb[0].mxu0
        %v1510 = vpop.f32.mrb[0].mxu0
        %v1511 = vadd.f32 0.0, %v1510
        %v1512 = vpop.f32.mrb[0].mxu0
        %1513 = vmatprep.mubr.bf16.mxu0 %v613
        %1514 = vmatmul.mubr.bf16.gmra.mrb[0].mxu0 %v357
        %v1515 = vpop.f32.mrb[0].mxu0
        %v1516 = vadd.f32 0.0, %v1515
        %v1517 = vpop.f32.mrb[0].mxu0
        %v1518 = vpop.f32.mrb[0].mxu0
        %v1519 = vadd.f32 0.0, %v1518
        %v1520 = vpop.f32.mrb[0].mxu0
        %1521 = vmatprep.mubr.bf16.mxu0 %v625
        %1522 = vmatmul.mubr.bf16.gmra.mrb[0].mxu0 %v358
        %v1523 = vpop.f32.mrb[0].mxu0
        %v1524 = vadd.f32 0.0, %v1523
        %v1525 = vpop.f32.mrb[0].mxu0
        %v1526 = vpop.f32.mrb[0].mxu0
        %v1527 = vadd.f32 0.0, %v1526
        %v1528 = vpop.f32.mrb[0].mxu0
        %1529 = vmatprep.mubr.bf16.mxu0 %v637
        %1530 = vmatmul.mubr.bf16.gmra.mrb[0].mxu0 %v359
        %v1531 = vpop.f32.mrb[0].mxu0
        %v1532 = vadd.f32 0.0, %v1531
        %v1533 = vpop.f32.mrb[0].mxu0
        %v1534 = vpop.f32.mrb[0].mxu0
        %v1535 = vadd.f32 0.0, %v1534
        %v1536 = vpop.f32.mrb[0].mxu0
        %1537 = vmatprep.mubr.bf16.mxu0 %v649
        %1538 = vmatmul.mubr.bf16.gmra.mrb[0].mxu0 %v360
        %v1539 = vpop.f32.mrb[0].mxu0
        %v1540 = vadd.f32 0.0, %v1539
        %v1541 = vpop.f32.mrb[0].mxu0
        %v1542 = vpop.f32.mrb[0].mxu0
        %v1543 = vadd.f32 0.0, %v1542
        %v1544 = vpop.f32.mrb[0].mxu0
        %1545 = vdwg.mxu0
        %1546 = vmatprep.subr.bf16.mxu0 0
        %1547 = vmatpush1.bf16.msra.mxu0 %v1241
        %1548 = vmatprep.subr.bf16.mxu0 0
        %1549 = vmatpush1.bf16.msra.mxu0 %v1242
        %1550 = vmatprep.subr.bf16.mxu0 0
        %1551 = vmatpush1.bf16.msra.mxu0 %v1243
        %1552 = vmatprep.subr.bf16.mxu0 0
        %1553 = vmatpush1.bf16.msra.mxu0 %v1244
        %1554 = vmatprep.subr.bf16.mxu0 0
        %1555 = vmatpush1.bf16.msra.mxu0 %v1245
        %1556 = vmatprep.subr.bf16.mxu0 0
        %1557 = vmatpush1.bf16.msra.mxu0 %v1246
        %1558 = vmatprep.subr.bf16.mxu0 0
        %1559 = vmatpush1.bf16.msra.mxu0 %v1247
        %1560 = vmatprep.subr.bf16.mxu0 0
        %1561 = vmatpush1.bf16.msra.mxu0 %v1248
        %1562 = vmatprep.subr.bf16.mxu0 0
        %1563 = vmatpush1.bf16.msra.mxu0 %v1249
        %1564 = vmatprep.subr.bf16.mxu0 0
        %1565 = vmatpush1.bf16.msra.mxu0 %v1250
        %1566 = vmatprep.subr.bf16.mxu0 0
        %1567 = vmatpush1.bf16.msra.mxu0 %v1251
        %1568 = vmatprep.subr.bf16.mxu0 0
        %1569 = vmatpush1.bf16.msra.mxu0 %v1252
        %1570 = vmatprep.subr.bf16.mxu0 0
        %1571 = vmatpush1.bf16.msra.mxu0 %v1253
        %1572 = vmatprep.subr.bf16.mxu0 0
        %1573 = vmatpush1.bf16.msra.mxu0 %v1254
        %1574 = vmatprep.subr.bf16.mxu0 0
        %1575 = vmatpush1.bf16.msra.mxu0 %v1255
        %1576 = vmatprep.subr.bf16.mxu0 0
        %1577 = vmatpush1.bf16.msra.mxu0 %v1256
        %1578 = vmatprep.mubr.bf16.mxu0 %v344
        %1579 = vmatmul.mubr.bf16.gmra.mrb[0].mxu0 %v671
        %v1580 = vpop.f32.mrb[0].mxu0
        %v1581 = vadd.f32 %v1404, %v1580
        %v1582 = vpop.f32.mrb[0].mxu0
        %v1583 = vpop.f32.mrb[0].mxu0
        %v1584 = vadd.f32 %v1407, %v1583
        %v1585 = vpop.f32.mrb[0].mxu0
        %1586 = vmatprep.mubr.bf16.mxu0 %v345
        %1587 = vmatmul.mubr.bf16.gmra.mrb[0].mxu0 %v674
        %v1588 = vpop.f32.mrb[0].mxu0
        %v1589 = vadd.f32 %v1412, %v1588
        %v1590 = vpop.f32.mrb[0].mxu0
        %v1591 = vpop.f32.mrb[0].mxu0
        %v1592 = vadd.f32 %v1415, %v1591
        %v1593 = vpop.f32.mrb[0].mxu0
        %1594 = vmatprep.mubr.bf16.mxu0 %v346
        %1595 = vmatmul.mubr.bf16.gmra.mrb[0].mxu0 %v677
        %v1596 = vpop.f32.mrb[0].mxu0
        %v1597 = vadd.f32 %v1420, %v1596
        %v1598 = vpop.f32.mrb[0].mxu0
        %v1599 = vpop.f32.mrb[0].mxu0
        %v1600 = vadd.f32 %v1423, %v1599
        %v1601 = vpop.f32.mrb[0].mxu0
        %1602 = vmatprep.mubr.bf16.mxu0 %v347
        %1603 = vmatmul.mubr.bf16.gmra.mrb[0].mxu0 %v680
        %v1604 = vpop.f32.mrb[0].mxu0
        %v1605 = vadd.f32 %v1428, %v1604
        %v1606 = vpop.f32.mrb[0].mxu0
        %v1607 = vpop.f32.mrb[0].mxu0
        %v1608 = vadd.f32 %v1431, %v1607
        %v1609 = vpop.f32.mrb[0].mxu0
        %1610 = vmatprep.mubr.bf16.mxu0 %v348
        %1611 = vmatmul.mubr.bf16.gmra.mrb[0].mxu0 %v683
        %v1612 = vpop.f32.mrb[0].mxu0
        %v1613 = vadd.f32 %v1436, %v1612
        %v1614 = vpop.f32.mrb[0].mxu0
        %v1615 = vpop.f32.mrb[0].mxu0
        %v1616 = vadd.f32 %v1439, %v1615
        %v1617 = vpop.f32.mrb[0].mxu0
        %1618 = vmatprep.mubr.bf16.mxu0 %v349
        %1619 = vmatmul.mubr.bf16.gmra.mrb[0].mxu0 %v686
        %v1620 = vpop.f32.mrb[0].mxu0
        %v1621 = vadd.f32 %v1444, %v1620
        %v1622 = vpop.f32.mrb[0].mxu0
        %v1623 = vpop.f32.mrb[0].mxu0
        %v1624 = vadd.f32 %v1447, %v1623
        %v1625 = vpop.f32.mrb[0].mxu0
        %1626 = vmatprep.mubr.bf16.mxu0 %v350
        %1627 = vmatmul.mubr.bf16.gmra.mrb[0].mxu0 %v689
        %v1628 = vpop.f32.mrb[0].mxu0
        %v1629 = vadd.f32 %v1452, %v1628
        %v1630 = vpop.f32.mrb[0].mxu0
        %v1631 = vpop.f32.mrb[0].mxu0
        %v1632 = vadd.f32 %v1455, %v1631
        %v1633 = vpop.f32.mrb[0].mxu0
        %1634 = vmatprep.mubr.bf16.mxu0 %v351
        %1635 = vmatmul.mubr.bf16.gmra.mrb[0].mxu0 %v692
        %v1636 = vpop.f32.mrb[0].mxu0
        %v1637 = vadd.f32 %v1460, %v1636
        %v1638 = vpop.f32.mrb[0].mxu0
        %v1639 = vpop.f32.mrb[0].mxu0
        %v1640 = vadd.f32 %v1463, %v1639
        %v1641 = vpop.f32.mrb[0].mxu0
        %1642 = vmatprep.mubr.bf16.mxu0 %v352
        %1643 = vmatmul.mubr.bf16.gmra.mrb[0].mxu0 %v695
        %v1644 = vpop.f32.mrb[0].mxu0
        %v1645 = vadd.f32 %v1468, %v1644
        %v1646 = vpop.f32.mrb[0].mxu0
        %v1647 = vpop.f32.mrb[0].mxu0
        %v1648 = vadd.f32 %v1471, %v1647
        %v1649 = vpop.f32.mrb[0].mxu0
        %1650 = vmatprep.mubr.bf16.mxu0 %v353
        %1651 = vmatmul.mubr.bf16.gmra.mrb[0].mxu0 %v698
        %v1652 = vpop.f32.mrb[0].mxu0
        %v1653 = vadd.f32 %v1476, %v1652
        %v1654 = vpop.f32.mrb[0].mxu0
        %v1655 = vpop.f32.mrb[0].mxu0
        %v1656 = vadd.f32 %v1479, %v1655
        %v1657 = vpop.f32.mrb[0].mxu0
        %1658 = vmatprep.mubr.bf16.mxu0 %v354
        %1659 = vmatmul.mubr.bf16.gmra.mrb[0].mxu0 %v701
        %v1660 = vpop.f32.mrb[0].mxu0
        %v1661 = vadd.f32 %v1484, %v1660
        %v1662 = vpop.f32.mrb[0].mxu0
        %v1663 = vpop.f32.mrb[0].mxu0
        %v1664 = vadd.f32 %v1487, %v1663
        %v1665 = vpop.f32.mrb[0].mxu0
        %1666 = vmatprep.mubr.bf16.mxu0 %v355
        %1667 = vmatmul.mubr.bf16.gmra.mrb[0].mxu0 %v704
        %v1668 = vpop.f32.mrb[0].mxu0
        %v1669 = vadd.f32 %v1492, %v1668
        %v1670 = vpop.f32.mrb[0].mxu0
        %v1671 = vpop.f32.mrb[0].mxu0
        %v1672 = vadd.f32 %v1495, %v1671
        %v1673 = vpop.f32.mrb[0].mxu0
        %1674 = vmatprep.mubr.bf16.mxu0 %v356
        %1675 = vmatmul.mubr.bf16.gmra.mrb[0].mxu0 %v707
        %v1676 = vpop.f32.mrb[0].mxu0
        %v1677 = vadd.f32 %v1500, %v1676
        %v1678 = vpop.f32.mrb[0].mxu0
        %v1679 = vpop.f32.mrb[0].mxu0
        %v1680 = vadd.f32 %v1503, %v1679
        %v1681 = vpop.f32.mrb[0].mxu0
        %1682 = vmatprep.mubr.bf16.mxu0 %v357
        %1683 = vmatmul.mubr.bf16.gmra.mrb[0].mxu0 %v710
        %v1684 = vpop.f32.mrb[0].mxu0
        %v1685 = vadd.f32 %v1508, %v1684
        %v1686 = vpop.f32.mrb[0].mxu0
        %v1687 = vpop.f32.mrb[0].mxu0
        %v1688 = vadd.f32 %v1511, %v1687
        %v1689 = vpop.f32.mrb[0].mxu0
        %1690 = vmatprep.mubr.bf16.mxu0 %v358
        %1691 = vmatmul.mubr.bf16.gmra.mrb[0].mxu0 %v713
        %v1692 = vpop.f32.mrb[0].mxu0
        %v1693 = vadd.f32 %v1516, %v1692
        %v1694 = vpop.f32.mrb[0].mxu0
        %v1695 = vpop.f32.mrb[0].mxu0
        %v1696 = vadd.f32 %v1519, %v1695
        %v1697 = vpop.f32.mrb[0].mxu0
        %1698 = vmatprep.mubr.bf16.mxu0 %v359
        %1699 = vmatmul.mubr.bf16.gmra.mrb[0].mxu0 %v716
        %v1700 = vpop.f32.mrb[0].mxu0
        %v1701 = vadd.f32 %v1524, %v1700
        %v1702 = vpop.f32.mrb[0].mxu0
        %v1703 = vpop.f32.mrb[0].mxu0
        %v1704 = vadd.f32 %v1527, %v1703
        %v1705 = vpop.f32.mrb[0].mxu0
        %1706 = vmatprep.mubr.bf16.mxu0 %v360
        %1707 = vmatmul.mubr.bf16.gmra.mrb[0].mxu0 %v719
        %v1708 = vpop.f32.mrb[0].mxu0
        %v1709 = vadd.f32 %v1532, %v1708
        %v1710 = vpop.f32.mrb[0].mxu0
        %v1711 = vpop.f32.mrb[0].mxu0
        %v1712 = vadd.f32 %v1535, %v1711
        %v1713 = vpop.f32.mrb[0].mxu0
        %1714 = vmatprep.mubr.bf16.mxu0 %v745
        %1715 = vmatmul.mubr.bf16.gmra.mrb[0].mxu0 %v722
        %v1716 = vpop.f32.mrb[0].mxu0
        %v1717 = vadd.f32 %v1540, %v1716
        %v1718 = vpop.f32.mrb[0].mxu0
        %v1719 = vpop.f32.mrb[0].mxu0
        %v1720 = vadd.f32 %v1543, %v1719
        %v1721 = vpop.f32.mrb[0].mxu0
        %1722 = vdwg.mxu0
        %1723 = vmatprep.subr.bf16.mxu0 0
        %1724 = vmatpush1.bf16.msra.mxu0 %v1257
        %1725 = vmatprep.subr.bf16.mxu0 0
        %1726 = vmatpush1.bf16.msra.mxu0 %v1258
        %1727 = vmatprep.subr.bf16.mxu0 0
        %1728 = vmatpush1.bf16.msra.mxu0 %v1259
        %1729 = vmatprep.subr.bf16.mxu0 0
        %1730 = vmatpush1.bf16.msra.mxu0 %v1260
        %1731 = vmatprep.subr.bf16.mxu0 0
        %1732 = vmatpush1.bf16.msra.mxu0 %v1261
        %1733 = vmatprep.subr.bf16.mxu0 0
        %1734 = vmatpush1.bf16.msra.mxu0 %v1262
        %1735 = vmatprep.subr.bf16.mxu0 0
        %1736 = vmatpush1.bf16.msra.mxu0 %v1263
        %1737 = vmatprep.subr.bf16.mxu0 0
        %1738 = vmatpush1.bf16.msra.mxu0 %v1264
        %1739 = vmatprep.subr.bf16.mxu0 0
        %1740 = vmatpush1.bf16.msra.mxu0 %v1265
        %1741 = vmatprep.subr.bf16.mxu0 0
        %1742 = vmatpush1.bf16.msra.mxu0 %v1266
        %1743 = vmatprep.subr.bf16.mxu0 0
        %1744 = vmatpush1.bf16.msra.mxu0 %v1267
        %1745 = vmatprep.subr.bf16.mxu0 0
        %1746 = vmatpush1.bf16.msra.mxu0 %v1268
        %1747 = vmatprep.subr.bf16.mxu0 0
        %1748 = vmatpush1.bf16.msra.mxu0 %v1269
        %1749 = vmatprep.subr.bf16.mxu0 0
        %1750 = vmatpush1.bf16.msra.mxu0 %v1270
        %1751 = vmatprep.subr.bf16.mxu0 0
        %1752 = vmatpush1.bf16.msra.mxu0 %v1271
        %1753 = vmatprep.subr.bf16.mxu0 0
        %1754 = vmatpush1.bf16.msra.mxu0 %v1272
        %1755 = vmatprep.mubr.bf16.mxu0 %v674
        %1756 = vmatmul.mubr.bf16.gmra.mrb[0].mxu0 %v457
        %v1757 = vpop.f32.mrb[0].mxu0
        %v1758 = vadd.f32 %v1581, %v1757
        %v1759 = vpop.f32.mrb[0].mxu0
        %v1760 = vpop.f32.mrb[0].mxu0
        %v1761 = vadd.f32 %v1584, %v1760
        %v1762 = vpop.f32.mrb[0].mxu0
        %1763 = vmatprep.mubr.bf16.mxu0 %v677
        %1764 = vmatmul.mubr.bf16.gmra.mrb[0].mxu0 %v469
        %v1765 = vpop.f32.mrb[0].mxu0
        %v1766 = vadd.f32 %v1589, %v1765
        %v1767 = vpop.f32.mrb[0].mxu0
        %v1768 = vpop.f32.mrb[0].mxu0
        %v1769 = vadd.f32 %v1592, %v1768
        %v1770 = vpop.f32.mrb[0].mxu0
        %1771 = vmatprep.mubr.bf16.mxu0 %v680
        %1772 = vmatmul.mubr.bf16.gmra.mrb[0].mxu0 %v481
        %v1773 = vpop.f32.mrb[0].mxu0
        %v1774 = vadd.f32 %v1597, %v1773
        %v1775 = vpop.f32.mrb[0].mxu0
        %v1776 = vpop.f32.mrb[0].mxu0
        %v1777 = vadd.f32 %v1600, %v1776
        %v1778 = vpop.f32.mrb[0].mxu0
        %1779 = vmatprep.mubr.bf16.mxu0 %v683
        %1780 = vmatmul.mubr.bf16.gmra.mrb[0].mxu0 %v493
        %v1781 = vpop.f32.mrb[0].mxu0
        %v1782 = vadd.f32 %v1605, %v1781
        %v1783 = vpop.f32.mrb[0].mxu0
        %v1784 = vpop.f32.mrb[0].mxu0
        %v1785 = vadd.f32 %v1608, %v1784
        %v1786 = vpop.f32.mrb[0].mxu0
        %1787 = vmatprep.mubr.bf16.mxu0 %v686
        %1788 = vmatmul.mubr.bf16.gmra.mrb[0].mxu0 %v505
        %v1789 = vpop.f32.mrb[0].mxu0
        %v1790 = vadd.f32 %v1613, %v1789
        %v1791 = vpop.f32.mrb[0].mxu0
        %v1792 = vpop.f32.mrb[0].mxu0
        %v1793 = vadd.f32 %v1616, %v1792
        %v1794 = vpop.f32.mrb[0].mxu0
        %1795 = vmatprep.mubr.bf16.mxu0 %v689
        %1796 = vmatmul.mubr.bf16.gmra.mrb[0].mxu0 %v517
        %v1797 = vpop.f32.mrb[0].mxu0
        %v1798 = vadd.f32 %v1621, %v1797
        %v1799 = vpop.f32.mrb[0].mxu0
        %v1800 = vpop.f32.mrb[0].mxu0
        %v1801 = vadd.f32 %v1624, %v1800
        %v1802 = vpop.f32.mrb[0].mxu0
        %1803 = vmatprep.mubr.bf16.mxu0 %v692
        %1804 = vmatmul.mubr.bf16.gmra.mrb[0].mxu0 %v529
        %v1805 = vpop.f32.mrb[0].mxu0
        %v1806 = vadd.f32 %v1629, %v1805
        %v1807 = vpop.f32.mrb[0].mxu0
        %v1808 = vpop.f32.mrb[0].mxu0
        %v1809 = vadd.f32 %v1632, %v1808
        %v1810 = vpop.f32.mrb[0].mxu0
        %1811 = vmatprep.mubr.bf16.mxu0 %v695
        %1812 = vmatmul.mubr.bf16.gmra.mrb[0].mxu0 %v541
        %v1813 = vpop.f32.mrb[0].mxu0
        %v1814 = vadd.f32 %v1637, %v1813
        %v1815 = vpop.f32.mrb[0].mxu0
        %v1816 = vpop.f32.mrb[0].mxu0
        %v1817 = vadd.f32 %v1640, %v1816
        %v1818 = vpop.f32.mrb[0].mxu0
        %1819 = vmatprep.mubr.bf16.mxu0 %v698
        %1820 = vmatmul.mubr.bf16.gmra.mrb[0].mxu0 %v553
        %v1821 = vpop.f32.mrb[0].mxu0
        %v1822 = vadd.f32 %v1645, %v1821
        %v1823 = vpop.f32.mrb[0].mxu0
        %v1824 = vpop.f32.mrb[0].mxu0
        %v1825 = vadd.f32 %v1648, %v1824
        %v1826 = vpop.f32.mrb[0].mxu0
        %1827 = vmatprep.mubr.bf16.mxu0 %v701
        %1828 = vmatmul.mubr.bf16.gmra.mrb[0].mxu0 %v565
        %v1829 = vpop.f32.mrb[0].mxu0
        %v1830 = vadd.f32 %v1653, %v1829
        %v1831 = vpop.f32.mrb[0].mxu0
        %v1832 = vpop.f32.mrb[0].mxu0
        %v1833 = vadd.f32 %v1656, %v1832
        %v1834 = vpop.f32.mrb[0].mxu0
        %1835 = vmatprep.mubr.bf16.mxu0 %v704
        %1836 = vmatmul.mubr.bf16.gmra.mrb[0].mxu0 %v577
        %v1837 = vpop.f32.mrb[0].mxu0
        %v1838 = vadd.f32 %v1661, %v1837
        %v1839 = vpop.f32.mrb[0].mxu0
        %v1840 = vpop.f32.mrb[0].mxu0
        %v1841 = vadd.f32 %v1664, %v1840
        %v1842 = vpop.f32.mrb[0].mxu0
        %1843 = vmatprep.mubr.bf16.mxu0 %v707
        %1844 = vmatmul.mubr.bf16.gmra.mrb[0].mxu0 %v589
        %v1845 = vpop.f32.mrb[0].mxu0
        %v1846 = vadd.f32 %v1669, %v1845
        %v1847 = vpop.f32.mrb[0].mxu0
        %v1848 = vpop.f32.mrb[0].mxu0
        %v1849 = vadd.f32 %v1672, %v1848
        %v1850 = vpop.f32.mrb[0].mxu0
        %1851 = vmatprep.mubr.bf16.mxu0 %v710
        %1852 = vmatmul.mubr.bf16.gmra.mrb[0].mxu0 %v601
        %v1853 = vpop.f32.mrb[0].mxu0
        %v1854 = vadd.f32 %v1677, %v1853
        %v1855 = vpop.f32.mrb[0].mxu0
        %v1856 = vpop.f32.mrb[0].mxu0
        %v1857 = vadd.f32 %v1680, %v1856
        %v1858 = vpop.f32.mrb[0].mxu0
        %1859 = vmatprep.mubr.bf16.mxu0 %v713
        %1860 = vmatmul.mubr.bf16.gmra.mrb[0].mxu0 %v613
        %v1861 = vpop.f32.mrb[0].mxu0
        %v1862 = vadd.f32 %v1685, %v1861
        %v1863 = vpop.f32.mrb[0].mxu0
        %v1864 = vpop.f32.mrb[0].mxu0
        %v1865 = vadd.f32 %v1688, %v1864
        %v1866 = vpop.f32.mrb[0].mxu0
        %1867 = vmatprep.mubr.bf16.mxu0 %v716
        %1868 = vmatmul.mubr.bf16.gmra.mrb[0].mxu0 %v625
        %v1869 = vpop.f32.mrb[0].mxu0
        %v1870 = vadd.f32 %v1693, %v1869
        %v1871 = vpop.f32.mrb[0].mxu0
        %v1872 = vpop.f32.mrb[0].mxu0
        %v1873 = vadd.f32 %v1696, %v1872
        %v1874 = vpop.f32.mrb[0].mxu0
        %1875 = vmatprep.mubr.bf16.mxu0 %v719
        %1876 = vmatmul.mubr.bf16.gmra.mrb[0].mxu0 %v637
        %v1877 = vpop.f32.mrb[0].mxu0
        %v1878 = vadd.f32 %v1701, %v1877
        %v1879 = vpop.f32.mrb[0].mxu0
        %v1880 = vpop.f32.mrb[0].mxu0
        %v1881 = vadd.f32 %v1704, %v1880
        %v1882 = vpop.f32.mrb[0].mxu0
        %1883 = vmatprep.mubr.bf16.mxu0 %v722
        %1884 = vmatmul.mubr.bf16.gmra.mrb[0].mxu0 %v649
        %v1885 = vpop.f32.mrb[0].mxu0
        %v1886 = vadd.f32 %v1709, %v1885
        %v1887 = vpop.f32.mrb[0].mxu0
        %v1888 = vpop.f32.mrb[0].mxu0
        %v1889 = vadd.f32 %v1712, %v1888
        %v1890 = vpop.f32.mrb[0].mxu0
        %1891 = vmatprep.mubr.bf16.mxu0 %v765
        %1892 = vmatmul.mubr.bf16.gmra.mrb[0].mxu0 %v761
        %v1893 = vpop.f32.mrb[0].mxu0
        %v1894 = vadd.f32 %v1717, %v1893
        %v1895 = vpop.f32.mrb[0].mxu0
        %v1896 = vpop.f32.mrb[0].mxu0
        %v1897 = vadd.f32 %v1720, %v1896
        %v1898 = vpop.f32.mrb[0].mxu0
        %1899 = vdwg.mxu0
        %1900 = vmatprep.subr.bf16.mxu0 0
        %1901 = vmatpush1.bf16.msra.mxu0 %v1273
        %1902 = vmatprep.subr.bf16.mxu0 0
        %1903 = vmatpush1.bf16.msra.mxu0 %v1274
        %1904 = vmatprep.subr.bf16.mxu0 0
        %1905 = vmatpush1.bf16.msra.mxu0 %v1275
        %1906 = vmatprep.subr.bf16.mxu0 0
        %1907 = vmatpush1.bf16.msra.mxu0 %v1276
        %1908 = vmatprep.subr.bf16.mxu0 0
        %1909 = vmatpush1.bf16.msra.mxu0 %v1277
        %1910 = vmatprep.subr.bf16.mxu0 0
        %1911 = vmatpush1.bf16.msra.mxu0 %v1278
        %1912 = vmatprep.subr.bf16.mxu0 0
        %1913 = vmatpush1.bf16.msra.mxu0 %v1279
        %1914 = vmatprep.subr.bf16.mxu0 0
        %1915 = vmatpush1.bf16.msra.mxu0 %v1280
        %1916 = vmatprep.subr.bf16.mxu0 0
        %1917 = vmatpush1.bf16.msra.mxu0 %v1281
        %1918 = vmatprep.subr.bf16.mxu0 0
        %1919 = vmatpush1.bf16.msra.mxu0 %v1282
        %1920 = vmatprep.subr.bf16.mxu0 0
        %1921 = vmatpush1.bf16.msra.mxu0 %v1283
        %1922 = vmatprep.subr.bf16.mxu0 0
        %1923 = vmatpush1.bf16.msra.mxu0 %v1284
        %1924 = vmatprep.subr.bf16.mxu0 0
        %1925 = vmatpush1.bf16.msra.mxu0 %v1285
        %1926 = vmatprep.subr.bf16.mxu0 0
        %1927 = vmatpush1.bf16.msra.mxu0 %v1286
        %1928 = vmatprep.subr.bf16.mxu0 0
        %1929 = vmatpush1.bf16.msra.mxu0 %v1287
        %1930 = vmatprep.subr.bf16.mxu0 0
        %1931 = vmatpush1.bf16.msra.mxu0 %v1288
        %1932 = vmatprep.mubr.bf16.mxu0 %v469
        %1933 = vmatmul.mubr.bf16.gmra.mrb[0].mxu0 %v345
        %v1934 = vpop.f32.mrb[0].mxu0
        %v1935 = vadd.f32 %v1758, %v1934
        %v1936 = vpop.f32.mrb[0].mxu0
        %v1937 = vpop.f32.mrb[0].mxu0
        %v1938 = vadd.f32 %v1761, %v1937
        %v1939 = vpop.f32.mrb[0].mxu0
        %1940 = vmatprep.mubr.bf16.mxu0 %v481
        %1941 = vmatmul.mubr.bf16.gmra.mrb[0].mxu0 %v346
        %v1942 = vpop.f32.mrb[0].mxu0
        %v1943 = vadd.f32 %v1766, %v1942
        %v1944 = vpop.f32.mrb[0].mxu0
        %v1945 = vpop.f32.mrb[0].mxu0
        %v1946 = vadd.f32 %v1769, %v1945
        %v1947 = vpop.f32.mrb[0].mxu0
        %1948 = vmatprep.mubr.bf16.mxu0 %v493
        %1949 = vmatmul.mubr.bf16.gmra.mrb[0].mxu0 %v347
        %v1950 = vpop.f32.mrb[0].mxu0
        %v1951 = vadd.f32 %v1774, %v1950
        %v1952 = vpop.f32.mrb[0].mxu0
        %v1953 = vpop.f32.mrb[0].mxu0
        %v1954 = vadd.f32 %v1777, %v1953
        %v1955 = vpop.f32.mrb[0].mxu0
        %1956 = vmatprep.mubr.bf16.mxu0 %v505
        %1957 = vmatmul.mubr.bf16.gmra.mrb[0].mxu0 %v348
        %v1958 = vpop.f32.mrb[0].mxu0
        %v1959 = vadd.f32 %v1782, %v1958
        %v1960 = vpop.f32.mrb[0].mxu0
        %v1961 = vpop.f32.mrb[0].mxu0
        %v1962 = vadd.f32 %v1785, %v1961
        %v1963 = vpop.f32.mrb[0].mxu0
        %1964 = vmatprep.mubr.bf16.mxu0 %v517
        %1965 = vmatmul.mubr.bf16.gmra.mrb[0].mxu0 %v349
        %v1966 = vpop.f32.mrb[0].mxu0
        %v1967 = vadd.f32 %v1790, %v1966
        %v1968 = vpop.f32.mrb[0].mxu0
        %v1969 = vpop.f32.mrb[0].mxu0
        %v1970 = vadd.f32 %v1793, %v1969
        %v1971 = vpop.f32.mrb[0].mxu0
        %1972 = vmatprep.mubr.bf16.mxu0 %v529
        %1973 = vmatmul.mubr.bf16.gmra.mrb[0].mxu0 %v350
        %v1974 = vpop.f32.mrb[0].mxu0
        %v1975 = vadd.f32 %v1798, %v1974
        %v1976 = vpop.f32.mrb[0].mxu0
        %v1977 = vpop.f32.mrb[0].mxu0
        %v1978 = vadd.f32 %v1801, %v1977
        %v1979 = vpop.f32.mrb[0].mxu0
        %1980 = vmatprep.mubr.bf16.mxu0 %v541
        %1981 = vmatmul.mubr.bf16.gmra.mrb[0].mxu0 %v351
        %v1982 = vpop.f32.mrb[0].mxu0
        %v1983 = vadd.f32 %v1806, %v1982
        %v1984 = vpop.f32.mrb[0].mxu0
        %v1985 = vpop.f32.mrb[0].mxu0
        %v1986 = vadd.f32 %v1809, %v1985
        %v1987 = vpop.f32.mrb[0].mxu0
        %1988 = vmatprep.mubr.bf16.mxu0 %v553
        %1989 = vmatmul.mubr.bf16.gmra.mrb[0].mxu0 %v352
        %v1990 = vpop.f32.mrb[0].mxu0
        %v1991 = vadd.f32 %v1814, %v1990
        %v1992 = vpop.f32.mrb[0].mxu0
        %v1993 = vpop.f32.mrb[0].mxu0
        %v1994 = vadd.f32 %v1817, %v1993
        %v1995 = vpop.f32.mrb[0].mxu0
        %1996 = vmatprep.mubr.bf16.mxu0 %v565
        %1997 = vmatmul.mubr.bf16.gmra.mrb[0].mxu0 %v353
        %v1998 = vpop.f32.mrb[0].mxu0
        %v1999 = vadd.f32 %v1822, %v1998
        %v2000 = vpop.f32.mrb[0].mxu0
        %v2001 = vpop.f32.mrb[0].mxu0
        %v2002 = vadd.f32 %v1825, %v2001
        %v2003 = vpop.f32.mrb[0].mxu0
        %2004 = vmatprep.mubr.bf16.mxu0 %v577
        %2005 = vmatmul.mubr.bf16.gmra.mrb[0].mxu0 %v354
        %v2006 = vpop.f32.mrb[0].mxu0
        %v2007 = vadd.f32 %v1830, %v2006
        %v2008 = vpop.f32.mrb[0].mxu0
        %v2009 = vpop.f32.mrb[0].mxu0
        %v2010 = vadd.f32 %v1833, %v2009
        %v2011 = vpop.f32.mrb[0].mxu0
        %2012 = vmatprep.mubr.bf16.mxu0 %v589
        %2013 = vmatmul.mubr.bf16.gmra.mrb[0].mxu0 %v355
        %v2014 = vpop.f32.mrb[0].mxu0
        %v2015 = vadd.f32 %v1838, %v2014
        %v2016 = vpop.f32.mrb[0].mxu0
        %v2017 = vpop.f32.mrb[0].mxu0
        %v2018 = vadd.f32 %v1841, %v2017
        %v2019 = vpop.f32.mrb[0].mxu0
        %2020 = vmatprep.mubr.bf16.mxu0 %v601
        %2021 = vmatmul.mubr.bf16.gmra.mrb[0].mxu0 %v356
        %v2022 = vpop.f32.mrb[0].mxu0
        %v2023 = vadd.f32 %v1846, %v2022
        %v2024 = vpop.f32.mrb[0].mxu0
        %v2025 = vpop.f32.mrb[0].mxu0
        %v2026 = vadd.f32 %v1849, %v2025
        %v2027 = vpop.f32.mrb[0].mxu0
        %2028 = vmatprep.mubr.bf16.mxu0 %v613
        %2029 = vmatmul.mubr.bf16.gmra.mrb[0].mxu0 %v357
        %v2030 = vpop.f32.mrb[0].mxu0
        %v2031 = vadd.f32 %v1854, %v2030
        %v2032 = vpop.f32.mrb[0].mxu0
        %v2033 = vpop.f32.mrb[0].mxu0
        %v2034 = vadd.f32 %v1857, %v2033
        %v2035 = vpop.f32.mrb[0].mxu0
        %2036 = vmatprep.mubr.bf16.mxu0 %v625
        %2037 = vmatmul.mubr.bf16.gmra.mrb[0].mxu0 %v358
        %v2038 = vpop.f32.mrb[0].mxu0
        %v2039 = vadd.f32 %v1862, %v2038
        %v2040 = vpop.f32.mrb[0].mxu0
        %v2041 = vpop.f32.mrb[0].mxu0
        %v2042 = vadd.f32 %v1865, %v2041
        %v2043 = vpop.f32.mrb[0].mxu0
        %2044 = vmatprep.mubr.bf16.mxu0 %v637
        %2045 = vmatmul.mubr.bf16.gmra.mrb[0].mxu0 %v359
        %v2046 = vpop.f32.mrb[0].mxu0
        %v2047 = vadd.f32 %v1870, %v2046
        %v2048 = vpop.f32.mrb[0].mxu0
        %v2049 = vpop.f32.mrb[0].mxu0
        %v2050 = vadd.f32 %v1873, %v2049
        %v2051 = vpop.f32.mrb[0].mxu0
        %2052 = vmatprep.mubr.bf16.mxu0 %v649
        %2053 = vmatmul.mubr.bf16.gmra.mrb[0].mxu0 %v360
        %v2054 = vpop.f32.mrb[0].mxu0
        %v2055 = vadd.f32 %v1878, %v2054
        %v2056 = vpop.f32.mrb[0].mxu0
        %v2057 = vpop.f32.mrb[0].mxu0
        %v2058 = vadd.f32 %v1881, %v2057
        %v2059 = vpop.f32.mrb[0].mxu0
        %2060 = vmatprep.mubr.bf16.mxu0 %v761
        %2061 = vmatmul.mubr.bf16.gmra.mrb[0].mxu0 %v745
        %v2062 = vpop.f32.mrb[0].mxu0
        %v2063 = vadd.f32 %v1886, %v2062
        %v2064 = vpop.f32.mrb[0].mxu0
        %v2065 = vpop.f32.mrb[0].mxu0
        %v2066 = vadd.f32 %v1889, %v2065
        %v2067 = vpop.f32.mrb[0].mxu0
        %2068 = vmatprep.mubr.bf16.mxu0 %v787
        %2069 = vmatmul.mubr.bf16.gmra.mrb[0].mxu0 %v771
        %v2070 = vpop.f32.mrb[0].mxu0
        %v2071 = vadd.f32 %v1894, %v2070
        %v2072 = vpop.f32.mrb[0].mxu0
        %v2073 = vpop.f32.mrb[0].mxu0
        %v2074 = vadd.f32 %v1897, %v2073
        %v2075 = vpop.f32.mrb[0].mxu0
        %2076 = vdwg.mxu0
        %2077 = vmatprep.subr.bf16.mxu0 0
        %2078 = vmatpush1.bf16.msra.mxu0 %v1289
        %2079 = vmatprep.subr.bf16.mxu0 0
        %2080 = vmatpush1.bf16.msra.mxu0 %v1290
        %2081 = vmatprep.subr.bf16.mxu0 0
        %2082 = vmatpush1.bf16.msra.mxu0 %v1291
        %2083 = vmatprep.subr.bf16.mxu0 0
        %2084 = vmatpush1.bf16.msra.mxu0 %v1292
        %2085 = vmatprep.subr.bf16.mxu0 0
        %2086 = vmatpush1.bf16.msra.mxu0 %v1293
        %2087 = vmatprep.subr.bf16.mxu0 0
        %2088 = vmatpush1.bf16.msra.mxu0 %v1294
        %2089 = vmatprep.subr.bf16.mxu0 0
        %2090 = vmatpush1.bf16.msra.mxu0 %v1295
        %2091 = vmatprep.subr.bf16.mxu0 0
        %2092 = vmatpush1.bf16.msra.mxu0 %v1296
        %2093 = vmatprep.subr.bf16.mxu0 0
        %2094 = vmatpush1.bf16.msra.mxu0 0
        %2095 = vmatprep.subr.bf16.mxu0 0
        %2096 = vmatpush1.bf16.msra.mxu0 0
        %2097 = vmatprep.subr.bf16.mxu0 0
        %2098 = vmatpush1.bf16.msra.mxu0 0
        %2099 = vmatprep.subr.bf16.mxu0 0
        %2100 = vmatpush1.bf16.msra.mxu0 0
        %2101 = vmatprep.subr.bf16.mxu0 0
        %2102 = vmatpush1.bf16.msra.mxu0 0
        %2103 = vmatprep.subr.bf16.mxu0 0
        %2104 = vmatpush1.bf16.msra.mxu0 0
        %2105 = vmatprep.subr.bf16.mxu0 0
        %2106 = vmatpush1.bf16.msra.mxu0 0
        %2107 = vmatprep.subr.bf16.mxu0 0
        %2108 = vmatpush1.bf16.msra.mxu0 0
        %2109 = vmatprep.mubr.bf16.mxu0 0
        %2110 = vmatmul.mubr.bf16.gmra.mrb[0].mxu0 %v677
        %v2111 = vpop.f32.mrb[0].mxu0
        %v2112 = vadd.f32 %v1935, %v2111
        %v2113 = vpop.f32.mrb[0].mxu0
        %v2114 = vpop.f32.mrb[0].mxu0
        %v2115 = vadd.f32 %v1938, %v2114
        %v2116 = vpop.f32.mrb[0].mxu0
        %2117 = vmatprep.mubr.bf16.mxu0 0
        %2118 = vmatmul.mubr.bf16.gmra.mrb[0].mxu0 %v680
        %v2119 = vpop.f32.mrb[0].mxu0
        %v2120 = vadd.f32 %v1943, %v2119
        %v2121 = vpop.f32.mrb[0].mxu0
        %v2122 = vpop.f32.mrb[0].mxu0
        %v2123 = vadd.f32 %v1946, %v2122
        %v2124 = vpop.f32.mrb[0].mxu0
        %2125 = vmatprep.mubr.bf16.mxu0 0
        %2126 = vmatmul.mubr.bf16.gmra.mrb[0].mxu0 %v683
        %v2127 = vpop.f32.mrb[0].mxu0
        %v2128 = vadd.f32 %v1951, %v2127
        %v2129 = vpop.f32.mrb[0].mxu0
        %v2130 = vpop.f32.mrb[0].mxu0
        %v2131 = vadd.f32 %v1954, %v2130
        %v2132 = vpop.f32.mrb[0].mxu0
        %2133 = vmatprep.mubr.bf16.mxu0 0
        %2134 = vmatmul.mubr.bf16.gmra.mrb[0].mxu0 %v686
        %v2135 = vpop.f32.mrb[0].mxu0
        %v2136 = vadd.f32 %v1959, %v2135
        %v2137 = vpop.f32.mrb[0].mxu0
        %v2138 = vpop.f32.mrb[0].mxu0
        %v2139 = vadd.f32 %v1962, %v2138
        %v2140 = vpop.f32.mrb[0].mxu0
        %2141 = vmatprep.mubr.bf16.mxu0 0
        %2142 = vmatmul.mubr.bf16.gmra.mrb[0].mxu0 %v689
        %v2143 = vpop.f32.mrb[0].mxu0
        %v2144 = vadd.f32 %v1967, %v2143
        %v2145 = vpop.f32.mrb[0].mxu0
        %v2146 = vpop.f32.mrb[0].mxu0
        %v2147 = vadd.f32 %v1970, %v2146
        %v2148 = vpop.f32.mrb[0].mxu0
        %2149 = vmatprep.mubr.bf16.mxu0 0
        %2150 = vmatmul.mubr.bf16.gmra.mrb[0].mxu0 %v692
        %v2151 = vpop.f32.mrb[0].mxu0
        %v2152 = vadd.f32 %v1975, %v2151
        %v2153 = vpop.f32.mrb[0].mxu0
        %v2154 = vpop.f32.mrb[0].mxu0
        %v2155 = vadd.f32 %v1978, %v2154
        %v2156 = vpop.f32.mrb[0].mxu0
        %2157 = vmatprep.mubr.bf16.mxu0 0
        %2158 = vmatmul.mubr.bf16.gmra.mrb[0].mxu0 %v695
        %v2159 = vpop.f32.mrb[0].mxu0
        %v2160 = vadd.f32 %v1983, %v2159
        %v2161 = vpop.f32.mrb[0].mxu0
        %v2162 = vpop.f32.mrb[0].mxu0
        %v2163 = vadd.f32 %v1986, %v2162
        %v2164 = vpop.f32.mrb[0].mxu0
        %2165 = vmatprep.mubr.bf16.mxu0 0
        %2166 = vmatmul.mubr.bf16.gmra.mrb[0].mxu0 %v698
        %v2167 = vpop.f32.mrb[0].mxu0
        %v2168 = vadd.f32 %v1991, %v2167
        %v2169 = vpop.f32.mrb[0].mxu0
        %v2170 = vpop.f32.mrb[0].mxu0
        %v2171 = vadd.f32 %v1994, %v2170
        %v2172 = vpop.f32.mrb[0].mxu0
        %2173 = vmatprep.mubr.bf16.mxu0 0
        %2174 = vmatmul.mubr.bf16.gmra.mrb[0].mxu0 %v701
        %v2175 = vpop.f32.mrb[0].mxu0
        %v2176 = vadd.f32 %v1999, %v2175
        %v2177 = vpop.f32.mrb[0].mxu0
        %v2178 = vpop.f32.mrb[0].mxu0
        %v2179 = vadd.f32 %v2002, %v2178
        %v2180 = vpop.f32.mrb[0].mxu0
        %2181 = vmatprep.mubr.bf16.mxu0 0
        %2182 = vmatmul.mubr.bf16.gmra.mrb[0].mxu0 %v704
        %v2183 = vpop.f32.mrb[0].mxu0
        %v2184 = vadd.f32 %v2007, %v2183
        %v2185 = vpop.f32.mrb[0].mxu0
        %v2186 = vpop.f32.mrb[0].mxu0
        %v2187 = vadd.f32 %v2010, %v2186
        %v2188 = vpop.f32.mrb[0].mxu0
        %2189 = vmatprep.mubr.bf16.mxu0 0
        %2190 = vmatmul.mubr.bf16.gmra.mrb[0].mxu0 %v707
        %v2191 = vpop.f32.mrb[0].mxu0
        %v2192 = vadd.f32 %v2015, %v2191
        %v2193 = vpop.f32.mrb[0].mxu0
        %v2194 = vpop.f32.mrb[0].mxu0
        %v2195 = vadd.f32 %v2018, %v2194
        %v2196 = vpop.f32.mrb[0].mxu0
        %2197 = vmatprep.mubr.bf16.mxu0 0
        %2198 = vmatmul.mubr.bf16.gmra.mrb[0].mxu0 %v710
        %v2199 = vpop.f32.mrb[0].mxu0
        %v2200 = vadd.f32 %v2023, %v2199
        %v2201 = vpop.f32.mrb[0].mxu0
        %v2202 = vpop.f32.mrb[0].mxu0
        %v2203 = vadd.f32 %v2026, %v2202
        %v2204 = vpop.f32.mrb[0].mxu0
        %2205 = vmatprep.mubr.bf16.mxu0 0
        %2206 = vmatmul.mubr.bf16.gmra.mrb[0].mxu0 %v713
        %v2207 = vpop.f32.mrb[0].mxu0
        %v2208 = vadd.f32 %v2031, %v2207
        %v2209 = vpop.f32.mrb[0].mxu0
        %v2210 = vpop.f32.mrb[0].mxu0
        %v2211 = vadd.f32 %v2034, %v2210
        %v2212 = vpop.f32.mrb[0].mxu0
        %2213 = vmatprep.mubr.bf16.mxu0 0
        %2214 = vmatmul.mubr.bf16.gmra.mrb[0].mxu0 %v716
        %v2215 = vpop.f32.mrb[0].mxu0
        %v2216 = vadd.f32 %v2039, %v2215
        %v2217 = vpop.f32.mrb[0].mxu0
        %v2218 = vpop.f32.mrb[0].mxu0
        %v2219 = vadd.f32 %v2042, %v2218
        %v2220 = vpop.f32.mrb[0].mxu0
        %2221 = vmatprep.mubr.bf16.mxu0 0
        %2222 = vmatmul.mubr.bf16.gmra.mrb[0].mxu0 %v719
        %v2223 = vpop.f32.mrb[0].mxu0
        %v2224 = vadd.f32 %v2047, %v2223
        %v2225 = vpop.f32.mrb[0].mxu0
        %v2226 = vpop.f32.mrb[0].mxu0
        %v2227 = vadd.f32 %v2050, %v2226
        %v2228 = vpop.f32.mrb[0].mxu0
        %2229 = vmatprep.mubr.bf16.mxu0 0
        %2230 = vmatmul.mubr.bf16.gmra.mrb[0].mxu0 %v722
        %v2231 = vpop.f32.mrb[0].mxu0
        %v2232 = vadd.f32 %v2055, %v2231
        %v2233 = vpop.f32.mrb[0].mxu0
        %v2234 = vpop.f32.mrb[0].mxu0
        %v2235 = vadd.f32 %v2058, %v2234
        %v2236 = vpop.f32.mrb[0].mxu0
        %2237 = vmatprep.mubr.bf16.mxu0 0
        %2238 = vmatmul.mubr.bf16.gmra.mrb[0].mxu0 %v765
        %v2239 = vpop.f32.mrb[0].mxu0
        %v2240 = vadd.f32 %v2063, %v2239
        %v2241 = vpop.f32.mrb[0].mxu0
        %v2242 = vpop.f32.mrb[0].mxu0
        %v2243 = vadd.f32 %v2066, %v2242
        %v2244 = vpop.f32.mrb[0].mxu0
        %2245 = vmatprep.mubr.bf16.mxu0 0
        %2246 = vmatmul.mubr.bf16.gmra.mrb[0].mxu0 %v791
        %v2247 = vpop.f32.mrb[0].mxu0
        %v2248 = vadd.f32 %v2071, %v2247
        %v2249 = vpop.f32.mrb[0].mxu0
        %v2250 = vpop.f32.mrb[0].mxu0
        %v2251 = vadd.f32 %v2074, %v2250
        %v2252 = vpop.f32.mrb[0].mxu0
        %2253 = vdwg.mxu0
        %v2254 = vpack.c.bf16 %v2115, %v2112
        %v2255 = vpack.c.bf16 %v2123, %v2120
        %v2256 = vpack.c.bf16 %v2131, %v2128
        %v2257 = vpack.c.bf16 %v2139, %v2136
        %v2258 = vpack.c.bf16 %v2147, %v2144
        %v2259 = vpack.c.bf16 %v2155, %v2152
        %v2260 = vpack.c.bf16 %v2163, %v2160
        %v2261 = vpack.c.bf16 %v2171, %v2168
        %v2262 = vpack.c.bf16 %v2179, %v2176
        %v2263 = vpack.c.bf16 %v2187, %v2184
        %v2264 = vpack.c.bf16 %v2195, %v2192
        %v2265 = vpack.c.bf16 %v2203, %v2200
        %v2266 = vpack.c.bf16 %v2211, %v2208
        %v2267 = vpack.c.bf16 %v2219, %v2216
        %v2268 = vpack.c.bf16 %v2227, %v2224
        %v2269 = vpack.c.bf16 %v2235, %v2232
        %v2270 = vpack.c.bf16 %v2243, %v2240
        %v2271 = vpack.c.bf16 %v2251, %v2248
        %v2290 = vunpack.c.l.b16 %v2254
        %v2291 = vunpack.c.h.b16 %v2254
        %v2292 = vunpack.c.l.b16 %v2255
        %v2293 = vunpack.c.h.b16 %v2255
        %v2294 = vunpack.c.l.b16 %v2256
        %v2295 = vunpack.c.h.b16 %v2256
        %v2296 = vunpack.c.l.b16 %v2257
        %v2297 = vunpack.c.h.b16 %v2257
        %v2298 = vunpack.c.l.b16 %v2258
        %v2299 = vunpack.c.h.b16 %v2258
        %v2300 = vunpack.c.l.b16 %v2259
        %v2301 = vunpack.c.h.b16 %v2259
        %v2302 = vunpack.c.l.b16 %v2260
        %v2303 = vunpack.c.h.b16 %v2260
        %v2304 = vunpack.c.l.b16 %v2261
        %v2305 = vunpack.c.h.b16 %v2261
        %v2306 = vunpack.c.l.b16 %v2262
        %v2307 = vunpack.c.h.b16 %v2262
        %v2308 = vunpack.c.l.b16 %v2263
        %v2309 = vunpack.c.h.b16 %v2263
        %v2310 = vunpack.c.l.b16 %v2264
        %v2311 = vunpack.c.h.b16 %v2264
        %v2312 = vunpack.c.l.b16 %v2265
        %v2313 = vunpack.c.h.b16 %v2265
        %v2314 = vunpack.c.l.b16 %v2266
        %v2315 = vunpack.c.h.b16 %v2266
        %v2316 = vunpack.c.l.b16 %v2267
        %v2317 = vunpack.c.h.b16 %v2267
        %v2318 = vunpack.c.l.b16 %v2268
        %v2319 = vunpack.c.h.b16 %v2268
        %v2320 = vunpack.c.l.b16 %v2269
        %v2321 = vunpack.c.h.b16 %v2269
        %v2322 = vunpack.c.l.b16 %v2270
        %v2323 = vunpack.c.h.b16 %v2270
        %v2324 = vunpack.c.l.b16 %v2271
        %v2325 = vunpack.c.h.b16 %v2271
        %v2326 = vpack.c.b16 %v2290, %v2290
        %v2327 = vpack.c.b16 %v2291, %v2291
        %v2328 = vpack.c.b16 %v2292, %v2292
        %v2329 = vpack.c.b16 %v2293, %v2293
        %v2330 = vpack.c.b16 %v2294, %v2294
        %v2331 = vpack.c.b16 %v2295, %v2295
        %v2332 = vpack.c.b16 %v2296, %v2296
        %v2333 = vpack.c.b16 %v2297, %v2297
        %v2334 = vpack.c.b16 %v2298, %v2298
        %v2335 = vpack.c.b16 %v2299, %v2299
        %v2336 = vpack.c.b16 %v2300, %v2300
        %v2337 = vpack.c.b16 %v2301, %v2301
        %v2338 = vpack.c.b16 %v2302, %v2302
        %v2339 = vpack.c.b16 %v2303, %v2303
        %v2340 = vpack.c.b16 %v2304, %v2304
        %v2341 = vpack.c.b16 %v2305, %v2305
        %v2342 = vpack.c.b16 %v2306, %v2306
        %v2343 = vpack.c.b16 %v2307, %v2307
        %v2344 = vpack.c.b16 %v2308, %v2308
        %v2345 = vpack.c.b16 %v2309, %v2309
        %v2346 = vpack.c.b16 %v2310, %v2310
        %v2347 = vpack.c.b16 %v2311, %v2311
        %v2348 = vpack.c.b16 %v2312, %v2312
        %v2349 = vpack.c.b16 %v2313, %v2313
        %v2350 = vpack.c.b16 %v2314, %v2314
        %v2351 = vpack.c.b16 %v2315, %v2315
        %v2352 = vpack.c.b16 %v2316, %v2316
        %v2353 = vpack.c.b16 %v2317, %v2317
        %v2354 = vpack.c.b16 %v2318, %v2318
        %v2355 = vpack.c.b16 %v2319, %v2319
        %v2356 = vpack.c.b16 %v2320, %v2320
        %v2357 = vpack.c.b16 %v2321, %v2321
        %v2358 = vpack.c.b16 %v2322, %v2322
        %v2359 = vpack.c.b16 %v2323, %v2323
        %v2360 = vpack.c.b16 %v2324, %v2324
        %v2361 = vpack.c.b16 %v2325, %v2325
        %2398 = vst [vmem:[%s193] sm:$0xf] %v2326
        %2399 = vst [vmem:[%s193 + $0x4] sm:$0xf] %v2327
        %2400 = vst [vmem:[%s193 + $0x8] sm:$0xf] %v2328
        %2401 = vst [vmem:[%s193 + $0xc] sm:$0xf] %v2329
        %2402 = vst [vmem:[%s193 + $0x10] sm:$0xf] %v2330
        %2403 = vst [vmem:[%s193 + $0x14] sm:$0xf] %v2331
        %2404 = vst [vmem:[%s193 + $0x18] sm:$0xf] %v2332
        %2405 = vst [vmem:[%s193 + $0x1c] sm:$0xf] %v2333
        %2406 = vst [vmem:[%s193 + $0x20] sm:$0xf] %v2334
        %2407 = vst [vmem:[%s193 + $0x24] sm:$0xf] %v2335
        %2408 = vst [vmem:[%s193 + $0x28] sm:$0xf] %v2336
        %2409 = vst [vmem:[%s193 + $0x2c] sm:$0xf] %v2337
        %2410 = vst [vmem:[%s193 + $0x30] sm:$0xf] %v2338
        %2411 = vst [vmem:[%s193 + $0x34] sm:$0xf] %v2339
        %2412 = vst [vmem:[%s193 + $0x38] sm:$0xf] %v2340
        %2413 = vst [vmem:[%s193 + $0x3c] sm:$0xf] %v2341
        %2414 = vst [vmem:[%s193 + $0x40] sm:$0xf] %v2342
        %2415 = vst [vmem:[%s193 + $0x44] sm:$0xf] %v2343
        %2416 = vst [vmem:[%s193 + $0x48] sm:$0xf] %v2344
        %2417 = vst [vmem:[%s193 + $0x4c] sm:$0xf] %v2345
        %2418 = vst [vmem:[%s193 + $0x50] sm:$0xf] %v2346
        %2419 = vst [vmem:[%s193 + $0x54] sm:$0xf] %v2347
        %2420 = vst [vmem:[%s193 + $0x58] sm:$0xf] %v2348
        %2421 = vst [vmem:[%s193 + $0x5c] sm:$0xf] %v2349
        %2422 = vst [vmem:[%s193 + $0x60] sm:$0xf] %v2350
        %2423 = vst [vmem:[%s193 + $0x64] sm:$0xf] %v2351
        %2424 = vst [vmem:[%s193 + $0x68] sm:$0xf] %v2352
        %2425 = vst [vmem:[%s193 + $0x6c] sm:$0xf] %v2353
        %2426 = vst [vmem:[%s193 + $0x70] sm:$0xf] %v2354
        %2427 = vst [vmem:[%s193 + $0x74] sm:$0xf] %v2355
        %2428 = vst [vmem:[%s193 + $0x78] sm:$0xf] %v2356
        %2429 = vst [vmem:[%s193 + $0x7c] sm:$0xf] %v2357
        %2430 = vst [vmem:[%s193 + $0x80] sm:$0xf] %v2358
        %2431 = vst [vmem:[%s193 + $0x84] sm:$0xf] %v2359
        %2432 = vst [vmem:[%s193 + $0x88] sm:$0xf] %v2360
        %2433 = vst [vmem:[%s193 + $0x8c] sm:$0xf] %v2361
        %v2434 = vunpack.c.l.bf16 %v2255
        %v2435 = vunpack.c.h.bf16 %v2255
        %v2436 = vunpack.c.l.bf16 %v2256
        %v2437 = vunpack.c.h.bf16 %v2256
        %v2438 = vunpack.c.l.bf16 %v2257
        %v2439 = vunpack.c.h.bf16 %v2257
        %v2440 = vunpack.c.l.bf16 %v2258
        %v2441 = vunpack.c.h.bf16 %v2258
        %v2442 = vunpack.c.l.bf16 %v2259
        %v2443 = vunpack.c.h.bf16 %v2259
        %v2444 = vunpack.c.l.bf16 %v2260
        %v2445 = vunpack.c.h.bf16 %v2260
        %v2446 = vunpack.c.l.bf16 %v2261
        %v2447 = vunpack.c.h.bf16 %v2261
        %v2448 = vunpack.c.l.bf16 %v2262
        %v2449 = vunpack.c.h.bf16 %v2262
        %v2450 = vunpack.c.l.bf16 %v2263
        %v2451 = vunpack.c.h.bf16 %v2263
        %v2452 = vunpack.c.l.bf16 %v2264
        %v2453 = vunpack.c.h.bf16 %v2264
        %v2454 = vunpack.c.l.bf16 %v2265
        %v2455 = vunpack.c.h.bf16 %v2265
        %v2456 = vunpack.c.l.bf16 %v2266
        %v2457 = vunpack.c.h.bf16 %v2266
        %v2458 = vunpack.c.l.bf16 %v2267
        %v2459 = vunpack.c.h.bf16 %v2267
        %v2460 = vunpack.c.l.bf16 %v2268
        %v2461 = vunpack.c.h.bf16 %v2268
        %v2462 = vunpack.c.l.bf16 %v2269
        %v2463 = vunpack.c.h.bf16 %v2269
        %v2464 = vunpack.c.l.bf16 %v2270
        %v2465 = vunpack.c.h.bf16 %v2270
        %v2466 = vadd.f32 %v2434, %v2435
        %v2467 = vadd.f32 %v2466, %v2436
        %v2468 = vadd.f32 %v2467, %v2437
        %v2469 = vadd.f32 %v2468, %v2438
        %v2470 = vadd.f32 %v2469, %v2439
        %v2471 = vadd.f32 %v2470, %v2440
        %v2472 = vadd.f32 %v2471, %v2441
        %v2473 = vadd.f32 %v2472, %v2442
        %v2474 = vadd.f32 %v2473, %v2443
        %v2475 = vadd.f32 %v2474, %v2444
        %v2476 = vadd.f32 %v2475, %v2445
        %v2477 = vadd.f32 %v2476, %v2446
        %v2478 = vadd.f32 %v2477, %v2447
        %v2479 = vadd.f32 %v2478, %v2448
        %v2480 = vadd.f32 %v2479, %v2449
        %v2481 = vadd.f32 %v2480, %v2450
        %v2482 = vadd.f32 %v2481, %v2451
        %v2483 = vadd.f32 %v2482, %v2452
        %v2484 = vadd.f32 %v2483, %v2453
        %v2485 = vadd.f32 %v2484, %v2454
        %v2486 = vadd.f32 %v2485, %v2455
        %v2487 = vadd.f32 %v2486, %v2456
        %v2488 = vadd.f32 %v2487, %v2457
        %v2489 = vadd.f32 %v2488, %v2458
        %v2490 = vadd.f32 %v2489, %v2459
        %v2491 = vadd.f32 %v2490, %v2460
        %v2492 = vadd.f32 %v2491, %v2461
        %v2493 = vadd.f32 %v2492, %v2462
        %v2494 = vadd.f32 %v2493, %v2463
        %v2495 = vadd.f32 %v2494, %v2464
        %v2496 = vadd.f32 %v2495, %v2465
        %v2497 = vrot.slane %v2496, 4
        %v2498 = vadd.f32 %v2496, %v2497
        %v2499 = vrot.slane %v2498, 2
        %v2500 = vadd.f32 %v2498, %v2499
        %v2501 = vrot.slane %v2500, 1
        %v2502 = vadd.f32 %v2500, %v2501
        %2503 = vst [vmem:[%s200] sm:$0x1] %v2502
        %v2504 = vmul.f32 %v2434, %v2434
        %v2505 = vmul.f32 %v2435, %v2435
        %v2506 = vmul.f32 %v2436, %v2436
        %v2507 = vmul.f32 %v2437, %v2437
        %v2508 = vmul.f32 %v2438, %v2438
        %v2509 = vmul.f32 %v2439, %v2439
        %v2510 = vmul.f32 %v2440, %v2440
        %v2511 = vmul.f32 %v2441, %v2441
        %v2512 = vmul.f32 %v2442, %v2442
        %v2513 = vmul.f32 %v2443, %v2443
        %v2514 = vmul.f32 %v2444, %v2444
        %v2515 = vmul.f32 %v2445, %v2445
        %v2516 = vmul.f32 %v2446, %v2446
        %v2517 = vmul.f32 %v2447, %v2447
        %v2518 = vmul.f32 %v2448, %v2448
        %v2519 = vmul.f32 %v2449, %v2449
        %v2520 = vmul.f32 %v2450, %v2450
        %v2521 = vmul.f32 %v2451, %v2451
        %v2522 = vmul.f32 %v2452, %v2452
        %v2523 = vmul.f32 %v2453, %v2453
        %v2524 = vmul.f32 %v2454, %v2454
        %v2525 = vmul.f32 %v2455, %v2455
        %v2526 = vmul.f32 %v2456, %v2456
        %v2527 = vmul.f32 %v2457, %v2457
        %v2528 = vmul.f32 %v2458, %v2458
        %v2529 = vmul.f32 %v2459, %v2459
        %v2530 = vmul.f32 %v2460, %v2460
        %v2531 = vmul.f32 %v2461, %v2461
        %v2532 = vmul.f32 %v2462, %v2462
        %v2533 = vmul.f32 %v2463, %v2463
        %v2534 = vmul.f32 %v2464, %v2464
        %v2535 = vmul.f32 %v2465, %v2465
        %v2536 = vadd.f32 %v2504, %v2505
        %v2537 = vadd.f32 %v2536, %v2506
        %v2538 = vadd.f32 %v2537, %v2507
        %v2539 = vadd.f32 %v2538, %v2508
        %v2540 = vadd.f32 %v2539, %v2509
        %v2541 = vadd.f32 %v2540, %v2510
        %v2542 = vadd.f32 %v2541, %v2511
        %v2543 = vadd.f32 %v2542, %v2512
        %v2544 = vadd.f32 %v2543, %v2513
        %v2545 = vadd.f32 %v2544, %v2514
        %v2546 = vadd.f32 %v2545, %v2515
        %v2547 = vadd.f32 %v2546, %v2516
        %v2548 = vadd.f32 %v2547, %v2517
        %v2549 = vadd.f32 %v2548, %v2518
        %v2550 = vadd.f32 %v2549, %v2519
        %v2551 = vadd.f32 %v2550, %v2520
        %v2552 = vadd.f32 %v2551, %v2521
        %v2553 = vadd.f32 %v2552, %v2522
        %v2554 = vadd.f32 %v2553, %v2523
        %v2555 = vadd.f32 %v2554, %v2524
        %v2556 = vadd.f32 %v2555, %v2525
        %v2557 = vadd.f32 %v2556, %v2526
        %v2558 = vadd.f32 %v2557, %v2527
        %v2559 = vadd.f32 %v2558, %v2528
        %v2560 = vadd.f32 %v2559, %v2529
        %v2561 = vadd.f32 %v2560, %v2530
        %v2562 = vadd.f32 %v2561, %v2531
        %v2563 = vadd.f32 %v2562, %v2532
        %v2564 = vadd.f32 %v2563, %v2533
        %v2565 = vadd.f32 %v2564, %v2534
        %v2566 = vadd.f32 %v2565, %v2535
        %v2567 = vrot.slane %v2566, 4
        %v2568 = vadd.f32 %v2566, %v2567
        %v2569 = vrot.slane %v2568, 2
        %v2570 = vadd.f32 %v2568, %v2569
        %v2571 = vrot.slane %v2570, 1
        %v2572 = vadd.f32 %v2570, %v2571
        %2573 = vst [vmem:[%s200 + $0x1] sm:$0x1] %v2572
        %s2574 = sand.u32 %s92, 1
        %s2575 = scalar_lea.sflag [#allocation3], %s2574
        %s2576 = sand.u32 %s92, 1
        %s2577 = smul.addr %s2576, 144
        %s2578 = scalar_lea.vmem [#allocation2], %s2577
        %s2579 = sand.u32 %s120, 1
        %s2580 = scalar_lea.sflag [#allocation5], %s2579
        %s2581 = sand.u32 %s120, 1
        %s2582 = smul.addr %s2581, 2
        %s2583 = scalar_lea.vmem [#allocation4], %s2582
        // Predicated region
        $region29: #{tpu_custom_call.1} parent=27 // pred_check
          %p2584 = pneg %p102
        $region30: #{tpu_custom_call.1} parent=27 // pred_check_branch
          %2586 = sbr.rel (%p2584) target = $region32
        $region31: #{tpu_custom_call.1} parent=27 // pred_region
          %s2588 = ssub.s32 2304, 2304
          %2589 = vsyncadd %s2575, %s2588
          %s2590 = smul.addr %s26, 36
          %s2591 = smul.addr %s25, 36
          %s2592 = sadd.s32 %s2590, %s2591
          %s2593 = smul.addr %s2592, 64
          %s2594 = scalar_lea.hbm %s2, %s2593
          %s2595 = sshll.u32 %s2578, 4
          %s2596 = int_to_ptr.vmem [resolvable:$true] %s2595
          %2601 = dma.vmem_to_hbm [thread:$0]  %s2596, 2304, %s2594, %s2575, 64, 64, 4
        $region32: #{tpu_custom_call.1} parent=27 // pred_fallthru
          _
        // Predicated region
        $region33: #{tpu_custom_call.1} parent=27 // pred_check
          %p2602 = pneg %p130
        $region34: #{tpu_custom_call.1} parent=27 // pred_check_branch
          %2604 = sbr.rel (%p2602) target = $region36
        $region35: #{tpu_custom_call.1} parent=27 // pred_region
          %s2606 = ssub.s32 32, 32
          %2607 = vsyncadd %s2580, %s2606
          %s2608 = sadd.s32 %s26, %s25
          %s2609 = smul.addr %s2608, 32
          %s2610 = scalar_lea.hbm %s3, %s2609
          %s2612 = sshll.u32 %s2583, 4
          %s2613 = int_to_ptr.vmem [resolvable:$true] %s2612
          %2615 = dma.vmem_to_hbm [thread:$0]  %s2613, 32, %s2610, %s2580
        $region36: #{tpu_custom_call.1} parent=27 // pred_fallthru
          _
      $region28: #{tpu_custom_call.1} parent=5 // pred_fallthru
        _
      %p2616 = scmp.le.s32.totalorder 2, %s16
      // Predicated region
      $region37: #{tpu_custom_call.1} parent=5 // pred_check
        %p2617 = pneg %p2616
      $region38: #{tpu_custom_call.1} parent=5 // pred_check_branch
        %2619 = sbr.rel (%p2617) target = $region40
      $region39: #{tpu_custom_call.1} parent=5 // pred_region
        %s2620 = ssub.s32 %s16, 2
        // Predicated region
        $region41: #{tpu_custom_call.1} parent=39 // pred_check
          %p2621 = pneg %p108
        $region42: #{tpu_custom_call.1} parent=39 // pred_check_branch
          %2623 = sbr.rel (%p2621) target = $region44
        $region43: #{tpu_custom_call.1} parent=39 // pred_region
          %s2624 = sand.u32 %s93, 1
          %s2625 = scalar_lea.sflag [#allocation3], %s2624
          %s2626 = sand.u32 %s93, 1
          %s2627 = smul.addr %s2626, 144
          %s2628 = scalar_lea.vmem [#allocation2], %s2627
          %2629 = dma.done %s2625, 2304
        $region44: #{tpu_custom_call.1} parent=39 // pred_fallthru
          _
        // Predicated region
        $region45: #{tpu_custom_call.1} parent=39 // pred_check
          %p2630 = pneg %p136
        $region46: #{tpu_custom_call.1} parent=39 // pred_check_branch
          %2632 = sbr.rel (%p2630) target = $region48
        $region47: #{tpu_custom_call.1} parent=39 // pred_region
          %s2633 = sand.u32 %s121, 1
          %s2634 = scalar_lea.sflag [#allocation5], %s2633
          %s2635 = sand.u32 %s121, 1
          %s2636 = smul.addr %s2635, 2
          %s2637 = scalar_lea.vmem [#allocation4], %s2636
          %2638 = dma.done %s2634, 32
        $region48: #{tpu_custom_call.1} parent=39 // pred_fallthru
          _
      $region40: #{tpu_custom_call.1} parent=5 // pred_fallthru
        _
    $region6: #{tpu_custom_call.1} parent=1 // loop_footer
      %s20 = sadd.s32 1, %s16
    $region7: #{tpu_custom_call.1} parent=1 // loop_footer_branch
      %15 = sbr.rel target = $region3
    $region8: #{tpu_custom_call.1} parent=1 // loop_exit
      _
    %2639 = vsyncpa [#allocation3], 1
    %s2640 = scalar_lea.sflag [#allocation3], 1
    %2641 = vsyncpa %s2640, 1
    %2642 = vsyncpa [#allocation5], 1
    %s2643 = scalar_lea.sflag [#allocation5], 1
    %2644 = vsyncpa %s2643, 1

// kernel: tpu_custom_call.1
$region0: #{tpu_custom_call.1}
  #allocation0 [shape = 'u32[]', space=smem, size = 0x4, offset = 0x4, fixed_abs, tag = 'smem constant byte address 0x4 - core index']
  #allocation1 [shape = 'u32[144,128]{1,0:T(1,128)}', space=vmem, size = 0x12000, scoped, tag = 'internal scratch']
  %s0 = inlined_call_operand.vmem [shape: bf16[2,1,20,18,128], index: 0, kind: input, shape index: {}]
  %s1 = inlined_call_operand.vmem [shape: bf16[1152,128], index: 1, kind: input, shape index: {}]
  %s2 = inlined_call_operand.hbm [shape: bf16[2,1,18,16,128], index: 2, kind: output, shape index: {0}]
  %s3 = inlined_call_operand.hbm [shape: f32[2,1,2,128], index: 3, kind: output, shape index: {1}]
  %4 = xla_tuple %s2, %s3
  %s5 = sld [smem:[#allocation0]]
  $region49: #{tpu_custom_call.1} parent=0
    _
  %s7 = ssub.s32 1, %s5
  %s8 = scalar_select 0, %s7, %s5
  $region1: #{tpu_custom_call.1} parent=0
    #allocation2 [shape = 'u8[147456]{0}', space=vmem, size = 0x24000, scoped, tag = 'output window, operand 0']
    #allocation3 [shape = 's32[2]{0}', space=sflag, size = 0x8, scoped, tag = 'scoped memory for tpu_custom_call.1']
    #allocation4 [shape = 'u8[2048]{0}', space=vmem, size = 0x800, scoped, tag = 'output window, operand 1']
    #allocation5 [shape = 's32[2]{0}', space=sflag, size = 0x8, scoped, tag = 'scoped memory for tpu_custom_call.1']
    %9 = vsyncpa [#allocation3], 0
    %s10 = scalar_lea.sflag [#allocation3], 1
    %11 = vsyncpa %s10, 0
    %12 = vsyncpa [#allocation5], 0
    %s13 = scalar_lea.sflag [#allocation5], 1
    %14 = vsyncpa %s13, 0
    loop: start=0, step=1, limit=4
    $region2: #{tpu_custom_call.1} parent=1 // loop_pre_header
      _
    $region3: #{tpu_custom_call.1} parent=1 // loop_header
      %s16 = sphi 0, %s20
      %p17 = scmp.ge.s32.totalorder %s16, 4
      %s23 = sphi 0, %s35
      %s24 = sphi 0, %s31
      %s25 = sphi 0, %s23
      %s26 = sphi 0, %s24
      %s27 = sphi 0, %s25
      %s28 = sphi 0, %s26
      %s40 = sphi 0, %s42
      %s43 = sphi 0, %s40
      %s44 = sphi 0, %s43
      %s60 = sphi 0, %s44
      %s64 = sphi 0, %s64
      %s66 = sphi 0, %s64
      %s67 = sphi 0, %s66
      %s81 = sphi 0, %s67
      %s89 = sphi 0, %s91
      %s92 = sphi 0, %s89
      %s93 = sphi 0, %s92
      %s109 = sphi 0, %s93
      %s117 = sphi 0, %s119
      %s120 = sphi 0, %s117
      %s121 = sphi 0, %s120
      %s137 = sphi 0, %s121
    $region4: #{tpu_custom_call.1} parent=1 // loop_header_branch
      %19 = sbr.rel (%p17) target = $region8
    $region5: #{tpu_custom_call.1} parent=1 // loop_body
      %s21 = ssub.s32 %s16, 1
      %s22 = ssub.s32 %s16, 2
      %s29 = sadd.s32 1, %s24
      %p30 = scmp.ge.s32.totalorder %s29, 1
      %s31 = scalar_select %p30, 0, %s29
      %s32 = sadd.s32 1, %s23
      %s33 = scalar_select %p30, %s32, %s23
      %p34 = scmp.ge.s32.totalorder %s33, 2
      %s35 = scalar_select %p34, 0, %s33
      %s36 = ssub.s32 %s23, %s35
      %s37 = ssub.s32 %s24, %s31
      %s38 = sor.u32 %s36, %s37
      %p39 = scmp.eq.s32.totalorder %s38, 0
      %s41 = sadd.s32 %s40, 1
      %s42 = scalar_select %p39, %s40, %s41
      %p45 = pneg %p39
      %p46 = scmp.eq.s32.totalorder %s16, 1
      %p47 = por %p45, %p46
      %p48 = scmp.ne.s32.totalorder %s40, %s43
      %p49 = scmp.eq.s32.totalorder %s16, 0
      %p50 = por %p48, %p49
      %p51 = scmp.ne.s32.totalorder %s40, %s43
      %p52 = scmp.eq.s32.totalorder %s21, 1
      %p53 = por %p51, %p52
      %p54 = scmp.ne.s32.totalorder %s43, %s44
      %p55 = scmp.eq.s32.totalorder %s21, 0
      %p56 = por %p54, %p55
      %p57 = scmp.ne.s32.totalorder %s43, %s44
      %p58 = scmp.eq.s32.totalorder %s22, 1
      %p59 = por %p57, %p58
      %p61 = scmp.ne.s32.totalorder %s44, %s60
      %p62 = scmp.eq.s32.totalorder %s22, 0
      %p63 = por %p61, %p62
      %s65 = sadd.s32 %s64, 1
      %p68 = scmp.eq.s32.totalorder %s16, 1
      %p69 = scmp.ne.s32.totalorder %s64, %s66
      %p70 = scmp.eq.s32.totalorder %s16, 0
      %p71 = por %p69, %p70
      %p72 = scmp.ne.s32.totalorder %s64, %s66
      %p73 = scmp.eq.s32.totalorder %s21, 1
      %p74 = por %p72, %p73
      %p75 = scmp.ne.s32.totalorder %s66, %s67
      %p76 = scmp.eq.s32.totalorder %s21, 0
      %p77 = por %p75, %p76
      %p78 = scmp.ne.s32.totalorder %s66, %s67
      %p79 = scmp.eq.s32.totalorder %s22, 1
      %p80 = por %p78, %p79
      %p82 = scmp.ne.s32.totalorder %s67, %s81
      %p83 = scmp.eq.s32.totalorder %s22, 0
      %p84 = por %p82, %p83
      %s85 = ssub.s32 %s23, %s35
      %s86 = ssub.s32 %s24, %s31
      %s87 = sor.u32 %s85, %s86
      %p88 = scmp.eq.s32.totalorder %s87, 0
      %s90 = sadd.s32 %s89, 1
      %s91 = scalar_select %p88, %s89, %s90
      %p94 = pneg %p88
      %p95 = scmp.eq.s32.totalorder %s16, 1
      %p96 = por %p94, %p95
      %p97 = scmp.ne.s32.totalorder %s89, %s92
      %p98 = scmp.eq.s32.totalorder %s16, 0
      %p99 = por %p97, %p98
      %p100 = scmp.ne.s32.totalorder %s89, %s92
      %p101 = scmp.eq.s32.totalorder %s21, 1
      %p102 = por %p100, %p101
      %p103 = scmp.ne.s32.totalorder %s92, %s93
      %p104 = scmp.eq.s32.totalorder %s21, 0
      %p105 = por %p103, %p104
      %p106 = scmp.ne.s32.totalorder %s92, %s93
      %p107 = scmp.eq.s32.totalorder %s22, 1
      %p108 = por %p106, %p107
      %p110 = scmp.ne.s32.totalorder %s93, %s109
      %p111 = scmp.eq.s32.totalorder %s22, 0
      %p112 = por %p110, %p111
      %s113 = ssub.s32 %s23, %s35
      %s114 = ssub.s32 %s24, %s31
      %s115 = sor.u32 %s113, %s114
      %p116 = scmp.eq.s32.totalorder %s115, 0
      %s118 = sadd.s32 %s117, 1
      %s119 = scalar_select %p116, %s117, %s118
      %p122 = pneg %p116
      %p123 = scmp.eq.s32.totalorder %s16, 1
      %p124 = por %p122, %p123
      %p125 = scmp.ne.s32.totalorder %s117, %s120
      %p126 = scmp.eq.s32.totalorder %s16, 0
      %p127 = por %p125, %p126
      %p128 = scmp.ne.s32.totalorder %s117, %s120
      %p129 = scmp.eq.s32.totalorder %s21, 1
      %p130 = por %p128, %p129
      %p131 = scmp.ne.s32.totalorder %s120, %s121
      %p132 = scmp.eq.s32.totalorder %s21, 0
      %p133 = por %p131, %p132
      %p134 = scmp.ne.s32.totalorder %s120, %s121
      %p135 = scmp.eq.s32.totalorder %s22, 1
      %p136 = por %p134, %p135
      %p138 = scmp.ne.s32.totalorder %s121, %s137
      %p139 = scmp.eq.s32.totalorder %s22, 0
      %p140 = por %p138, %p139
      %p141 = scmp.le.s32.totalorder 1, %s16
      %p142 = scmp.lt.s32.totalorder %s16, 3
      %p143 = pnand %p141, %p142
      %p144 = pneg %p143
      // Predicated region
      $region9: #{tpu_custom_call.1} parent=5 // pred_check
        _
      $region10: #{tpu_custom_call.1} parent=5 // pred_check_branch
        %146 = sbr.rel (%p143) target = $region12
      $region11: #{tpu_custom_call.1} parent=5 // pred_region
        %s147 = ssub.s32 %s16, 1
        // Predicated region
        $region13: #{tpu_custom_call.1} parent=11 // pred_check
          %p148 = pneg %p77
        $region14: #{tpu_custom_call.1} parent=11 // pred_check_branch
          %150 = sbr.rel (%p148) target = $region16
        $region15: #{tpu_custom_call.1} parent=11 // pred_region
          _
        $region16: #{tpu_custom_call.1} parent=11 // pred_fallthru
          _
      $region12: #{tpu_custom_call.1} parent=5 // pred_fallthru
        _
      %p151 = scmp.lt.s32.totalorder %s16, 2
      // Predicated region
      $region17: #{tpu_custom_call.1} parent=5 // pred_check
        %p152 = pneg %p151
      $region18: #{tpu_custom_call.1} parent=5 // pred_check_branch
        %154 = sbr.rel (%p152) target = $region20
      $region19: #{tpu_custom_call.1} parent=5 // pred_region
        // Predicated region
        $region21: #{tpu_custom_call.1} parent=19 // pred_check
          %p155 = pneg %p50
        $region22: #{tpu_custom_call.1} parent=19 // pred_check_branch
          %157 = sbr.rel (%p155) target = $region24
        $region23: #{tpu_custom_call.1} parent=19 // pred_region
          %p158 = scmp.lt.s32.totalorder %s23, 1
          %s159 = scalar_select %p158, %s23, 1
          %p160 = scmp.lt.s32.totalorder %s24, 0
          %s161 = scalar_select %p160, %s24, 0
          %s162 = smul.addr %s161, 60
          %s163 = smul.addr %s159, 60
          %s164 = sadd.s32 %s162, %s163
          %s165 = smul.addr %s164, 4
          %s166 = scalar_lea.vmem %s0, %s165
        $region24: #{tpu_custom_call.1} parent=19 // pred_fallthru
          _
      $region20: #{tpu_custom_call.1} parent=5 // pred_fallthru
        _
      %p167 = scmp.le.s32.totalorder 1, %s16
      %p168 = scmp.lt.s32.totalorder %s16, 3
      %p169 = pnand %p167, %p168
      %p170 = pneg %p169
      // Predicated region
      $region25: #{tpu_custom_call.1} parent=5 // pred_check
        _
      $region26: #{tpu_custom_call.1} parent=5 // pred_check_branch
        %172 = sbr.rel (%p169) target = $region28
      $region27: #{tpu_custom_call.1} parent=5 // pred_region
        %s173 = ssub.s32 %s16, 1
        %p174 = scmp.lt.s32.totalorder %s25, 1
        %s175 = scalar_select %p174, %s25, 1
        %p176 = scmp.lt.s32.totalorder %s26, 0
        %s177 = scalar_select %p176, %s26, 0
        %s178 = smul.addr %s177, 60
        %s179 = smul.addr %s175, 60
        %s180 = sadd.s32 %s178, %s179
        %s181 = smul.addr %s180, 4
        %s182 = scalar_lea.vmem %s0, %s181
        %p183 = pneg %p56
        %p184 = pneg %p53
        %p185 = pneg %p77
        %p186 = pneg %p74
        %p187 = pneg %p105
        %p188 = pneg %p102
        %s189 = sand.u32 %s92, 1
        %s190 = scalar_lea.sflag [#allocation3], %s189
        %s191 = sand.u32 %s92, 1
        %s192 = smul.addr %s191, 144
        %s193 = scalar_lea.vmem [#allocation2], %s192
        %p194 = pneg %p133
        %p195 = pneg %p130
        %s196 = sand.u32 %s120, 1
        %s197 = scalar_lea.sflag [#allocation5], %s196
        %s198 = sand.u32 %s120, 1
        %s199 = smul.addr %s198, 2
        %s200 = scalar_lea.vmem [#allocation4], %s199
        %p201 = scmp.lt.s32.totalorder %s25, 1
        %s202 = scalar_select %p201, %s25, 1
        %p203 = scmp.lt.s32.totalorder %s26, 0
        %s204 = scalar_select %p203, %s26, 0
        %s205 = smul.addr %s204, 60
        %s206 = smul.addr %s202, 60
        %s207 = sadd.s32 %s205, %s206
        %s208 = smul.addr %s207, 4
        %s209 = scalar_lea.vmem %s0, %s208
        %v211 = vld [vmem:[%s209] sm:$0xf]
        %v212 = vld [vmem:[%s209 + $0x4] sm:$0xf]
        %v213 = vld [vmem:[%s209 + $0x8] sm:$0x1]
        %v214 = vld [vmem:[%s209 + $0xc] sm:$0xf]
        %v215 = vld [vmem:[%s209 + $0x10] sm:$0xf]
        %v216 = vld [vmem:[%s209 + $0x14] sm:$0x1]
        %v217 = vld [vmem:[%s209 + $0x18] sm:$0xf]
        %v218 = vld [vmem:[%s209 + $0x1c] sm:$0xf]
        %v219 = vld [vmem:[%s209 + $0x20] sm:$0x1]
        %v220 = vld [vmem:[%s209 + $0x24] sm:$0xf]
        %v221 = vld [vmem:[%s209 + $0x28] sm:$0xf]
        %v222 = vld [vmem:[%s209 + $0x2c] sm:$0x1]
        %v223 = vld [vmem:[%s209 + $0x30] sm:$0xf]
        %v224 = vld [vmem:[%s209 + $0x34] sm:$0xf]
        %v225 = vld [vmem:[%s209 + $0x38] sm:$0x1]
        %v226 = vld [vmem:[%s209 + $0x3c] sm:$0xf]
        %v227 = vld [vmem:[%s209 + $0x40] sm:$0xf]
        %v228 = vld [vmem:[%s209 + $0x44] sm:$0x1]
        %v229 = vld [vmem:[%s209 + $0x48] sm:$0xf]
        %v230 = vld [vmem:[%s209 + $0x4c] sm:$0xf]
        %v231 = vld [vmem:[%s209 + $0x50] sm:$0x1]
        %v232 = vld [vmem:[%s209 + $0x54] sm:$0xf]
        %v233 = vld [vmem:[%s209 + $0x58] sm:$0xf]
        %v234 = vld [vmem:[%s209 + $0x5c] sm:$0x1]
        %v235 = vld [vmem:[%s209 + $0x60] sm:$0xf]
        %v236 = vld [vmem:[%s209 + $0x64] sm:$0xf]
        %v237 = vld [vmem:[%s209 + $0x68] sm:$0x1]
        %v238 = vld [vmem:[%s209 + $0x6c] sm:$0xf]
        %v239 = vld [vmem:[%s209 + $0x70] sm:$0xf]
        %v240 = vld [vmem:[%s209 + $0x74] sm:$0x1]
        %v241 = vld [vmem:[%s209 + $0x78] sm:$0xf]
        %v242 = vld [vmem:[%s209 + $0x7c] sm:$0xf]
        %v243 = vld [vmem:[%s209 + $0x80] sm:$0x1]
        %v244 = vld [vmem:[%s209 + $0x84] sm:$0xf]
        %v245 = vld [vmem:[%s209 + $0x88] sm:$0xf]
        %v246 = vld [vmem:[%s209 + $0x8c] sm:$0x1]
        %v247 = vld [vmem:[%s209 + $0x90] sm:$0xf]
        %v248 = vld [vmem:[%s209 + $0x94] sm:$0xf]
        %v249 = vld [vmem:[%s209 + $0x98] sm:$0x1]
        %v250 = vld [vmem:[%s209 + $0x9c] sm:$0xf]
        %v251 = vld [vmem:[%s209 + $0xa0] sm:$0xf]
        %v252 = vld [vmem:[%s209 + $0xa4] sm:$0x1]
        %v253 = vld [vmem:[%s209 + $0xa8] sm:$0xf]
        %v254 = vld [vmem:[%s209 + $0xac] sm:$0xf]
        %v255 = vld [vmem:[%s209 + $0xb0] sm:$0x1]
        %v256 = vld [vmem:[%s209 + $0xb4] sm:$0xf]
        %v257 = vld [vmem:[%s209 + $0xb8] sm:$0xf]
        %v258 = vld [vmem:[%s209 + $0xbc] sm:$0x1]
        %v259 = vld [vmem:[%s209 + $0xc0] sm:$0xf]
        %v260 = vld [vmem:[%s209 + $0xc4] sm:$0xf]
        %v261 = vld [vmem:[%s209 + $0xc8] sm:$0x1]
        %v262 = vld [vmem:[%s209 + $0xcc] sm:$0xf]
        %v263 = vld [vmem:[%s209 + $0xd0] sm:$0xf]
        %v264 = vld [vmem:[%s209 + $0xd4] sm:$0x1]
        %v265 = vld [vmem:[%s209 + $0xd8] sm:$0xf]
        %v266 = vld [vmem:[%s209 + $0xdc] sm:$0xf]
        %v267 = vld [vmem:[%s209 + $0xe0] sm:$0x1]
        %v268 = vld [vmem:[%s209 + $0xe4] sm:$0xf]
        %v269 = vld [vmem:[%s209 + $0xe8] sm:$0xf]
        %v270 = vld [vmem:[%s209 + $0xec] sm:$0x1]
        %v307 = vunpack.c.l.b16 %v211
        %v308 = vunpack.c.l.b16 %v212
        %v309 = vunpack.c.l.b16 %v214
        %v310 = vunpack.c.l.b16 %v215
        %v311 = vunpack.c.l.b16 %v217
        %v312 = vunpack.c.l.b16 %v218
        %v313 = vunpack.c.l.b16 %v220
        %v314 = vunpack.c.l.b16 %v221
        %v315 = vunpack.c.l.b16 %v223
        %v316 = vunpack.c.l.b16 %v224
        %v317 = vunpack.c.l.b16 %v226
        %v318 = vunpack.c.l.b16 %v227
        %v319 = vunpack.c.l.b16 %v229
        %v320 = vunpack.c.l.b16 %v230
        %v321 = vunpack.c.l.b16 %v232
        %v322 = vunpack.c.l.b16 %v233
        %v323 = vunpack.c.l.b16 %v235
        %v324 = vunpack.c.l.b16 %v236
        %v325 = vunpack.c.l.b16 %v238
        %v326 = vunpack.c.l.b16 %v239
        %v327 = vunpack.c.l.b16 %v241
        %v328 = vunpack.c.l.b16 %v242
        %v329 = vunpack.c.l.b16 %v244
        %v330 = vunpack.c.l.b16 %v245
        %v331 = vunpack.c.l.b16 %v247
        %v332 = vunpack.c.l.b16 %v248
        %v333 = vunpack.c.l.b16 %v250
        %v334 = vunpack.c.l.b16 %v251
        %v335 = vunpack.c.l.b16 %v253
        %v336 = vunpack.c.l.b16 %v254
        %v337 = vunpack.c.l.b16 %v256
        %v338 = vunpack.c.l.b16 %v257
        %v339 = vunpack.c.l.b16 %v259
        %v340 = vunpack.c.l.b16 %v260
        %v341 = vunpack.c.l.b16 %v262
        %v342 = vunpack.c.l.b16 %v263
        %v343 = vpack.c.b16 %v308, %v307
        %v344 = vpack.c.b16 %v310, %v309
        %v345 = vpack.c.b16 %v312, %v311
        %v346 = vpack.c.b16 %v314, %v313
        %v347 = vpack.c.b16 %v316, %v315
        %v348 = vpack.c.b16 %v318, %v317
        %v349 = vpack.c.b16 %v320, %v319
        %v350 = vpack.c.b16 %v322, %v321
        %v351 = vpack.c.b16 %v324, %v323
        %v352 = vpack.c.b16 %v326, %v325
        %v353 = vpack.c.b16 %v328, %v327
        %v354 = vpack.c.b16 %v330, %v329
        %v355 = vpack.c.b16 %v332, %v331
        %v356 = vpack.c.b16 %v334, %v333
        %v357 = vpack.c.b16 %v336, %v335
        %v358 = vpack.c.b16 %v338, %v337
        %v359 = vpack.c.b16 %v340, %v339
        %v360 = vpack.c.b16 %v342, %v341
        %v397 = vunpack.c.l.b16 %v213
        %v398 = vunpack.c.l.b16 %v216
        %v399 = vunpack.c.l.b16 %v219
        %v400 = vunpack.c.l.b16 %v222
        %v401 = vunpack.c.l.b16 %v225
        %v402 = vunpack.c.l.b16 %v228
        %v403 = vunpack.c.l.b16 %v231
        %v404 = vunpack.c.l.b16 %v234
        %v405 = vunpack.c.l.b16 %v237
        %v406 = vunpack.c.l.b16 %v240
        %v407 = vunpack.c.l.b16 %v243
        %v408 = vunpack.c.l.b16 %v246
        %v409 = vunpack.c.l.b16 %v249
        %v410 = vunpack.c.l.b16 %v252
        %v411 = vunpack.c.l.b16 %v255
        %v412 = vunpack.c.l.b16 %v258
        %v413 = vunpack.c.l.b16 %v261
        %v414 = vunpack.c.l.b16 %v264
        %v415 = vpack.c.b16 %v397, %v397
        %v416 = vpack.c.b16 %v398, %v398
        %v417 = vpack.c.b16 %v399, %v399
        %v418 = vpack.c.b16 %v400, %v400
        %v419 = vpack.c.b16 %v401, %v401
        %v420 = vpack.c.b16 %v402, %v402
        %v421 = vpack.c.b16 %v403, %v403
        %v422 = vpack.c.b16 %v404, %v404
        %v423 = vpack.c.b16 %v405, %v405
        %v424 = vpack.c.b16 %v406, %v406
        %v425 = vpack.c.b16 %v407, %v407
        %v426 = vpack.c.b16 %v408, %v408
        %v427 = vpack.c.b16 %v409, %v409
        %v428 = vpack.c.b16 %v410, %v410
        %v429 = vpack.c.b16 %v411, %v411
        %v430 = vpack.c.b16 %v412, %v412
        %v431 = vpack.c.b16 %v413, %v413
        %v432 = vpack.c.b16 %v414, %v414
        %vm433 = vsmask.f32 7424
        %v435 = vshrl.u32 %v343, 16
        %v437 = vshll.u32 %v343, 16
        %v439 = vrot.slane %v437, 1
        %v440 = vor.u32 %v435, %v439
        %v442 = vshll.u32 %v415, 16
        %v444 = vrot.slane %v442, 1
        %v445 = vsel %vm433, %v440, %v444
        %v447 = vshrl.u32 %v344, 16
        %v449 = vshll.u32 %v344, 16
        %v451 = vrot.slane %v449, 1
        %v452 = vor.u32 %v447, %v451
        %v454 = vshll.u32 %v416, 16
        %v456 = vrot.slane %v454, 1
        %v457 = vsel %vm433, %v452, %v456
        %v459 = vshrl.u32 %v345, 16
        %v461 = vshll.u32 %v345, 16
        %v463 = vrot.slane %v461, 1
        %v464 = vor.u32 %v459, %v463
        %v466 = vshll.u32 %v417, 16
        %v468 = vrot.slane %v466, 1
        %v469 = vsel %vm433, %v464, %v468
        %v471 = vshrl.u32 %v346, 16
        %v473 = vshll.u32 %v346, 16
        %v475 = vrot.slane %v473, 1
        %v476 = vor.u32 %v471, %v475
        %v478 = vshll.u32 %v418, 16
        %v480 = vrot.slane %v478, 1
        %v481 = vsel %vm433, %v476, %v480
        %v483 = vshrl.u32 %v347, 16
        %v485 = vshll.u32 %v347, 16
        %v487 = vrot.slane %v485, 1
        %v488 = vor.u32 %v483, %v487
        %v490 = vshll.u32 %v419, 16
        %v492 = vrot.slane %v490, 1
        %v493 = vsel %vm433, %v488, %v492
        %v495 = vshrl.u32 %v348, 16
        %v497 = vshll.u32 %v348, 16
        %v499 = vrot.slane %v497, 1
        %v500 = vor.u32 %v495, %v499
        %v502 = vshll.u32 %v420, 16
        %v504 = vrot.slane %v502, 1
        %v505 = vsel %vm433, %v500, %v504
        %v507 = vshrl.u32 %v349, 16
        %v509 = vshll.u32 %v349, 16
        %v511 = vrot.slane %v509, 1
        %v512 = vor.u32 %v507, %v511
        %v514 = vshll.u32 %v421, 16
        %v516 = vrot.slane %v514, 1
        %v517 = vsel %vm433, %v512, %v516
        %v519 = vshrl.u32 %v350, 16
        %v521 = vshll.u32 %v350, 16
        %v523 = vrot.slane %v521, 1
        %v524 = vor.u32 %v519, %v523
        %v526 = vshll.u32 %v422, 16
        %v528 = vrot.slane %v526, 1
        %v529 = vsel %vm433, %v524, %v528
        %v531 = vshrl.u32 %v351, 16
        %v533 = vshll.u32 %v351, 16
        %v535 = vrot.slane %v533, 1
        %v536 = vor.u32 %v531, %v535
        %v538 = vshll.u32 %v423, 16
        %v540 = vrot.slane %v538, 1
        %v541 = vsel %vm433, %v536, %v540
        %v543 = vshrl.u32 %v352, 16
        %v545 = vshll.u32 %v352, 16
        %v547 = vrot.slane %v545, 1
        %v548 = vor.u32 %v543, %v547
        %v550 = vshll.u32 %v424, 16
        %v552 = vrot.slane %v550, 1
        %v553 = vsel %vm433, %v548, %v552
        %v555 = vshrl.u32 %v353, 16
        %v557 = vshll.u32 %v353, 16
        %v559 = vrot.slane %v557, 1
        %v560 = vor.u32 %v555, %v559
        %v562 = vshll.u32 %v425, 16
        %v564 = vrot.slane %v562, 1
        %v565 = vsel %vm433, %v560, %v564
        %v567 = vshrl.u32 %v354, 16
        %v569 = vshll.u32 %v354, 16
        %v571 = vrot.slane %v569, 1
        %v572 = vor.u32 %v567, %v571
        %v574 = vshll.u32 %v426, 16
        %v576 = vrot.slane %v574, 1
        %v577 = vsel %vm433, %v572, %v576
        %v579 = vshrl.u32 %v355, 16
        %v581 = vshll.u32 %v355, 16
        %v583 = vrot.slane %v581, 1
        %v584 = vor.u32 %v579, %v583
        %v586 = vshll.u32 %v427, 16
        %v588 = vrot.slane %v586, 1
        %v589 = vsel %vm433, %v584, %v588
        %v591 = vshrl.u32 %v356, 16
        %v593 = vshll.u32 %v356, 16
        %v595 = vrot.slane %v593, 1
        %v596 = vor.u32 %v591, %v595
        %v598 = vshll.u32 %v428, 16
        %v600 = vrot.slane %v598, 1
        %v601 = vsel %vm433, %v596, %v600
        %v603 = vshrl.u32 %v357, 16
        %v605 = vshll.u32 %v357, 16
        %v607 = vrot.slane %v605, 1
        %v608 = vor.u32 %v603, %v607
        %v610 = vshll.u32 %v429, 16
        %v612 = vrot.slane %v610, 1
        %v613 = vsel %vm433, %v608, %v612
        %v615 = vshrl.u32 %v358, 16
        %v617 = vshll.u32 %v358, 16
        %v619 = vrot.slane %v617, 1
        %v620 = vor.u32 %v615, %v619
        %v622 = vshll.u32 %v430, 16
        %v624 = vrot.slane %v622, 1
        %v625 = vsel %vm433, %v620, %v624
        %v627 = vshrl.u32 %v359, 16
        %v629 = vshll.u32 %v359, 16
        %v631 = vrot.slane %v629, 1
        %v632 = vor.u32 %v627, %v631
        %v634 = vshll.u32 %v431, 16
        %v636 = vrot.slane %v634, 1
        %v637 = vsel %vm433, %v632, %v636
        %v639 = vshrl.u32 %v360, 16
        %v641 = vshll.u32 %v360, 16
        %v643 = vrot.slane %v641, 1
        %v644 = vor.u32 %v639, %v643
        %v646 = vshll.u32 %v432, 16
        %v648 = vrot.slane %v646, 1
        %v649 = vsel %vm433, %v644, %v648
        %vm668 = vcmask 1046528
        %v669 = vrot.slane %v343, 1
        %v670 = vrot.slane %v415, 1
        %v671 = vsel %vm668, %v669, %v670
        %v672 = vrot.slane %v344, 1
        %v673 = vrot.slane %v416, 1
        %v674 = vsel %vm668, %v672, %v673
        %v675 = vrot.slane %v345, 1
        %v676 = vrot.slane %v417, 1
        %v677 = vsel %vm668, %v675, %v676
        %v678 = vrot.slane %v346, 1
        %v679 = vrot.slane %v418, 1
        %v680 = vsel %vm668, %v678, %v679
        %v681 = vrot.slane %v347, 1
        %v682 = vrot.slane %v419, 1
        %v683 = vsel %vm668, %v681, %v682
        %v684 = vrot.slane %v348, 1
        %v685 = vrot.slane %v420, 1
        %v686 = vsel %vm668, %v684, %v685
        %v687 = vrot.slane %v349, 1
        %v688 = vrot.slane %v421, 1
        %v689 = vsel %vm668, %v687, %v688
        %v690 = vrot.slane %v350, 1
        %v691 = vrot.slane %v422, 1
        %v692 = vsel %vm668, %v690, %v691
        %v693 = vrot.slane %v351, 1
        %v694 = vrot.slane %v423, 1
        %v695 = vsel %vm668, %v693, %v694
        %v696 = vrot.slane %v352, 1
        %v697 = vrot.slane %v424, 1
        %v698 = vsel %vm668, %v696, %v697
        %v699 = vrot.slane %v353, 1
        %v700 = vrot.slane %v425, 1
        %v701 = vsel %vm668, %v699, %v700
        %v702 = vrot.slane %v354, 1
        %v703 = vrot.slane %v426, 1
        %v704 = vsel %vm668, %v702, %v703
        %v705 = vrot.slane %v355, 1
        %v706 = vrot.slane %v427, 1
        %v707 = vsel %vm668, %v705, %v706
        %v708 = vrot.slane %v356, 1
        %v709 = vrot.slane %v428, 1
        %v710 = vsel %vm668, %v708, %v709
        %v711 = vrot.slane %v357, 1
        %v712 = vrot.slane %v429, 1
        %v713 = vsel %vm668, %v711, %v712
        %v714 = vrot.slane %v358, 1
        %v715 = vrot.slane %v430, 1
        %v716 = vsel %vm668, %v714, %v715
        %v717 = vrot.slane %v359, 1
        %v718 = vrot.slane %v431, 1
        %v719 = vsel %vm668, %v717, %v718
        %v720 = vrot.slane %v360, 1
        %v721 = vrot.slane %v432, 1
        %v722 = vsel %vm668, %v720, %v721
        %v743 = vunpack.c.l.b16 %v265
        %v744 = vunpack.c.l.b16 %v266
        %v745 = vpack.c.b16 %v744, %v743
        %v748 = vunpack.c.l.b16 %v267
        %v749 = vpack.c.b16 %v748, %v748
        %v751 = vshrl.u32 %v745, 16
        %v753 = vshll.u32 %v745, 16
        %v755 = vrot.slane %v753, 1
        %v756 = vor.u32 %v751, %v755
        %v758 = vshll.u32 %v749, 16
        %v760 = vrot.slane %v758, 1
        %v761 = vsel %vm433, %v756, %v760
        %v763 = vrot.slane %v745, 1
        %v764 = vrot.slane %v749, 1
        %v765 = vsel %vm668, %v763, %v764
        %v769 = vunpack.c.l.b16 %v268
        %v770 = vunpack.c.l.b16 %v269
        %v771 = vpack.c.b16 %v770, %v769
        %v774 = vunpack.c.l.b16 %v270
        %v775 = vpack.c.b16 %v774, %v774
        %v777 = vshrl.u32 %v771, 16
        %v779 = vshll.u32 %v771, 16
        %v781 = vrot.slane %v779, 1
        %v782 = vor.u32 %v777, %v781
        %v784 = vshll.u32 %v775, 16
        %v786 = vrot.slane %v784, 1
        %v787 = vsel %vm433, %v782, %v786
        %v789 = vrot.slane %v771, 1
        %v790 = vrot.slane %v775, 1
        %v791 = vsel %vm668, %v789, %v790
        %v793 = vld [vmem:[%s1] sm:$0xf]
        %v794 = vld [vmem:[%s1 + $0x4] sm:$0xf]
        %v795 = vld [vmem:[%s1 + $0x8] sm:$0xf]
        %v796 = vld [vmem:[%s1 + $0xc] sm:$0xf]
        %v797 = vld [vmem:[%s1 + $0x10] sm:$0xf]
        %v798 = vld [vmem:[%s1 + $0x14] sm:$0xf]
        %v799 = vld [vmem:[%s1 + $0x18] sm:$0xf]
        %v800 = vld [vmem:[%s1 + $0x1c] sm:$0xf]
        %v801 = vld [vmem:[%s1 + $0x20] sm:$0xf]
        %v802 = vld [vmem:[%s1 + $0x24] sm:$0xf]
        %v803 = vld [vmem:[%s1 + $0x28] sm:$0xf]
        %v804 = vld [vmem:[%s1 + $0x2c] sm:$0xf]
        %v805 = vld [vmem:[%s1 + $0x30] sm:$0xf]
        %v806 = vld [vmem:[%s1 + $0x34] sm:$0xf]
        %v807 = vld [vmem:[%s1 + $0x38] sm:$0xf]
        %v808 = vld [vmem:[%s1 + $0x3c] sm:$0xf]
        %v809 = vld [vmem:[%s1 + $0x40] sm:$0xf]
        %v810 = vld [vmem:[%s1 + $0x44] sm:$0xf]
        %v811 = vld [vmem:[%s1 + $0x48] sm:$0xf]
        %v812 = vld [vmem:[%s1 + $0x4c] sm:$0xf]
        %v813 = vld [vmem:[%s1 + $0x50] sm:$0xf]
        %v814 = vld [vmem:[%s1 + $0x54] sm:$0xf]
        %v815 = vld [vmem:[%s1 + $0x58] sm:$0xf]
        %v816 = vld [vmem:[%s1 + $0x5c] sm:$0xf]
        %v817 = vld [vmem:[%s1 + $0x60] sm:$0xf]
        %v818 = vld [vmem:[%s1 + $0x64] sm:$0xf]
        %v819 = vld [vmem:[%s1 + $0x68] sm:$0xf]
        %v820 = vld [vmem:[%s1 + $0x6c] sm:$0xf]
        %v821 = vld [vmem:[%s1 + $0x70] sm:$0xf]
        %v822 = vld [vmem:[%s1 + $0x74] sm:$0xf]
        %v823 = vld [vmem:[%s1 + $0x78] sm:$0xf]
        %v824 = vld [vmem:[%s1 + $0x7c] sm:$0xf]
        %v825 = vld [vmem:[%s1 + $0x80] sm:$0xf]
        %v826 = vld [vmem:[%s1 + $0x84] sm:$0xf]
        %v827 = vld [vmem:[%s1 + $0x88] sm:$0xf]
        %v828 = vld [vmem:[%s1 + $0x8c] sm:$0xf]
        %v829 = vld [vmem:[%s1 + $0x90] sm:$0xf]
        %v830 = vld [vmem:[%s1 + $0x94] sm:$0xf]
        %v831 = vld [vmem:[%s1 + $0x98] sm:$0xf]
        %v832 = vld [vmem:[%s1 + $0x9c] sm:$0xf]
        %v833 = vld [vmem:[%s1 + $0xa0] sm:$0xf]
        %v834 = vld [vmem:[%s1 + $0xa4] sm:$0xf]
        %v835 = vld [vmem:[%s1 + $0xa8] sm:$0xf]
        %v836 = vld [vmem:[%s1 + $0xac] sm:$0xf]
        %v837 = vld [vmem:[%s1 + $0xb0] sm:$0xf]
        %v838 = vld [vmem:[%s1 + $0xb4] sm:$0xf]
        %v839 = vld [vmem:[%s1 + $0xb8] sm:$0xf]
        %v840 = vld [vmem:[%s1 + $0xbc] sm:$0xf]
        %v841 = vld [vmem:[%s1 + $0xc0] sm:$0xf]
        %v842 = vld [vmem:[%s1 + $0xc4] sm:$0xf]
        %v843 = vld [vmem:[%s1 + $0xc8] sm:$0xf]
        %v844 = vld [vmem:[%s1 + $0xcc] sm:$0xf]
        %v845 = vld [vmem:[%s1 + $0xd0] sm:$0xf]
        %v846 = vld [vmem:[%s1 + $0xd4] sm:$0xf]
        %v847 = vld [vmem:[%s1 + $0xd8] sm:$0xf]
        %v848 = vld [vmem:[%s1 + $0xdc] sm:$0xf]
        %v849 = vld [vmem:[%s1 + $0xe0] sm:$0xf]
        %v850 = vld [vmem:[%s1 + $0xe4] sm:$0xf]
        %v851 = vld [vmem:[%s1 + $0xe8] sm:$0xf]
        %v852 = vld [vmem:[%s1 + $0xec] sm:$0xf]
        %v853 = vld [vmem:[%s1 + $0xf0] sm:$0xf]
        %v854 = vld [vmem:[%s1 + $0xf4] sm:$0xf]
        %v855 = vld [vmem:[%s1 + $0xf8] sm:$0xf]
        %v856 = vld [vmem:[%s1 + $0xfc] sm:$0xf]
        %v857 = vld [vmem:[%s1 + $0x100] sm:$0xf]
        %v858 = vld [vmem:[%s1 + $0x104] sm:$0xf]
        %v859 = vld [vmem:[%s1 + $0x108] sm:$0xf]
        %v860 = vld [vmem:[%s1 + $0x10c] sm:$0xf]
        %v861 = vld [vmem:[%s1 + $0x110] sm:$0xf]
        %v862 = vld [vmem:[%s1 + $0x114] sm:$0xf]
        %v863 = vld [vmem:[%s1 + $0x118] sm:$0xf]
        %v864 = vld [vmem:[%s1 + $0x11c] sm:$0xf]
        %v865 = vld [vmem:[%s1 + $0x120] sm:$0xf]
        %v866 = vld [vmem:[%s1 + $0x124] sm:$0xf]
        %v867 = vld [vmem:[%s1 + $0x128] sm:$0xf]
        %v868 = vld [vmem:[%s1 + $0x12c] sm:$0xf]
        %v869 = vld [vmem:[%s1 + $0x130] sm:$0xf]
        %v870 = vld [vmem:[%s1 + $0x134] sm:$0xf]
        %v871 = vld [vmem:[%s1 + $0x138] sm:$0xf]
        %v872 = vld [vmem:[%s1 + $0x13c] sm:$0xf]
        %v873 = vld [vmem:[%s1 + $0x140] sm:$0xf]
        %v874 = vld [vmem:[%s1 + $0x144] sm:$0xf]
        %v875 = vld [vmem:[%s1 + $0x148] sm:$0xf]
        %v876 = vld [vmem:[%s1 + $0x14c] sm:$0xf]
        %v877 = vld [vmem:[%s1 + $0x150] sm:$0xf]
        %v878 = vld [vmem:[%s1 + $0x154] sm:$0xf]
        %v879 = vld [vmem:[%s1 + $0x158] sm:$0xf]
        %v880 = vld [vmem:[%s1 + $0x15c] sm:$0xf]
        %v881 = vld [vmem:[%s1 + $0x160] sm:$0xf]
        %v882 = vld [vmem:[%s1 + $0x164] sm:$0xf]
        %v883 = vld [vmem:[%s1 + $0x168] sm:$0xf]
        %v884 = vld [vmem:[%s1 + $0x16c] sm:$0xf]
        %v885 = vld [vmem:[%s1 + $0x170] sm:$0xf]
        %v886 = vld [vmem:[%s1 + $0x174] sm:$0xf]
        %v887 = vld [vmem:[%s1 + $0x178] sm:$0xf]
        %v888 = vld [vmem:[%s1 + $0x17c] sm:$0xf]
        %v889 = vld [vmem:[%s1 + $0x180] sm:$0xf]
        %v890 = vld [vmem:[%s1 + $0x184] sm:$0xf]
        %v891 = vld [vmem:[%s1 + $0x188] sm:$0xf]
        %v892 = vld [vmem:[%s1 + $0x18c] sm:$0xf]
        %v893 = vld [vmem:[%s1 + $0x190] sm:$0xf]
        %v894 = vld [vmem:[%s1 + $0x194] sm:$0xf]
        %v895 = vld [vmem:[%s1 + $0x198] sm:$0xf]
        %v896 = vld [vmem:[%s1 + $0x19c] sm:$0xf]
        %v897 = vld [vmem:[%s1 + $0x1a0] sm:$0xf]
        %v898 = vld [vmem:[%s1 + $0x1a4] sm:$0xf]
        %v899 = vld [vmem:[%s1 + $0x1a8] sm:$0xf]
        %v900 = vld [vmem:[%s1 + $0x1ac] sm:$0xf]
        %v901 = vld [vmem:[%s1 + $0x1b0] sm:$0xf]
        %v902 = vld [vmem:[%s1 + $0x1b4] sm:$0xf]
        %v903 = vld [vmem:[%s1 + $0x1b8] sm:$0xf]
        %v904 = vld [vmem:[%s1 + $0x1bc] sm:$0xf]
        %v905 = vld [vmem:[%s1 + $0x1c0] sm:$0xf]
        %v906 = vld [vmem:[%s1 + $0x1c4] sm:$0xf]
        %v907 = vld [vmem:[%s1 + $0x1c8] sm:$0xf]
        %v908 = vld [vmem:[%s1 + $0x1cc] sm:$0xf]
        %v909 = vld [vmem:[%s1 + $0x1d0] sm:$0xf]
        %v910 = vld [vmem:[%s1 + $0x1d4] sm:$0xf]
        %v911 = vld [vmem:[%s1 + $0x1d8] sm:$0xf]
        %v912 = vld [vmem:[%s1 + $0x1dc] sm:$0xf]
        %v913 = vld [vmem:[%s1 + $0x1e0] sm:$0xf]
        %v914 = vld [vmem:[%s1 + $0x1e4] sm:$0xf]
        %v915 = vld [vmem:[%s1 + $0x1e8] sm:$0xf]
        %v916 = vld [vmem:[%s1 + $0x1ec] sm:$0xf]
        %v917 = vld [vmem:[%s1 + $0x1f0] sm:$0xf]
        %v918 = vld [vmem:[%s1 + $0x1f4] sm:$0xf]
        %v919 = vld [vmem:[%s1 + $0x1f8] sm:$0xf]
        %v920 = vld [vmem:[%s1 + $0x1fc] sm:$0xf]
        %v921 = vld [vmem:[%s1 + $0x200] sm:$0xf]
        %v922 = vld [vmem:[%s1 + $0x204] sm:$0xf]
        %v923 = vld [vmem:[%s1 + $0x208] sm:$0xf]
        %v924 = vld [vmem:[%s1 + $0x20c] sm:$0xf]
        %v925 = vld [vmem:[%s1 + $0x210] sm:$0xf]
        %v926 = vld [vmem:[%s1 + $0x214] sm:$0xf]
        %v927 = vld [vmem:[%s1 + $0x218] sm:$0xf]
        %v928 = vld [vmem:[%s1 + $0x21c] sm:$0xf]
        %v929 = vld [vmem:[%s1 + $0x220] sm:$0xf]
        %v930 = vld [vmem:[%s1 + $0x224] sm:$0xf]
        %v931 = vld [vmem:[%s1 + $0x228] sm:$0xf]
        %v932 = vld [vmem:[%s1 + $0x22c] sm:$0xf]
        %v933 = vld [vmem:[%s1 + $0x230] sm:$0xf]
        %v934 = vld [vmem:[%s1 + $0x234] sm:$0xf]
        %v935 = vld [vmem:[%s1 + $0x238] sm:$0xf]
        %v936 = vld [vmem:[%s1 + $0x23c] sm:$0xf]
        %v1081 = vunpack.c.l.b16 %v793
        %v1082 = vunpack.c.l.b16 %v794
        %v1083 = vunpack.c.l.b16 %v795
        %v1084 = vunpack.c.l.b16 %v796
        %v1085 = vunpack.c.l.b16 %v797
        %v1086 = vunpack.c.l.b16 %v798
        %v1087 = vunpack.c.l.b16 %v799
        %v1088 = vunpack.c.l.b16 %v800
        %v1089 = vunpack.c.l.b16 %v801
        %v1090 = vunpack.c.l.b16 %v802
        %v1091 = vunpack.c.l.b16 %v803
        %v1092 = vunpack.c.l.b16 %v804
        %v1093 = vunpack.c.l.b16 %v805
        %v1094 = vunpack.c.l.b16 %v806
        %v1095 = vunpack.c.l.b16 %v807
        %v1096 = vunpack.c.l.b16 %v808
        %v1097 = vunpack.c.l.b16 %v809
        %v1098 = vunpack.c.l.b16 %v810
        %v1099 = vunpack.c.l.b16 %v811
        %v1100 = vunpack.c.l.b16 %v812
        %v1101 = vunpack.c.l.b16 %v813
        %v1102 = vunpack.c.l.b16 %v814
        %v1103 = vunpack.c.l.b16 %v815
        %v1104 = vunpack.c.l.b16 %v816
        %v1105 = vunpack.c.l.b16 %v817
        %v1106 = vunpack.c.l.b16 %v818
        %v1107 = vunpack.c.l.b16 %v819
        %v1108 = vunpack.c.l.b16 %v820
        %v1109 = vunpack.c.l.b16 %v821
        %v1110 = vunpack.c.l.b16 %v822
        %v1111 = vunpack.c.l.b16 %v823
        %v1112 = vunpack.c.l.b16 %v824
        %v1113 = vunpack.c.l.b16 %v825
        %v1114 = vunpack.c.l.b16 %v826
        %v1115 = vunpack.c.l.b16 %v827
        %v1116 = vunpack.c.l.b16 %v828
        %v1117 = vunpack.c.l.b16 %v829
        %v1118 = vunpack.c.l.b16 %v830
        %v1119 = vunpack.c.l.b16 %v831
        %v1120 = vunpack.c.l.b16 %v832
        %v1121 = vunpack.c.l.b16 %v833
        %v1122 = vunpack.c.l.b16 %v834
        %v1123 = vunpack.c.l.b16 %v835
        %v1124 = vunpack.c.l.b16 %v836
        %v1125 = vunpack.c.l.b16 %v837
        %v1126 = vunpack.c.l.b16 %v838
        %v1127 = vunpack.c.l.b16 %v839
        %v1128 = vunpack.c.l.b16 %v840
        %v1129 = vunpack.c.l.b16 %v841
        %v1130 = vunpack.c.l.b16 %v842
        %v1131 = vunpack.c.l.b16 %v843
        %v1132 = vunpack.c.l.b16 %v844
        %v1133 = vunpack.c.l.b16 %v845
        %v1134 = vunpack.c.l.b16 %v846
        %v1135 = vunpack.c.l.b16 %v847
        %v1136 = vunpack.c.l.b16 %v848
        %v1137 = vunpack.c.l.b16 %v849
        %v1138 = vunpack.c.l.b16 %v850
        %v1139 = vunpack.c.l.b16 %v851
        %v1140 = vunpack.c.l.b16 %v852
        %v1141 = vunpack.c.l.b16 %v853
        %v1142 = vunpack.c.l.b16 %v854
        %v1143 = vunpack.c.l.b16 %v855
        %v1144 = vunpack.c.l.b16 %v856
        %v1145 = vunpack.c.l.b16 %v857
        %v1146 = vunpack.c.l.b16 %v858
        %v1147 = vunpack.c.l.b16 %v859
        %v1148 = vunpack.c.l.b16 %v860
        %v1149 = vunpack.c.l.b16 %v861
        %v1150 = vunpack.c.l.b16 %v862
        %v1151 = vunpack.c.l.b16 %v863
        %v1152 = vunpack.c.l.b16 %v864
        %v1153 = vunpack.c.l.b16 %v865
        %v1154 = vunpack.c.l.b16 %v866
        %v1155 = vunpack.c.l.b16 %v867
        %v1156 = vunpack.c.l.b16 %v868
        %v1157 = vunpack.c.l.b16 %v869
        %v1158 = vunpack.c.l.b16 %v870
        %v1159 = vunpack.c.l.b16 %v871
        %v1160 = vunpack.c.l.b16 %v872
        %v1161 = vunpack.c.l.b16 %v873
        %v1162 = vunpack.c.l.b16 %v874
        %v1163 = vunpack.c.l.b16 %v875
        %v1164 = vunpack.c.l.b16 %v876
        %v1165 = vunpack.c.l.b16 %v877
        %v1166 = vunpack.c.l.b16 %v878
        %v1167 = vunpack.c.l.b16 %v879
        %v1168 = vunpack.c.l.b16 %v880
        %v1169 = vunpack.c.l.b16 %v881
        %v1170 = vunpack.c.l.b16 %v882
        %v1171 = vunpack.c.l.b16 %v883
        %v1172 = vunpack.c.l.b16 %v884
        %v1173 = vunpack.c.l.b16 %v885
        %v1174 = vunpack.c.l.b16 %v886
        %v1175 = vunpack.c.l.b16 %v887
        %v1176 = vunpack.c.l.b16 %v888
        %v1177 = vunpack.c.l.b16 %v889
        %v1178 = vunpack.c.l.b16 %v890
        %v1179 = vunpack.c.l.b16 %v891
        %v1180 = vunpack.c.l.b16 %v892
        %v1181 = vunpack.c.l.b16 %v893
        %v1182 = vunpack.c.l.b16 %v894
        %v1183 = vunpack.c.l.b16 %v895
        %v1184 = vunpack.c.l.b16 %v896
        %v1185 = vunpack.c.l.b16 %v897
        %v1186 = vunpack.c.l.b16 %v898
        %v1187 = vunpack.c.l.b16 %v899
        %v1188 = vunpack.c.l.b16 %v900
        %v1189 = vunpack.c.l.b16 %v901
        %v1190 = vunpack.c.l.b16 %v902
        %v1191 = vunpack.c.l.b16 %v903
        %v1192 = vunpack.c.l.b16 %v904
        %v1193 = vunpack.c.l.b16 %v905
        %v1194 = vunpack.c.l.b16 %v906
        %v1195 = vunpack.c.l.b16 %v907
        %v1196 = vunpack.c.l.b16 %v908
        %v1197 = vunpack.c.l.b16 %v909
        %v1198 = vunpack.c.l.b16 %v910
        %v1199 = vunpack.c.l.b16 %v911
        %v1200 = vunpack.c.l.b16 %v912
        %v1201 = vunpack.c.l.b16 %v913
        %v1202 = vunpack.c.l.b16 %v914
        %v1203 = vunpack.c.l.b16 %v915
        %v1204 = vunpack.c.l.b16 %v916
        %v1205 = vunpack.c.l.b16 %v917
        %v1206 = vunpack.c.l.b16 %v918
        %v1207 = vunpack.c.l.b16 %v919
        %v1208 = vunpack.c.l.b16 %v920
        %v1209 = vunpack.c.l.b16 %v921
        %v1210 = vunpack.c.l.b16 %v922
        %v1211 = vunpack.c.l.b16 %v923
        %v1212 = vunpack.c.l.b16 %v924
        %v1213 = vunpack.c.l.b16 %v925
        %v1214 = vunpack.c.l.b16 %v926
        %v1215 = vunpack.c.l.b16 %v927
        %v1216 = vunpack.c.l.b16 %v928
        %v1217 = vunpack.c.l.b16 %v929
        %v1218 = vunpack.c.l.b16 %v930
        %v1219 = vunpack.c.l.b16 %v931
        %v1220 = vunpack.c.l.b16 %v932
        %v1221 = vunpack.c.l.b16 %v933
        %v1222 = vunpack.c.l.b16 %v934
        %v1223 = vunpack.c.l.b16 %v935
        %v1224 = vunpack.c.l.b16 %v936
        %v1225 = vpack.c.b16 %v1082, %v1081
        %v1226 = vpack.c.b16 %v1084, %v1083
        %v1227 = vpack.c.b16 %v1086, %v1085
        %v1228 = vpack.c.b16 %v1088, %v1087
        %v1229 = vpack.c.b16 %v1090, %v1089
        %v1230 = vpack.c.b16 %v1092, %v1091
        %v1231 = vpack.c.b16 %v1094, %v1093
        %v1232 = vpack.c.b16 %v1096, %v1095
        %v1233 = vpack.c.b16 %v1098, %v1097
        %v1234 = vpack.c.b16 %v1100, %v1099
        %v1235 = vpack.c.b16 %v1102, %v1101
        %v1236 = vpack.c.b16 %v1104, %v1103
        %v1237 = vpack.c.b16 %v1106, %v1105
        %v1238 = vpack.c.b16 %v1108, %v1107
        %v1239 = vpack.c.b16 %v1110, %v1109
        %v1240 = vpack.c.b16 %v1112, %v1111
        %v1241 = vpack.c.b16 %v1114, %v1113
        %v1242 = vpack.c.b16 %v1116, %v1115
        %v1243 = vpack.c.b16 %v1118, %v1117
        %v1244 = vpack.c.b16 %v1120, %v1119
        %v1245 = vpack.c.b16 %v1122, %v1121
        %v1246 = vpack.c.b16 %v1124, %v1123
        %v1247 = vpack.c.b16 %v1126, %v1125
        %v1248 = vpack.c.b16 %v1128, %v1127
        %v1249 = vpack.c.b16 %v1130, %v1129
        %v1250 = vpack.c.b16 %v1132, %v1131
        %v1251 = vpack.c.b16 %v1134, %v1133
        %v1252 = vpack.c.b16 %v1136, %v1135
        %v1253 = vpack.c.b16 %v1138, %v1137
        %v1254 = vpack.c.b16 %v1140, %v1139
        %v1255 = vpack.c.b16 %v1142, %v1141
        %v1256 = vpack.c.b16 %v1144, %v1143
        %v1257 = vpack.c.b16 %v1146, %v1145
        %v1258 = vpack.c.b16 %v1148, %v1147
        %v1259 = vpack.c.b16 %v1150, %v1149
        %v1260 = vpack.c.b16 %v1152, %v1151
        %v1261 = vpack.c.b16 %v1154, %v1153
        %v1262 = vpack.c.b16 %v1156, %v1155
        %v1263 = vpack.c.b16 %v1158, %v1157
        %v1264 = vpack.c.b16 %v1160, %v1159
        %v1265 = vpack.c.b16 %v1162, %v1161
        %v1266 = vpack.c.b16 %v1164, %v1163
        %v1267 = vpack.c.b16 %v1166, %v1165
        %v1268 = vpack.c.b16 %v1168, %v1167
        %v1269 = vpack.c.b16 %v1170, %v1169
        %v1270 = vpack.c.b16 %v1172, %v1171
        %v1271 = vpack.c.b16 %v1174, %v1173
        %v1272 = vpack.c.b16 %v1176, %v1175
        %v1273 = vpack.c.b16 %v1178, %v1177
        %v1274 = vpack.c.b16 %v1180, %v1179
        %v1275 = vpack.c.b16 %v1182, %v1181
        %v1276 = vpack.c.b16 %v1184, %v1183
        %v1277 = vpack.c.b16 %v1186, %v1185
        %v1278 = vpack.c.b16 %v1188, %v1187
        %v1279 = vpack.c.b16 %v1190, %v1189
        %v1280 = vpack.c.b16 %v1192, %v1191
        %v1281 = vpack.c.b16 %v1194, %v1193
        %v1282 = vpack.c.b16 %v1196, %v1195
        %v1283 = vpack.c.b16 %v1198, %v1197
        %v1284 = vpack.c.b16 %v1200, %v1199
        %v1285 = vpack.c.b16 %v1202, %v1201
        %v1286 = vpack.c.b16 %v1204, %v1203
        %v1287 = vpack.c.b16 %v1206, %v1205
        %v1288 = vpack.c.b16 %v1208, %v1207
        %v1289 = vpack.c.b16 %v1210, %v1209
        %v1290 = vpack.c.b16 %v1212, %v1211
        %v1291 = vpack.c.b16 %v1214, %v1213
        %v1292 = vpack.c.b16 %v1216, %v1215
        %v1293 = vpack.c.b16 %v1218, %v1217
        %v1294 = vpack.c.b16 %v1220, %v1219
        %v1295 = vpack.c.b16 %v1222, %v1221
        %v1296 = vpack.c.b16 %v1224, %v1223
        %1369 = vmatprep.subr.bf16.mxu0 0
        %1370 = vmatpush1.bf16.msra.mxu0 %v1225
        %1371 = vmatprep.subr.bf16.mxu0 0
        %1372 = vmatpush1.bf16.msra.mxu0 %v1226
        %1373 = vmatprep.subr.bf16.mxu0 0
        %1374 = vmatpush1.bf16.msra.mxu0 %v1227
        %1375 = vmatprep.subr.bf16.mxu0 0
        %1376 = vmatpush1.bf16.msra.mxu0 %v1228
        %1377 = vmatprep.subr.bf16.mxu0 0
        %1378 = vmatpush1.bf16.msra.mxu0 %v1229
        %1379 = vmatprep.subr.bf16.mxu0 0
        %1380 = vmatpush1.bf16.msra.mxu0 %v1230
        %1381 = vmatprep.subr.bf16.mxu0 0
        %1382 = vmatpush1.bf16.msra.mxu0 %v1231
        %1383 = vmatprep.subr.bf16.mxu0 0
        %1384 = vmatpush1.bf16.msra.mxu0 %v1232
        %1385 = vmatprep.subr.bf16.mxu0 0
        %1386 = vmatpush1.bf16.msra.mxu0 %v1233
        %1387 = vmatprep.subr.bf16.mxu0 0
        %1388 = vmatpush1.bf16.msra.mxu0 %v1234
        %1389 = vmatprep.subr.bf16.mxu0 0
        %1390 = vmatpush1.bf16.msra.mxu0 %v1235
        %1391 = vmatprep.subr.bf16.mxu0 0
        %1392 = vmatpush1.bf16.msra.mxu0 %v1236
        %1393 = vmatprep.subr.bf16.mxu0 0
        %1394 = vmatpush1.bf16.msra.mxu0 %v1237
        %1395 = vmatprep.subr.bf16.mxu0 0
        %1396 = vmatpush1.bf16.msra.mxu0 %v1238
        %1397 = vmatprep.subr.bf16.mxu0 0
        %1398 = vmatpush1.bf16.msra.mxu0 %v1239
        %1399 = vmatprep.subr.bf16.mxu0 0
        %1400 = vmatpush1.bf16.msra.mxu0 %v1240
        %1401 = vmatprep.mubr.bf16.mxu0 %v445
        %1402 = vmatmul.mubr.bf16.gmra.mrb[0].mxu0 %v343
        %v1403 = vpop.f32.mrb[0].mxu0
        %v1404 = vadd.f32 0.0, %v1403
        %v1405 = vpop.f32.mrb[0].mxu0
        %v1406 = vpop.f32.mrb[0].mxu0
        %v1407 = vadd.f32 0.0, %v1406
        %v1408 = vpop.f32.mrb[0].mxu0
        %1409 = vmatprep.mubr.bf16.mxu0 %v457
        %1410 = vmatmul.mubr.bf16.gmra.mrb[0].mxu0 %v344
        %v1411 = vpop.f32.mrb[0].mxu0
        %v1412 = vadd.f32 0.0, %v1411
        %v1413 = vpop.f32.mrb[0].mxu0
        %v1414 = vpop.f32.mrb[0].mxu0
        %v1415 = vadd.f32 0.0, %v1414
        %v1416 = vpop.f32.mrb[0].mxu0
        %1417 = vmatprep.mubr.bf16.mxu0 %v469
        %1418 = vmatmul.mubr.bf16.gmra.mrb[0].mxu0 %v345
        %v1419 = vpop.f32.mrb[0].mxu0
        %v1420 = vadd.f32 0.0, %v1419
        %v1421 = vpop.f32.mrb[0].mxu0
        %v1422 = vpop.f32.mrb[0].mxu0
        %v1423 = vadd.f32 0.0, %v1422
        %v1424 = vpop.f32.mrb[0].mxu0
        %1425 = vmatprep.mubr.bf16.mxu0 %v481
        %1426 = vmatmul.mubr.bf16.gmra.mrb[0].mxu0 %v346
        %v1427 = vpop.f32.mrb[0].mxu0
        %v1428 = vadd.f32 0.0, %v1427
        %v1429 = vpop.f32.mrb[0].mxu0
        %v1430 = vpop.f32.mrb[0].mxu0
        %v1431 = vadd.f32 0.0, %v1430
        %v1432 = vpop.f32.mrb[0].mxu0
        %1433 = vmatprep.mubr.bf16.mxu0 %v493
        %1434 = vmatmul.mubr.bf16.gmra.mrb[0].mxu0 %v347
        %v1435 = vpop.f32.mrb[0].mxu0
        %v1436 = vadd.f32 0.0, %v1435
        %v1437 = vpop.f32.mrb[0].mxu0
        %v1438 = vpop.f32.mrb[0].mxu0
        %v1439 = vadd.f32 0.0, %v1438
        %v1440 = vpop.f32.mrb[0].mxu0
        %1441 = vmatprep.mubr.bf16.mxu0 %v505
        %1442 = vmatmul.mubr.bf16.gmra.mrb[0].mxu0 %v348
        %v1443 = vpop.f32.mrb[0].mxu0
        %v1444 = vadd.f32 0.0, %v1443
        %v1445 = vpop.f32.mrb[0].mxu0
        %v1446 = vpop.f32.mrb[0].mxu0
        %v1447 = vadd.f32 0.0, %v1446
        %v1448 = vpop.f32.mrb[0].mxu0
        %1449 = vmatprep.mubr.bf16.mxu0 %v517
        %1450 = vmatmul.mubr.bf16.gmra.mrb[0].mxu0 %v349
        %v1451 = vpop.f32.mrb[0].mxu0
        %v1452 = vadd.f32 0.0, %v1451
        %v1453 = vpop.f32.mrb[0].mxu0
        %v1454 = vpop.f32.mrb[0].mxu0
        %v1455 = vadd.f32 0.0, %v1454
        %v1456 = vpop.f32.mrb[0].mxu0
        %1457 = vmatprep.mubr.bf16.mxu0 %v529
        %1458 = vmatmul.mubr.bf16.gmra.mrb[0].mxu0 %v350
        %v1459 = vpop.f32.mrb[0].mxu0
        %v1460 = vadd.f32 0.0, %v1459
        %v1461 = vpop.f32.mrb[0].mxu0
        %v1462 = vpop.f32.mrb[0].mxu0
        %v1463 = vadd.f32 0.0, %v1462
        %v1464 = vpop.f32.mrb[0].mxu0
        %1465 = vmatprep.mubr.bf16.mxu0 %v541
        %1466 = vmatmul.mubr.bf16.gmra.mrb[0].mxu0 %v351
        %v1467 = vpop.f32.mrb[0].mxu0
        %v1468 = vadd.f32 0.0, %v1467
        %v1469 = vpop.f32.mrb[0].mxu0
        %v1470 = vpop.f32.mrb[0].mxu0
        %v1471 = vadd.f32 0.0, %v1470
        %v1472 = vpop.f32.mrb[0].mxu0
        %1473 = vmatprep.mubr.bf16.mxu0 %v553
        %1474 = vmatmul.mubr.bf16.gmra.mrb[0].mxu0 %v352
        %v1475 = vpop.f32.mrb[0].mxu0
        %v1476 = vadd.f32 0.0, %v1475
        %v1477 = vpop.f32.mrb[0].mxu0
        %v1478 = vpop.f32.mrb[0].mxu0
        %v1479 = vadd.f32 0.0, %v1478
        %v1480 = vpop.f32.mrb[0].mxu0
        %1481 = vmatprep.mubr.bf16.mxu0 %v565
        %1482 = vmatmul.mubr.bf16.gmra.mrb[0].mxu0 %v353
        %v1483 = vpop.f32.mrb[0].mxu0
        %v1484 = vadd.f32 0.0, %v1483
        %v1485 = vpop.f32.mrb[0].mxu0
        %v1486 = vpop.f32.mrb[0].mxu0
        %v1487 = vadd.f32 0.0, %v1486
        %v1488 = vpop.f32.mrb[0].mxu0
        %1489 = vmatprep.mubr.bf16.mxu0 %v577
        %1490 = vmatmul.mubr.bf16.gmra.mrb[0].mxu0 %v354
        %v1491 = vpop.f32.mrb[0].mxu0
        %v1492 = vadd.f32 0.0, %v1491
        %v1493 = vpop.f32.mrb[0].mxu0
        %v1494 = vpop.f32.mrb[0].mxu0
        %v1495 = vadd.f32 0.0, %v1494
        %v1496 = vpop.f32.mrb[0].mxu0
        %1497 = vmatprep.mubr.bf16.mxu0 %v589
        %1498 = vmatmul.mubr.bf16.gmra.mrb[0].mxu0 %v355
        %v1499 = vpop.f32.mrb[0].mxu0
        %v1500 = vadd.f32 0.0, %v1499
        %v1501 = vpop.f32.mrb[0].mxu0
        %v1502 = vpop.f32.mrb[0].mxu0
        %v1503 = vadd.f32 0.0, %v1502
        %v1504 = vpop.f32.mrb[0].mxu0
        %1505 = vmatprep.mubr.bf16.mxu0 %v601
        %1506 = vmatmul.mubr.bf16.gmra.mrb[0].mxu0 %v356
        %v1507 = vpop.f32.mrb[0].mxu0
        %v1508 = vadd.f32 0.0, %v1507
        %v1509 = vpop.f32.mrb[0].mxu0
        %v1510 = vpop.f32.mrb[0].mxu0
        %v1511 = vadd.f32 0.0, %v1510
        %v1512 = vpop.f32.mrb[0].mxu0
        %1513 = vmatprep.mubr.bf16.mxu0 %v613
        %1514 = vmatmul.mubr.bf16.gmra.mrb[0].mxu0 %v357
        %v1515 = vpop.f32.mrb[0].mxu0
        %v1516 = vadd.f32 0.0, %v1515
        %v1517 = vpop.f32.mrb[0].mxu0
        %v1518 = vpop.f32.mrb[0].mxu0
        %v1519 = vadd.f32 0.0, %v1518
        %v1520 = vpop.f32.mrb[0].mxu0
        %1521 = vmatprep.mubr.bf16.mxu0 %v625
        %1522 = vmatmul.mubr.bf16.gmra.mrb[0].mxu0 %v358
        %v1523 = vpop.f32.mrb[0].mxu0
        %v1524 = vadd.f32 0.0, %v1523
        %v1525 = vpop.f32.mrb[0].mxu0
        %v1526 = vpop.f32.mrb[0].mxu0
        %v1527 = vadd.f32 0.0, %v1526
        %v1528 = vpop.f32.mrb[0].mxu0
        %1529 = vmatprep.mubr.bf16.mxu0 %v637
        %1530 = vmatmul.mubr.bf16.gmra.mrb[0].mxu0 %v359
        %v1531 = vpop.f32.mrb[0].mxu0
        %v1532 = vadd.f32 0.0, %v1531
        %v1533 = vpop.f32.mrb[0].mxu0
        %v1534 = vpop.f32.mrb[0].mxu0
        %v1535 = vadd.f32 0.0, %v1534
        %v1536 = vpop.f32.mrb[0].mxu0
        %1537 = vmatprep.mubr.bf16.mxu0 %v649
        %1538 = vmatmul.mubr.bf16.gmra.mrb[0].mxu0 %v360
        %v1539 = vpop.f32.mrb[0].mxu0
        %v1540 = vadd.f32 0.0, %v1539
        %v1541 = vpop.f32.mrb[0].mxu0
        %v1542 = vpop.f32.mrb[0].mxu0
        %v1543 = vadd.f32 0.0, %v1542
        %v1544 = vpop.f32.mrb[0].mxu0
        %1545 = vdwg.mxu0
        %1546 = vmatprep.subr.bf16.mxu0 0
        %1547 = vmatpush1.bf16.msra.mxu0 %v1241
        %1548 = vmatprep.subr.bf16.mxu0 0
        %1549 = vmatpush1.bf16.msra.mxu0 %v1242
        %1550 = vmatprep.subr.bf16.mxu0 0
        %1551 = vmatpush1.bf16.msra.mxu0 %v1243
        %1552 = vmatprep.subr.bf16.mxu0 0
        %1553 = vmatpush1.bf16.msra.mxu0 %v1244
        %1554 = vmatprep.subr.bf16.mxu0 0
        %1555 = vmatpush1.bf16.msra.mxu0 %v1245
        %1556 = vmatprep.subr.bf16.mxu0 0
        %1557 = vmatpush1.bf16.msra.mxu0 %v1246
        %1558 = vmatprep.subr.bf16.mxu0 0
        %1559 = vmatpush1.bf16.msra.mxu0 %v1247
        %1560 = vmatprep.subr.bf16.mxu0 0
        %1561 = vmatpush1.bf16.msra.mxu0 %v1248
        %1562 = vmatprep.subr.bf16.mxu0 0
        %1563 = vmatpush1.bf16.msra.mxu0 %v1249
        %1564 = vmatprep.subr.bf16.mxu0 0
        %1565 = vmatpush1.bf16.msra.mxu0 %v1250
        %1566 = vmatprep.subr.bf16.mxu0 0
        %1567 = vmatpush1.bf16.msra.mxu0 %v1251
        %1568 = vmatprep.subr.bf16.mxu0 0
        %1569 = vmatpush1.bf16.msra.mxu0 %v1252
        %1570 = vmatprep.subr.bf16.mxu0 0
        %1571 = vmatpush1.bf16.msra.mxu0 %v1253
        %1572 = vmatprep.subr.bf16.mxu0 0
        %1573 = vmatpush1.bf16.msra.mxu0 %v1254
        %1574 = vmatprep.subr.bf16.mxu0 0
        %1575 = vmatpush1.bf16.msra.mxu0 %v1255
        %1576 = vmatprep.subr.bf16.mxu0 0
        %1577 = vmatpush1.bf16.msra.mxu0 %v1256
        %1578 = vmatprep.mubr.bf16.mxu0 %v344
        %1579 = vmatmul.mubr.bf16.gmra.mrb[0].mxu0 %v671
        %v1580 = vpop.f32.mrb[0].mxu0
        %v1581 = vadd.f32 %v1404, %v1580
        %v1582 = vpop.f32.mrb[0].mxu0
        %v1583 = vpop.f32.mrb[0].mxu0
        %v1584 = vadd.f32 %v1407, %v1583
        %v1585 = vpop.f32.mrb[0].mxu0
        %1586 = vmatprep.mubr.bf16.mxu0 %v345
        %1587 = vmatmul.mubr.bf16.gmra.mrb[0].mxu0 %v674
        %v1588 = vpop.f32.mrb[0].mxu0
        %v1589 = vadd.f32 %v1412, %v1588
        %v1590 = vpop.f32.mrb[0].mxu0
        %v1591 = vpop.f32.mrb[0].mxu0
        %v1592 = vadd.f32 %v1415, %v1591
        %v1593 = vpop.f32.mrb[0].mxu0
        %1594 = vmatprep.mubr.bf16.mxu0 %v346
        %1595 = vmatmul.mubr.bf16.gmra.mrb[0].mxu0 %v677
        %v1596 = vpop.f32.mrb[0].mxu0
        %v1597 = vadd.f32 %v1420, %v1596
        %v1598 = vpop.f32.mrb[0].mxu0
        %v1599 = vpop.f32.mrb[0].mxu0
        %v1600 = vadd.f32 %v1423, %v1599
        %v1601 = vpop.f32.mrb[0].mxu0
        %1602 = vmatprep.mubr.bf16.mxu0 %v347
        %1603 = vmatmul.mubr.bf16.gmra.mrb[0].mxu0 %v680
        %v1604 = vpop.f32.mrb[0].mxu0
        %v1605 = vadd.f32 %v1428, %v1604
        %v1606 = vpop.f32.mrb[0].mxu0
        %v1607 = vpop.f32.mrb[0].mxu0
        %v1608 = vadd.f32 %v1431, %v1607
        %v1609 = vpop.f32.mrb[0].mxu0
        %1610 = vmatprep.mubr.bf16.mxu0 %v348
        %1611 = vmatmul.mubr.bf16.gmra.mrb[0].mxu0 %v683
        %v1612 = vpop.f32.mrb[0].mxu0
        %v1613 = vadd.f32 %v1436, %v1612
        %v1614 = vpop.f32.mrb[0].mxu0
        %v1615 = vpop.f32.mrb[0].mxu0
        %v1616 = vadd.f32 %v1439, %v1615
        %v1617 = vpop.f32.mrb[0].mxu0
        %1618 = vmatprep.mubr.bf16.mxu0 %v349
        %1619 = vmatmul.mubr.bf16.gmra.mrb[0].mxu0 %v686
        %v1620 = vpop.f32.mrb[0].mxu0
        %v1621 = vadd.f32 %v1444, %v1620
        %v1622 = vpop.f32.mrb[0].mxu0
        %v1623 = vpop.f32.mrb[0].mxu0
        %v1624 = vadd.f32 %v1447, %v1623
        %v1625 = vpop.f32.mrb[0].mxu0
        %1626 = vmatprep.mubr.bf16.mxu0 %v350
        %1627 = vmatmul.mubr.bf16.gmra.mrb[0].mxu0 %v689
        %v1628 = vpop.f32.mrb[0].mxu0
        %v1629 = vadd.f32 %v1452, %v1628
        %v1630 = vpop.f32.mrb[0].mxu0
        %v1631 = vpop.f32.mrb[0].mxu0
        %v1632 = vadd.f32 %v1455, %v1631
        %v1633 = vpop.f32.mrb[0].mxu0
        %1634 = vmatprep.mubr.bf16.mxu0 %v351
        %1635 = vmatmul.mubr.bf16.gmra.mrb[0].mxu0 %v692
        %v1636 = vpop.f32.mrb[0].mxu0
        %v1637 = vadd.f32 %v1460, %v1636
        %v1638 = vpop.f32.mrb[0].mxu0
        %v1639 = vpop.f32.mrb[0].mxu0
        %v1640 = vadd.f32 %v1463, %v1639
        %v1641 = vpop.f32.mrb[0].mxu0
        %1642 = vmatprep.mubr.bf16.mxu0 %v352
        %1643 = vmatmul.mubr.bf16.gmra.mrb[0].mxu0 %v695
        %v1644 = vpop.f32.mrb[0].mxu0
        %v1645 = vadd.f32 %v1468, %v1644
        %v1646 = vpop.f32.mrb[0].mxu0
        %v1647 = vpop.f32.mrb[0].mxu0
        %v1648 = vadd.f32 %v1471, %v1647
        %v1649 = vpop.f32.mrb[0].mxu0
        %1650 = vmatprep.mubr.bf16.mxu0 %v353
        %1651 = vmatmul.mubr.bf16.gmra.mrb[0].mxu0 %v698
        %v1652 = vpop.f32.mrb[0].mxu0
        %v1653 = vadd.f32 %v1476, %v1652
        %v1654 = vpop.f32.mrb[0].mxu0
        %v1655 = vpop.f32.mrb[0].mxu0
        %v1656 = vadd.f32 %v1479, %v1655
        %v1657 = vpop.f32.mrb[0].mxu0
        %1658 = vmatprep.mubr.bf16.mxu0 %v354
        %1659 = vmatmul.mubr.bf16.gmra.mrb[0].mxu0 %v701
        %v1660 = vpop.f32.mrb[0].mxu0
        %v1661 = vadd.f32 %v1484, %v1660
        %v1662 = vpop.f32.mrb[0].mxu0
        %v1663 = vpop.f32.mrb[0].mxu0
        %v1664 = vadd.f32 %v1487, %v1663
        %v1665 = vpop.f32.mrb[0].mxu0
        %1666 = vmatprep.mubr.bf16.mxu0 %v355
        %1667 = vmatmul.mubr.bf16.gmra.mrb[0].mxu0 %v704
        %v1668 = vpop.f32.mrb[0].mxu0
        %v1669 = vadd.f32 %v1492, %v1668
        %v1670 = vpop.f32.mrb[0].mxu0
        %v1671 = vpop.f32.mrb[0].mxu0
        %v1672 = vadd.f32 %v1495, %v1671
        %v1673 = vpop.f32.mrb[0].mxu0
        %1674 = vmatprep.mubr.bf16.mxu0 %v356
        %1675 = vmatmul.mubr.bf16.gmra.mrb[0].mxu0 %v707
        %v1676 = vpop.f32.mrb[0].mxu0
        %v1677 = vadd.f32 %v1500, %v1676
        %v1678 = vpop.f32.mrb[0].mxu0
        %v1679 = vpop.f32.mrb[0].mxu0
        %v1680 = vadd.f32 %v1503, %v1679
        %v1681 = vpop.f32.mrb[0].mxu0
        %1682 = vmatprep.mubr.bf16.mxu0 %v357
        %1683 = vmatmul.mubr.bf16.gmra.mrb[0].mxu0 %v710
        %v1684 = vpop.f32.mrb[0].mxu0
        %v1685 = vadd.f32 %v1508, %v1684
        %v1686 = vpop.f32.mrb[0].mxu0
        %v1687 = vpop.f32.mrb[0].mxu0
        %v1688 = vadd.f32 %v1511, %v1687
        %v1689 = vpop.f32.mrb[0].mxu0
        %1690 = vmatprep.mubr.bf16.mxu0 %v358
        %1691 = vmatmul.mubr.bf16.gmra.mrb[0].mxu0 %v713
        %v1692 = vpop.f32.mrb[0].mxu0
        %v1693 = vadd.f32 %v1516, %v1692
        %v1694 = vpop.f32.mrb[0].mxu0
        %v1695 = vpop.f32.mrb[0].mxu0
        %v1696 = vadd.f32 %v1519, %v1695
        %v1697 = vpop.f32.mrb[0].mxu0
        %1698 = vmatprep.mubr.bf16.mxu0 %v359
        %1699 = vmatmul.mubr.bf16.gmra.mrb[0].mxu0 %v716
        %v1700 = vpop.f32.mrb[0].mxu0
        %v1701 = vadd.f32 %v1524, %v1700
        %v1702 = vpop.f32.mrb[0].mxu0
        %v1703 = vpop.f32.mrb[0].mxu0
        %v1704 = vadd.f32 %v1527, %v1703
        %v1705 = vpop.f32.mrb[0].mxu0
        %1706 = vmatprep.mubr.bf16.mxu0 %v360
        %1707 = vmatmul.mubr.bf16.gmra.mrb[0].mxu0 %v719
        %v1708 = vpop.f32.mrb[0].mxu0
        %v1709 = vadd.f32 %v1532, %v1708
        %v1710 = vpop.f32.mrb[0].mxu0
        %v1711 = vpop.f32.mrb[0].mxu0
        %v1712 = vadd.f32 %v1535, %v1711
        %v1713 = vpop.f32.mrb[0].mxu0
        %1714 = vmatprep.mubr.bf16.mxu0 %v745
        %1715 = vmatmul.mubr.bf16.gmra.mrb[0].mxu0 %v722
        %v1716 = vpop.f32.mrb[0].mxu0
        %v1717 = vadd.f32 %v1540, %v1716
        %v1718 = vpop.f32.mrb[0].mxu0
        %v1719 = vpop.f32.mrb[0].mxu0
        %v1720 = vadd.f32 %v1543, %v1719
        %v1721 = vpop.f32.mrb[0].mxu0
        %1722 = vdwg.mxu0
        %1723 = vmatprep.subr.bf16.mxu0 0
        %1724 = vmatpush1.bf16.msra.mxu0 %v1257
        %1725 = vmatprep.subr.bf16.mxu0 0
        %1726 = vmatpush1.bf16.msra.mxu0 %v1258
        %1727 = vmatprep.subr.bf16.mxu0 0
        %1728 = vmatpush1.bf16.msra.mxu0 %v1259
        %1729 = vmatprep.subr.bf16.mxu0 0
        %1730 = vmatpush1.bf16.msra.mxu0 %v1260
        %1731 = vmatprep.subr.bf16.mxu0 0
        %1732 = vmatpush1.bf16.msra.mxu0 %v1261
        %1733 = vmatprep.subr.bf16.mxu0 0
        %1734 = vmatpush1.bf16.msra.mxu0 %v1262
        %1735 = vmatprep.subr.bf16.mxu0 0
        %1736 = vmatpush1.bf16.msra.mxu0 %v1263
        %1737 = vmatprep.subr.bf16.mxu0 0
        %1738 = vmatpush1.bf16.msra.mxu0 %v1264
        %1739 = vmatprep.subr.bf16.mxu0 0
        %1740 = vmatpush1.bf16.msra.mxu0 %v1265
        %1741 = vmatprep.subr.bf16.mxu0 0
        %1742 = vmatpush1.bf16.msra.mxu0 %v1266
        %1743 = vmatprep.subr.bf16.mxu0 0
        %1744 = vmatpush1.bf16.msra.mxu0 %v1267
        %1745 = vmatprep.subr.bf16.mxu0 0
        %1746 = vmatpush1.bf16.msra.mxu0 %v1268
        %1747 = vmatprep.subr.bf16.mxu0 0
        %1748 = vmatpush1.bf16.msra.mxu0 %v1269
        %1749 = vmatprep.subr.bf16.mxu0 0
        %1750 = vmatpush1.bf16.msra.mxu0 %v1270
        %1751 = vmatprep.subr.bf16.mxu0 0
        %1752 = vmatpush1.bf16.msra.mxu0 %v1271
        %1753 = vmatprep.subr.bf16.mxu0 0
        %1754 = vmatpush1.bf16.msra.mxu0 %v1272
        %1755 = vmatprep.mubr.bf16.mxu0 %v674
        %1756 = vmatmul.mubr.bf16.gmra.mrb[0].mxu0 %v457
        %v1757 = vpop.f32.mrb[0].mxu0
        %v1758 = vadd.f32 %v1581, %v1757
        %v1759 = vpop.f32.mrb[0].mxu0
        %v1760 = vpop.f32.mrb[0].mxu0
        %v1761 = vadd.f32 %v1584, %v1760
        %v1762 = vpop.f32.mrb[0].mxu0
        %1763 = vmatprep.mubr.bf16.mxu0 %v677
        %1764 = vmatmul.mubr.bf16.gmra.mrb[0].mxu0 %v469
        %v1765 = vpop.f32.mrb[0].mxu0
        %v1766 = vadd.f32 %v1589, %v1765
        %v1767 = vpop.f32.mrb[0].mxu0
        %v1768 = vpop.f32.mrb[0].mxu0
        %v1769 = vadd.f32 %v1592, %v1768
        %v1770 = vpop.f32.mrb[0].mxu0
        %1771 = vmatprep.mubr.bf16.mxu0 %v680
        %1772 = vmatmul.mubr.bf16.gmra.mrb[0].mxu0 %v481
        %v1773 = vpop.f32.mrb[0].mxu0
        %v1774 = vadd.f32 %v1597, %v1773
        %v1775 = vpop.f32.mrb[0].mxu0
        %v1776 = vpop.f32.mrb[0].mxu0
        %v1777 = vadd.f32 %v1600, %v1776
        %v1778 = vpop.f32.mrb[0].mxu0
        %1779 = vmatprep.mubr.bf16.mxu0 %v683
        %1780 = vmatmul.mubr.bf16.gmra.mrb[0].mxu0 %v493
        %v1781 = vpop.f32.mrb[0].mxu0
        %v1782 = vadd.f32 %v1605, %v1781
        %v1783 = vpop.f32.mrb[0].mxu0
        %v1784 = vpop.f32.mrb[0].mxu0
        %v1785 = vadd.f32 %v1608, %v1784
        %v1786 = vpop.f32.mrb[0].mxu0
        %1787 = vmatprep.mubr.bf16.mxu0 %v686
        %1788 = vmatmul.mubr.bf16.gmra.mrb[0].mxu0 %v505
        %v1789 = vpop.f32.mrb[0].mxu0
        %v1790 = vadd.f32 %v1613, %v1789
        %v1791 = vpop.f32.mrb[0].mxu0
        %v1792 = vpop.f32.mrb[0].mxu0
        %v1793 = vadd.f32 %v1616, %v1792
        %v1794 = vpop.f32.mrb[0].mxu0
        %1795 = vmatprep.mubr.bf16.mxu0 %v689
        %1796 = vmatmul.mubr.bf16.gmra.mrb[0].mxu0 %v517
        %v1797 = vpop.f32.mrb[0].mxu0
        %v1798 = vadd.f32 %v1621, %v1797
        %v1799 = vpop.f32.mrb[0].mxu0
        %v1800 = vpop.f32.mrb[0].mxu0
        %v1801 = vadd.f32 %v1624, %v1800
        %v1802 = vpop.f32.mrb[0].mxu0
        %1803 = vmatprep.mubr.bf16.mxu0 %v692
        %1804 = vmatmul.mubr.bf16.gmra.mrb[0].mxu0 %v529
        %v1805 = vpop.f32.mrb[0].mxu0
        %v1806 = vadd.f32 %v1629, %v1805
        %v1807 = vpop.f32.mrb[0].mxu0
        %v1808 = vpop.f32.mrb[0].mxu0
        %v1809 = vadd.f32 %v1632, %v1808
        %v1810 = vpop.f32.mrb[0].mxu0
        %1811 = vmatprep.mubr.bf16.mxu0 %v695
        %1812 = vmatmul.mubr.bf16.gmra.mrb[0].mxu0 %v541
        %v1813 = vpop.f32.mrb[0].mxu0
        %v1814 = vadd.f32 %v1637, %v1813
        %v1815 = vpop.f32.mrb[0].mxu0
        %v1816 = vpop.f32.mrb[0].mxu0
        %v1817 = vadd.f32 %v1640, %v1816
        %v1818 = vpop.f32.mrb[0].mxu0
        %1819 = vmatprep.mubr.bf16.mxu0 %v698
        %1820 = vmatmul.mubr.bf16.gmra.mrb[0].mxu0 %v553
        %v1821 = vpop.f32.mrb[0].mxu0
        %v1822 = vadd.f32 %v1645, %v1821
        %v1823 = vpop.f32.mrb[0].mxu0
        %v1824 = vpop.f32.mrb[0].mxu0
        %v1825 = vadd.f32 %v1648, %v1824
        %v1826 = vpop.f32.mrb[0].mxu0
        %1827 = vmatprep.mubr.bf16.mxu0 %v701
        %1828 = vmatmul.mubr.bf16.gmra.mrb[0].mxu0 %v565
        %v1829 = vpop.f32.mrb[0].mxu0
        %v1830 = vadd.f32 %v1653, %v1829
        %v1831 = vpop.f32.mrb[0].mxu0
        %v1832 = vpop.f32.mrb[0].mxu0
        %v1833 = vadd.f32 %v1656, %v1832
        %v1834 = vpop.f32.mrb[0].mxu0
        %1835 = vmatprep.mubr.bf16.mxu0 %v704
        %1836 = vmatmul.mubr.bf16.gmra.mrb[0].mxu0 %v577
        %v1837 = vpop.f32.mrb[0].mxu0
        %v1838 = vadd.f32 %v1661, %v1837
        %v1839 = vpop.f32.mrb[0].mxu0
        %v1840 = vpop.f32.mrb[0].mxu0
        %v1841 = vadd.f32 %v1664, %v1840
        %v1842 = vpop.f32.mrb[0].mxu0
        %1843 = vmatprep.mubr.bf16.mxu0 %v707
        %1844 = vmatmul.mubr.bf16.gmra.mrb[0].mxu0 %v589
        %v1845 = vpop.f32.mrb[0].mxu0
        %v1846 = vadd.f32 %v1669, %v1845
        %v1847 = vpop.f32.mrb[0].mxu0
        %v1848 = vpop.f32.mrb[0].mxu0
        %v1849 = vadd.f32 %v1672, %v1848
        %v1850 = vpop.f32.mrb[0].mxu0
        %1851 = vmatprep.mubr.bf16.mxu0 %v710
        %1852 = vmatmul.mubr.bf16.gmra.mrb[0].mxu0 %v601
        %v1853 = vpop.f32.mrb[0].mxu0
        %v1854 = vadd.f32 %v1677, %v1853
        %v1855 = vpop.f32.mrb[0].mxu0
        %v1856 = vpop.f32.mrb[0].mxu0
        %v1857 = vadd.f32 %v1680, %v1856
        %v1858 = vpop.f32.mrb[0].mxu0
        %1859 = vmatprep.mubr.bf16.mxu0 %v713
        %1860 = vmatmul.mubr.bf16.gmra.mrb[0].mxu0 %v613
        %v1861 = vpop.f32.mrb[0].mxu0
        %v1862 = vadd.f32 %v1685, %v1861
        %v1863 = vpop.f32.mrb[0].mxu0
        %v1864 = vpop.f32.mrb[0].mxu0
        %v1865 = vadd.f32 %v1688, %v1864
        %v1866 = vpop.f32.mrb[0].mxu0
        %1867 = vmatprep.mubr.bf16.mxu0 %v716
        %1868 = vmatmul.mubr.bf16.gmra.mrb[0].mxu0 %v625
        %v1869 = vpop.f32.mrb[0].mxu0
        %v1870 = vadd.f32 %v1693, %v1869
        %v1871 = vpop.f32.mrb[0].mxu0
        %v1872 = vpop.f32.mrb[0].mxu0
        %v1873 = vadd.f32 %v1696, %v1872
        %v1874 = vpop.f32.mrb[0].mxu0
        %1875 = vmatprep.mubr.bf16.mxu0 %v719
        %1876 = vmatmul.mubr.bf16.gmra.mrb[0].mxu0 %v637
        %v1877 = vpop.f32.mrb[0].mxu0
        %v1878 = vadd.f32 %v1701, %v1877
        %v1879 = vpop.f32.mrb[0].mxu0
        %v1880 = vpop.f32.mrb[0].mxu0
        %v1881 = vadd.f32 %v1704, %v1880
        %v1882 = vpop.f32.mrb[0].mxu0
        %1883 = vmatprep.mubr.bf16.mxu0 %v722
        %1884 = vmatmul.mubr.bf16.gmra.mrb[0].mxu0 %v649
        %v1885 = vpop.f32.mrb[0].mxu0
        %v1886 = vadd.f32 %v1709, %v1885
        %v1887 = vpop.f32.mrb[0].mxu0
        %v1888 = vpop.f32.mrb[0].mxu0
        %v1889 = vadd.f32 %v1712, %v1888
        %v1890 = vpop.f32.mrb[0].mxu0
        %1891 = vmatprep.mubr.bf16.mxu0 %v765
        %1892 = vmatmul.mubr.bf16.gmra.mrb[0].mxu0 %v761
        %v1893 = vpop.f32.mrb[0].mxu0
        %v1894 = vadd.f32 %v1717, %v1893
        %v1895 = vpop.f32.mrb[0].mxu0
        %v1896 = vpop.f32.mrb[0].mxu0
        %v1897 = vadd.f32 %v1720, %v1896
        %v1898 = vpop.f32.mrb[0].mxu0
        %1899 = vdwg.mxu0
        %1900 = vmatprep.subr.bf16.mxu0 0
        %1901 = vmatpush1.bf16.msra.mxu0 %v1273
        %1902 = vmatprep.subr.bf16.mxu0 0
        %1903 = vmatpush1.bf16.msra.mxu0 %v1274
        %1904 = vmatprep.subr.bf16.mxu0 0
        %1905 = vmatpush1.bf16.msra.mxu0 %v1275
        %1906 = vmatprep.subr.bf16.mxu0 0
        %1907 = vmatpush1.bf16.msra.mxu0 %v1276
        %1908 = vmatprep.subr.bf16.mxu0 0
        %1909 = vmatpush1.bf16.msra.mxu0 %v1277
        %1910 = vmatprep.subr.bf16.mxu0 0
        %1911 = vmatpush1.bf16.msra.mxu0 %v1278
        %1912 = vmatprep.subr.bf16.mxu0 0
        %1913 = vmatpush1.bf16.msra.mxu0 %v1279
        %1914 = vmatprep.subr.bf16.mxu0 0
        %1915 = vmatpush1.bf16.msra.mxu0 %v1280
        %1916 = vmatprep.subr.bf16.mxu0 0
        %1917 = vmatpush1.bf16.msra.mxu0 %v1281
        %1918 = vmatprep.subr.bf16.mxu0 0
        %1919 = vmatpush1.bf16.msra.mxu0 %v1282
        %1920 = vmatprep.subr.bf16.mxu0 0
        %1921 = vmatpush1.bf16.msra.mxu0 %v1283
        %1922 = vmatprep.subr.bf16.mxu0 0
        %1923 = vmatpush1.bf16.msra.mxu0 %v1284
        %1924 = vmatprep.subr.bf16.mxu0 0
        %1925 = vmatpush1.bf16.msra.mxu0 %v1285
        %1926 = vmatprep.subr.bf16.mxu0 0
        %1927 = vmatpush1.bf16.msra.mxu0 %v1286
        %1928 = vmatprep.subr.bf16.mxu0 0
        %1929 = vmatpush1.bf16.msra.mxu0 %v1287
        %1930 = vmatprep.subr.bf16.mxu0 0
        %1931 = vmatpush1.bf16.msra.mxu0 %v1288
        %1932 = vmatprep.mubr.bf16.mxu0 %v469
        %1933 = vmatmul.mubr.bf16.gmra.mrb[0].mxu0 %v345
        %v1934 = vpop.f32.mrb[0].mxu0
        %v1935 = vadd.f32 %v1758, %v1934
        %v1936 = vpop.f32.mrb[0].mxu0
        %v1937 = vpop.f32.mrb[0].mxu0
        %v1938 = vadd.f32 %v1761, %v1937
        %v1939 = vpop.f32.mrb[0].mxu0
        %1940 = vmatprep.mubr.bf16.mxu0 %v481
        %1941 = vmatmul.mubr.bf16.gmra.mrb[0].mxu0 %v346
        %v1942 = vpop.f32.mrb[0].mxu0
        %v1943 = vadd.f32 %v1766, %v1942
        %v1944 = vpop.f32.mrb[0].mxu0
        %v1945 = vpop.f32.mrb[0].mxu0
        %v1946 = vadd.f32 %v1769, %v1945
        %v1947 = vpop.f32.mrb[0].mxu0
        %1948 = vmatprep.mubr.bf16.mxu0 %v493
        %1949 = vmatmul.mubr.bf16.gmra.mrb[0].mxu0 %v347
        %v1950 = vpop.f32.mrb[0].mxu0
        %v1951 = vadd.f32 %v1774, %v1950
        %v1952 = vpop.f32.mrb[0].mxu0
        %v1953 = vpop.f32.mrb[0].mxu0
        %v1954 = vadd.f32 %v1777, %v1953
        %v1955 = vpop.f32.mrb[0].mxu0
        %1956 = vmatprep.mubr.bf16.mxu0 %v505
        %1957 = vmatmul.mubr.bf16.gmra.mrb[0].mxu0 %v348
        %v1958 = vpop.f32.mrb[0].mxu0
        %v1959 = vadd.f32 %v1782, %v1958
        %v1960 = vpop.f32.mrb[0].mxu0
        %v1961 = vpop.f32.mrb[0].mxu0
        %v1962 = vadd.f32 %v1785, %v1961
        %v1963 = vpop.f32.mrb[0].mxu0
        %1964 = vmatprep.mubr.bf16.mxu0 %v517
        %1965 = vmatmul.mubr.bf16.gmra.mrb[0].mxu0 %v349
        %v1966 = vpop.f32.mrb[0].mxu0
        %v1967 = vadd.f32 %v1790, %v1966
        %v1968 = vpop.f32.mrb[0].mxu0
        %v1969 = vpop.f32.mrb[0].mxu0
        %v1970 = vadd.f32 %v1793, %v1969
        %v1971 = vpop.f32.mrb[0].mxu0
        %1972 = vmatprep.mubr.bf16.mxu0 %v529
        %1973 = vmatmul.mubr.bf16.gmra.mrb[0].mxu0 %v350
        %v1974 = vpop.f32.mrb[0].mxu0
        %v1975 = vadd.f32 %v1798, %v1974
        %v1976 = vpop.f32.mrb[0].mxu0
        %v1977 = vpop.f32.mrb[0].mxu0
        %v1978 = vadd.f32 %v1801, %v1977
        %v1979 = vpop.f32.mrb[0].mxu0
        %1980 = vmatprep.mubr.bf16.mxu0 %v541
        %1981 = vmatmul.mubr.bf16.gmra.mrb[0].mxu0 %v351
        %v1982 = vpop.f32.mrb[0].mxu0
        %v1983 = vadd.f32 %v1806, %v1982
        %v1984 = vpop.f32.mrb[0].mxu0
        %v1985 = vpop.f32.mrb[0].mxu0
        %v1986 = vadd.f32 %v1809, %v1985
        %v1987 = vpop.f32.mrb[0].mxu0
        %1988 = vmatprep.mubr.bf16.mxu0 %v553
        %1989 = vmatmul.mubr.bf16.gmra.mrb[0].mxu0 %v352
        %v1990 = vpop.f32.mrb[0].mxu0
        %v1991 = vadd.f32 %v1814, %v1990
        %v1992 = vpop.f32.mrb[0].mxu0
        %v1993 = vpop.f32.mrb[0].mxu0
        %v1994 = vadd.f32 %v1817, %v1993
        %v1995 = vpop.f32.mrb[0].mxu0
        %1996 = vmatprep.mubr.bf16.mxu0 %v565
        %1997 = vmatmul.mubr.bf16.gmra.mrb[0].mxu0 %v353
        %v1998 = vpop.f32.mrb[0].mxu0
        %v1999 = vadd.f32 %v1822, %v1998
        %v2000 = vpop.f32.mrb[0].mxu0
        %v2001 = vpop.f32.mrb[0].mxu0
        %v2002 = vadd.f32 %v1825, %v2001
        %v2003 = vpop.f32.mrb[0].mxu0
        %2004 = vmatprep.mubr.bf16.mxu0 %v577
        %2005 = vmatmul.mubr.bf16.gmra.mrb[0].mxu0 %v354
        %v2006 = vpop.f32.mrb[0].mxu0
        %v2007 = vadd.f32 %v1830, %v2006
        %v2008 = vpop.f32.mrb[0].mxu0
        %v2009 = vpop.f32.mrb[0].mxu0
        %v2010 = vadd.f32 %v1833, %v2009
        %v2011 = vpop.f32.mrb[0].mxu0
        %2012 = vmatprep.mubr.bf16.mxu0 %v589
        %2013 = vmatmul.mubr.bf16.gmra.mrb[0].mxu0 %v355
        %v2014 = vpop.f32.mrb[0].mxu0
        %v2015 = vadd.f32 %v1838, %v2014
        %v2016 = vpop.f32.mrb[0].mxu0
        %v2017 = vpop.f32.mrb[0].mxu0
        %v2018 = vadd.f32 %v1841, %v2017
        %v2019 = vpop.f32.mrb[0].mxu0
        %2020 = vmatprep.mubr.bf16.mxu0 %v601
        %2021 = vmatmul.mubr.bf16.gmra.mrb[0].mxu0 %v356
        %v2022 = vpop.f32.mrb[0].mxu0
        %v2023 = vadd.f32 %v1846, %v2022
        %v2024 = vpop.f32.mrb[0].mxu0
        %v2025 = vpop.f32.mrb[0].mxu0
        %v2026 = vadd.f32 %v1849, %v2025
        %v2027 = vpop.f32.mrb[0].mxu0
        %2028 = vmatprep.mubr.bf16.mxu0 %v613
        %2029 = vmatmul.mubr.bf16.gmra.mrb[0].mxu0 %v357
        %v2030 = vpop.f32.mrb[0].mxu0
        %v2031 = vadd.f32 %v1854, %v2030
        %v2032 = vpop.f32.mrb[0].mxu0
        %v2033 = vpop.f32.mrb[0].mxu0
        %v2034 = vadd.f32 %v1857, %v2033
        %v2035 = vpop.f32.mrb[0].mxu0
        %2036 = vmatprep.mubr.bf16.mxu0 %v625
        %2037 = vmatmul.mubr.bf16.gmra.mrb[0].mxu0 %v358
        %v2038 = vpop.f32.mrb[0].mxu0
        %v2039 = vadd.f32 %v1862, %v2038
        %v2040 = vpop.f32.mrb[0].mxu0
        %v2041 = vpop.f32.mrb[0].mxu0
        %v2042 = vadd.f32 %v1865, %v2041
        %v2043 = vpop.f32.mrb[0].mxu0
        %2044 = vmatprep.mubr.bf16.mxu0 %v637
        %2045 = vmatmul.mubr.bf16.gmra.mrb[0].mxu0 %v359
        %v2046 = vpop.f32.mrb[0].mxu0
        %v2047 = vadd.f32 %v1870, %v2046
        %v2048 = vpop.f32.mrb[0].mxu0
        %v2049 = vpop.f32.mrb[0].mxu0
        %v2050 = vadd.f32 %v1873, %v2049
        %v2051 = vpop.f32.mrb[0].mxu0
        %2052 = vmatprep.mubr.bf16.mxu0 %v649
        %2053 = vmatmul.mubr.bf16.gmra.mrb[0].mxu0 %v360
        %v2054 = vpop.f32.mrb[0].mxu0
        %v2055 = vadd.f32 %v1878, %v2054
        %v2056 = vpop.f32.mrb[0].mxu0
        %v2057 = vpop.f32.mrb[0].mxu0
        %v2058 = vadd.f32 %v1881, %v2057
        %v2059 = vpop.f32.mrb[0].mxu0
        %2060 = vmatprep.mubr.bf16.mxu0 %v761
        %2061 = vmatmul.mubr.bf16.gmra.mrb[0].mxu0 %v745
        %v2062 = vpop.f32.mrb[0].mxu0
        %v2063 = vadd.f32 %v1886, %v2062
        %v2064 = vpop.f32.mrb[0].mxu0
        %v2065 = vpop.f32.mrb[0].mxu0
        %v2066 = vadd.f32 %v1889, %v2065
        %v2067 = vpop.f32.mrb[0].mxu0
        %2068 = vmatprep.mubr.bf16.mxu0 %v787
        %2069 = vmatmul.mubr.bf16.gmra.mrb[0].mxu0 %v771
        %v2070 = vpop.f32.mrb[0].mxu0
        %v2071 = vadd.f32 %v1894, %v2070
        %v2072 = vpop.f32.mrb[0].mxu0
        %v2073 = vpop.f32.mrb[0].mxu0
        %v2074 = vadd.f32 %v1897, %v2073
        %v2075 = vpop.f32.mrb[0].mxu0
        %2076 = vdwg.mxu0
        %2077 = vmatprep.subr.bf16.mxu0 0
        %2078 = vmatpush1.bf16.msra.mxu0 %v1289
        %2079 = vmatprep.subr.bf16.mxu0 0
        %2080 = vmatpush1.bf16.msra.mxu0 %v1290
        %2081 = vmatprep.subr.bf16.mxu0 0
        %2082 = vmatpush1.bf16.msra.mxu0 %v1291
        %2083 = vmatprep.subr.bf16.mxu0 0
        %2084 = vmatpush1.bf16.msra.mxu0 %v1292
        %2085 = vmatprep.subr.bf16.mxu0 0
        %2086 = vmatpush1.bf16.msra.mxu0 %v1293
        %2087 = vmatprep.subr.bf16.mxu0 0
        %2088 = vmatpush1.bf16.msra.mxu0 %v1294
        %2089 = vmatprep.subr.bf16.mxu0 0
        %2090 = vmatpush1.bf16.msra.mxu0 %v1295
        %2091 = vmatprep.subr.bf16.mxu0 0
        %2092 = vmatpush1.bf16.msra.mxu0 %v1296
        %2093 = vmatprep.subr.bf16.mxu0 0
        %2094 = vmatpush1.bf16.msra.mxu0 0
        %2095 = vmatprep.subr.bf16.mxu0 0
        %2096 = vmatpush1.bf16.msra.mxu0 0
        %2097 = vmatprep.subr.bf16.mxu0 0
        %2098 = vmatpush1.bf16.msra.mxu0 0
        %2099 = vmatprep.subr.bf16.mxu0 0
        %2100 = vmatpush1.bf16.msra.mxu0 0
        %2101 = vmatprep.subr.bf16.mxu0 0
        %2102 = vmatpush1.bf16.msra.mxu0 0
        %2103 = vmatprep.subr.bf16.mxu0 0
        %2104 = vmatpush1.bf16.msra.mxu0 0
        %2105 = vmatprep.subr.bf16.mxu0 0
        %2106 = vmatpush1.bf16.msra.mxu0 0
        %2107 = vmatprep.subr.bf16.mxu0 0
        %2108 = vmatpush1.bf16.msra.mxu0 0
        %2109 = vmatprep.mubr.bf16.mxu0 0
        %2110 = vmatmul.mubr.bf16.gmra.mrb[0].mxu0 %v677
        %v2111 = vpop.f32.mrb[0].mxu0
        %v2112 = vadd.f32 %v1935, %v2111
        %v2113 = vpop.f32.mrb[0].mxu0
        %v2114 = vpop.f32.mrb[0].mxu0
        %v2115 = vadd.f32 %v1938, %v2114
        %v2116 = vpop.f32.mrb[0].mxu0
        %2117 = vmatprep.mubr.bf16.mxu0 0
        %2118 = vmatmul.mubr.bf16.gmra.mrb[0].mxu0 %v680
        %v2119 = vpop.f32.mrb[0].mxu0
        %v2120 = vadd.f32 %v1943, %v2119
        %v2121 = vpop.f32.mrb[0].mxu0
        %v2122 = vpop.f32.mrb[0].mxu0
        %v2123 = vadd.f32 %v1946, %v2122
        %v2124 = vpop.f32.mrb[0].mxu0
        %2125 = vmatprep.mubr.bf16.mxu0 0
        %2126 = vmatmul.mubr.bf16.gmra.mrb[0].mxu0 %v683
        %v2127 = vpop.f32.mrb[0].mxu0
        %v2128 = vadd.f32 %v1951, %v2127
        %v2129 = vpop.f32.mrb[0].mxu0
        %v2130 = vpop.f32.mrb[0].mxu0
        %v2131 = vadd.f32 %v1954, %v2130
        %v2132 = vpop.f32.mrb[0].mxu0
        %2133 = vmatprep.mubr.bf16.mxu0 0
        %2134 = vmatmul.mubr.bf16.gmra.mrb[0].mxu0 %v686
        %v2135 = vpop.f32.mrb[0].mxu0
        %v2136 = vadd.f32 %v1959, %v2135
        %v2137 = vpop.f32.mrb[0].mxu0
        %v2138 = vpop.f32.mrb[0].mxu0
        %v2139 = vadd.f32 %v1962, %v2138
        %v2140 = vpop.f32.mrb[0].mxu0
        %2141 = vmatprep.mubr.bf16.mxu0 0
        %2142 = vmatmul.mubr.bf16.gmra.mrb[0].mxu0 %v689
        %v2143 = vpop.f32.mrb[0].mxu0
        %v2144 = vadd.f32 %v1967, %v2143
        %v2145 = vpop.f32.mrb[0].mxu0
        %v2146 = vpop.f32.mrb[0].mxu0
        %v2147 = vadd.f32 %v1970, %v2146
        %v2148 = vpop.f32.mrb[0].mxu0
        %2149 = vmatprep.mubr.bf16.mxu0 0
        %2150 = vmatmul.mubr.bf16.gmra.mrb[0].mxu0 %v692
        %v2151 = vpop.f32.mrb[0].mxu0
        %v2152 = vadd.f32 %v1975, %v2151
        %v2153 = vpop.f32.mrb[0].mxu0
        %v2154 = vpop.f32.mrb[0].mxu0
        %v2155 = vadd.f32 %v1978, %v2154
        %v2156 = vpop.f32.mrb[0].mxu0
        %2157 = vmatprep.mubr.bf16.mxu0 0
        %2158 = vmatmul.mubr.bf16.gmra.mrb[0].mxu0 %v695
        %v2159 = vpop.f32.mrb[0].mxu0
        %v2160 = vadd.f32 %v1983, %v2159
        %v2161 = vpop.f32.mrb[0].mxu0
        %v2162 = vpop.f32.mrb[0].mxu0
        %v2163 = vadd.f32 %v1986, %v2162
        %v2164 = vpop.f32.mrb[0].mxu0
        %2165 = vmatprep.mubr.bf16.mxu0 0
        %2166 = vmatmul.mubr.bf16.gmra.mrb[0].mxu0 %v698
        %v2167 = vpop.f32.mrb[0].mxu0
        %v2168 = vadd.f32 %v1991, %v2167
        %v2169 = vpop.f32.mrb[0].mxu0
        %v2170 = vpop.f32.mrb[0].mxu0
        %v2171 = vadd.f32 %v1994, %v2170
        %v2172 = vpop.f32.mrb[0].mxu0
        %2173 = vmatprep.mubr.bf16.mxu0 0
        %2174 = vmatmul.mubr.bf16.gmra.mrb[0].mxu0 %v701
        %v2175 = vpop.f32.mrb[0].mxu0
        %v2176 = vadd.f32 %v1999, %v2175
        %v2177 = vpop.f32.mrb[0].mxu0
        %v2178 = vpop.f32.mrb[0].mxu0
        %v2179 = vadd.f32 %v2002, %v2178
        %v2180 = vpop.f32.mrb[0].mxu0
        %2181 = vmatprep.mubr.bf16.mxu0 0
        %2182 = vmatmul.mubr.bf16.gmra.mrb[0].mxu0 %v704
        %v2183 = vpop.f32.mrb[0].mxu0
        %v2184 = vadd.f32 %v2007, %v2183
        %v2185 = vpop.f32.mrb[0].mxu0
        %v2186 = vpop.f32.mrb[0].mxu0
        %v2187 = vadd.f32 %v2010, %v2186
        %v2188 = vpop.f32.mrb[0].mxu0
        %2189 = vmatprep.mubr.bf16.mxu0 0
        %2190 = vmatmul.mubr.bf16.gmra.mrb[0].mxu0 %v707
        %v2191 = vpop.f32.mrb[0].mxu0
        %v2192 = vadd.f32 %v2015, %v2191
        %v2193 = vpop.f32.mrb[0].mxu0
        %v2194 = vpop.f32.mrb[0].mxu0
        %v2195 = vadd.f32 %v2018, %v2194
        %v2196 = vpop.f32.mrb[0].mxu0
        %2197 = vmatprep.mubr.bf16.mxu0 0
        %2198 = vmatmul.mubr.bf16.gmra.mrb[0].mxu0 %v710
        %v2199 = vpop.f32.mrb[0].mxu0
        %v2200 = vadd.f32 %v2023, %v2199
        %v2201 = vpop.f32.mrb[0].mxu0
        %v2202 = vpop.f32.mrb[0].mxu0
        %v2203 = vadd.f32 %v2026, %v2202
        %v2204 = vpop.f32.mrb[0].mxu0
        %2205 = vmatprep.mubr.bf16.mxu0 0
        %2206 = vmatmul.mubr.bf16.gmra.mrb[0].mxu0 %v713
        %v2207 = vpop.f32.mrb[0].mxu0
        %v2208 = vadd.f32 %v2031, %v2207
        %v2209 = vpop.f32.mrb[0].mxu0
        %v2210 = vpop.f32.mrb[0].mxu0
        %v2211 = vadd.f32 %v2034, %v2210
        %v2212 = vpop.f32.mrb[0].mxu0
        %2213 = vmatprep.mubr.bf16.mxu0 0
        %2214 = vmatmul.mubr.bf16.gmra.mrb[0].mxu0 %v716
        %v2215 = vpop.f32.mrb[0].mxu0
        %v2216 = vadd.f32 %v2039, %v2215
        %v2217 = vpop.f32.mrb[0].mxu0
        %v2218 = vpop.f32.mrb[0].mxu0
        %v2219 = vadd.f32 %v2042, %v2218
        %v2220 = vpop.f32.mrb[0].mxu0
        %2221 = vmatprep.mubr.bf16.mxu0 0
        %2222 = vmatmul.mubr.bf16.gmra.mrb[0].mxu0 %v719
        %v2223 = vpop.f32.mrb[0].mxu0
        %v2224 = vadd.f32 %v2047, %v2223
        %v2225 = vpop.f32.mrb[0].mxu0
        %v2226 = vpop.f32.mrb[0].mxu0
        %v2227 = vadd.f32 %v2050, %v2226
        %v2228 = vpop.f32.mrb[0].mxu0
        %2229 = vmatprep.mubr.bf16.mxu0 0
        %2230 = vmatmul.mubr.bf16.gmra.mrb[0].mxu0 %v722
        %v2231 = vpop.f32.mrb[0].mxu0
        %v2232 = vadd.f32 %v2055, %v2231
        %v2233 = vpop.f32.mrb[0].mxu0
        %v2234 = vpop.f32.mrb[0].mxu0
        %v2235 = vadd.f32 %v2058, %v2234
        %v2236 = vpop.f32.mrb[0].mxu0
        %2237 = vmatprep.mubr.bf16.mxu0 0
        %2238 = vmatmul.mubr.bf16.gmra.mrb[0].mxu0 %v765
        %v2239 = vpop.f32.mrb[0].mxu0
        %v2240 = vadd.f32 %v2063, %v2239
        %v2241 = vpop.f32.mrb[0].mxu0
        %v2242 = vpop.f32.mrb[0].mxu0
        %v2243 = vadd.f32 %v2066, %v2242
        %v2244 = vpop.f32.mrb[0].mxu0
        %2245 = vmatprep.mubr.bf16.mxu0 0
        %2246 = vmatmul.mubr.bf16.gmra.mrb[0].mxu0 %v791
        %v2247 = vpop.f32.mrb[0].mxu0
        %v2248 = vadd.f32 %v2071, %v2247
        %v2249 = vpop.f32.mrb[0].mxu0
        %v2250 = vpop.f32.mrb[0].mxu0
        %v2251 = vadd.f32 %v2074, %v2250
        %v2252 = vpop.f32.mrb[0].mxu0
        %2253 = vdwg.mxu0
        %v2254 = vpack.c.bf16 %v2115, %v2112
        %v2255 = vpack.c.bf16 %v2123, %v2120
        %v2256 = vpack.c.bf16 %v2131, %v2128
        %v2257 = vpack.c.bf16 %v2139, %v2136
        %v2258 = vpack.c.bf16 %v2147, %v2144
        %v2259 = vpack.c.bf16 %v2155, %v2152
        %v2260 = vpack.c.bf16 %v2163, %v2160
        %v2261 = vpack.c.bf16 %v2171, %v2168
        %v2262 = vpack.c.bf16 %v2179, %v2176
        %v2263 = vpack.c.bf16 %v2187, %v2184
        %v2264 = vpack.c.bf16 %v2195, %v2192
        %v2265 = vpack.c.bf16 %v2203, %v2200
        %v2266 = vpack.c.bf16 %v2211, %v2208
        %v2267 = vpack.c.bf16 %v2219, %v2216
        %v2268 = vpack.c.bf16 %v2227, %v2224
        %v2269 = vpack.c.bf16 %v2235, %v2232
        %v2270 = vpack.c.bf16 %v2243, %v2240
        %v2271 = vpack.c.bf16 %v2251, %v2248
        %v2290 = vunpack.c.l.b16 %v2254
        %v2291 = vunpack.c.h.b16 %v2254
        %v2292 = vunpack.c.l.b16 %v2255
        %v2293 = vunpack.c.h.b16 %v2255
        %v2294 = vunpack.c.l.b16 %v2256
        %v2295 = vunpack.c.h.b16 %v2256
        %v2296 = vunpack.c.l.b16 %v2257
        %v2297 = vunpack.c.h.b16 %v2257
        %v2298 = vunpack.c.l.b16 %v2258
        %v2299 = vunpack.c.h.b16 %v2258
        %v2300 = vunpack.c.l.b16 %v2259
        %v2301 = vunpack.c.h.b16 %v2259
        %v2302 = vunpack.c.l.b16 %v2260
        %v2303 = vunpack.c.h.b16 %v2260
        %v2304 = vunpack.c.l.b16 %v2261
        %v2305 = vunpack.c.h.b16 %v2261
        %v2306 = vunpack.c.l.b16 %v2262
        %v2307 = vunpack.c.h.b16 %v2262
        %v2308 = vunpack.c.l.b16 %v2263
        %v2309 = vunpack.c.h.b16 %v2263
        %v2310 = vunpack.c.l.b16 %v2264
        %v2311 = vunpack.c.h.b16 %v2264
        %v2312 = vunpack.c.l.b16 %v2265
        %v2313 = vunpack.c.h.b16 %v2265
        %v2314 = vunpack.c.l.b16 %v2266
        %v2315 = vunpack.c.h.b16 %v2266
        %v2316 = vunpack.c.l.b16 %v2267
        %v2317 = vunpack.c.h.b16 %v2267
        %v2318 = vunpack.c.l.b16 %v2268
        %v2319 = vunpack.c.h.b16 %v2268
        %v2320 = vunpack.c.l.b16 %v2269
        %v2321 = vunpack.c.h.b16 %v2269
        %v2322 = vunpack.c.l.b16 %v2270
        %v2323 = vunpack.c.h.b16 %v2270
        %v2324 = vunpack.c.l.b16 %v2271
        %v2325 = vunpack.c.h.b16 %v2271
        %v2326 = vpack.c.b16 %v2290, %v2290
        %v2327 = vpack.c.b16 %v2291, %v2291
        %v2328 = vpack.c.b16 %v2292, %v2292
        %v2329 = vpack.c.b16 %v2293, %v2293
        %v2330 = vpack.c.b16 %v2294, %v2294
        %v2331 = vpack.c.b16 %v2295, %v2295
        %v2332 = vpack.c.b16 %v2296, %v2296
        %v2333 = vpack.c.b16 %v2297, %v2297
        %v2334 = vpack.c.b16 %v2298, %v2298
        %v2335 = vpack.c.b16 %v2299, %v2299
        %v2336 = vpack.c.b16 %v2300, %v2300
        %v2337 = vpack.c.b16 %v2301, %v2301
        %v2338 = vpack.c.b16 %v2302, %v2302
        %v2339 = vpack.c.b16 %v2303, %v2303
        %v2340 = vpack.c.b16 %v2304, %v2304
        %v2341 = vpack.c.b16 %v2305, %v2305
        %v2342 = vpack.c.b16 %v2306, %v2306
        %v2343 = vpack.c.b16 %v2307, %v2307
        %v2344 = vpack.c.b16 %v2308, %v2308
        %v2345 = vpack.c.b16 %v2309, %v2309
        %v2346 = vpack.c.b16 %v2310, %v2310
        %v2347 = vpack.c.b16 %v2311, %v2311
        %v2348 = vpack.c.b16 %v2312, %v2312
        %v2349 = vpack.c.b16 %v2313, %v2313
        %v2350 = vpack.c.b16 %v2314, %v2314
        %v2351 = vpack.c.b16 %v2315, %v2315
        %v2352 = vpack.c.b16 %v2316, %v2316
        %v2353 = vpack.c.b16 %v2317, %v2317
        %v2354 = vpack.c.b16 %v2318, %v2318
        %v2355 = vpack.c.b16 %v2319, %v2319
        %v2356 = vpack.c.b16 %v2320, %v2320
        %v2357 = vpack.c.b16 %v2321, %v2321
        %v2358 = vpack.c.b16 %v2322, %v2322
        %v2359 = vpack.c.b16 %v2323, %v2323
        %v2360 = vpack.c.b16 %v2324, %v2324
        %v2361 = vpack.c.b16 %v2325, %v2325
        %2398 = vst [vmem:[%s193] sm:$0xf] %v2326
        %2399 = vst [vmem:[%s193 + $0x4] sm:$0xf] %v2327
        %2400 = vst [vmem:[%s193 + $0x8] sm:$0xf] %v2328
        %2401 = vst [vmem:[%s193 + $0xc] sm:$0xf] %v2329
        %2402 = vst [vmem:[%s193 + $0x10] sm:$0xf] %v2330
        %2403 = vst [vmem:[%s193 + $0x14] sm:$0xf] %v2331
        %2404 = vst [vmem:[%s193 + $0x18] sm:$0xf] %v2332
        %2405 = vst [vmem:[%s193 + $0x1c] sm:$0xf] %v2333
        %2406 = vst [vmem:[%s193 + $0x20] sm:$0xf] %v2334
        %2407 = vst [vmem:[%s193 + $0x24] sm:$0xf] %v2335
        %2408 = vst [vmem:[%s193 + $0x28] sm:$0xf] %v2336
        %2409 = vst [vmem:[%s193 + $0x2c] sm:$0xf] %v2337
        %2410 = vst [vmem:[%s193 + $0x30] sm:$0xf] %v2338
        %2411 = vst [vmem:[%s193 + $0x34] sm:$0xf] %v2339
        %2412 = vst [vmem:[%s193 + $0x38] sm:$0xf] %v2340
        %2413 = vst [vmem:[%s193 + $0x3c] sm:$0xf] %v2341
        %2414 = vst [vmem:[%s193 + $0x40] sm:$0xf] %v2342
        %2415 = vst [vmem:[%s193 + $0x44] sm:$0xf] %v2343
        %2416 = vst [vmem:[%s193 + $0x48] sm:$0xf] %v2344
        %2417 = vst [vmem:[%s193 + $0x4c] sm:$0xf] %v2345
        %2418 = vst [vmem:[%s193 + $0x50] sm:$0xf] %v2346
        %2419 = vst [vmem:[%s193 + $0x54] sm:$0xf] %v2347
        %2420 = vst [vmem:[%s193 + $0x58] sm:$0xf] %v2348
        %2421 = vst [vmem:[%s193 + $0x5c] sm:$0xf] %v2349
        %2422 = vst [vmem:[%s193 + $0x60] sm:$0xf] %v2350
        %2423 = vst [vmem:[%s193 + $0x64] sm:$0xf] %v2351
        %2424 = vst [vmem:[%s193 + $0x68] sm:$0xf] %v2352
        %2425 = vst [vmem:[%s193 + $0x6c] sm:$0xf] %v2353
        %2426 = vst [vmem:[%s193 + $0x70] sm:$0xf] %v2354
        %2427 = vst [vmem:[%s193 + $0x74] sm:$0xf] %v2355
        %2428 = vst [vmem:[%s193 + $0x78] sm:$0xf] %v2356
        %2429 = vst [vmem:[%s193 + $0x7c] sm:$0xf] %v2357
        %2430 = vst [vmem:[%s193 + $0x80] sm:$0xf] %v2358
        %2431 = vst [vmem:[%s193 + $0x84] sm:$0xf] %v2359
        %2432 = vst [vmem:[%s193 + $0x88] sm:$0xf] %v2360
        %2433 = vst [vmem:[%s193 + $0x8c] sm:$0xf] %v2361
        %v2434 = vunpack.c.l.bf16 %v2255
        %v2435 = vunpack.c.h.bf16 %v2255
        %v2436 = vunpack.c.l.bf16 %v2256
        %v2437 = vunpack.c.h.bf16 %v2256
        %v2438 = vunpack.c.l.bf16 %v2257
        %v2439 = vunpack.c.h.bf16 %v2257
        %v2440 = vunpack.c.l.bf16 %v2258
        %v2441 = vunpack.c.h.bf16 %v2258
        %v2442 = vunpack.c.l.bf16 %v2259
        %v2443 = vunpack.c.h.bf16 %v2259
        %v2444 = vunpack.c.l.bf16 %v2260
        %v2445 = vunpack.c.h.bf16 %v2260
        %v2446 = vunpack.c.l.bf16 %v2261
        %v2447 = vunpack.c.h.bf16 %v2261
        %v2448 = vunpack.c.l.bf16 %v2262
        %v2449 = vunpack.c.h.bf16 %v2262
        %v2450 = vunpack.c.l.bf16 %v2263
        %v2451 = vunpack.c.h.bf16 %v2263
        %v2452 = vunpack.c.l.bf16 %v2264
        %v2453 = vunpack.c.h.bf16 %v2264
        %v2454 = vunpack.c.l.bf16 %v2265
        %v2455 = vunpack.c.h.bf16 %v2265
        %v2456 = vunpack.c.l.bf16 %v2266
        %v2457 = vunpack.c.h.bf16 %v2266
        %v2458 = vunpack.c.l.bf16 %v2267
        %v2459 = vunpack.c.h.bf16 %v2267
        %v2460 = vunpack.c.l.bf16 %v2268
        %v2461 = vunpack.c.h.bf16 %v2268
        %v2462 = vunpack.c.l.bf16 %v2269
        %v2463 = vunpack.c.h.bf16 %v2269
        %v2464 = vunpack.c.l.bf16 %v2270
        %v2465 = vunpack.c.h.bf16 %v2270
        %v2466 = vadd.f32 %v2434, %v2435
        %v2467 = vadd.f32 %v2466, %v2436
        %v2468 = vadd.f32 %v2467, %v2437
        %v2469 = vadd.f32 %v2468, %v2438
        %v2470 = vadd.f32 %v2469, %v2439
        %v2471 = vadd.f32 %v2470, %v2440
        %v2472 = vadd.f32 %v2471, %v2441
        %v2473 = vadd.f32 %v2472, %v2442
        %v2474 = vadd.f32 %v2473, %v2443
        %v2475 = vadd.f32 %v2474, %v2444
        %v2476 = vadd.f32 %v2475, %v2445
        %v2477 = vadd.f32 %v2476, %v2446
        %v2478 = vadd.f32 %v2477, %v2447
        %v2479 = vadd.f32 %v2478, %v2448
        %v2480 = vadd.f32 %v2479, %v2449
        %v2481 = vadd.f32 %v2480, %v2450
        %v2482 = vadd.f32 %v2481, %v2451
        %v2483 = vadd.f32 %v2482, %v2452
        %v2484 = vadd.f32 %v2483, %v2453
        %v2485 = vadd.f32 %v2484, %v2454
        %v2486 = vadd.f32 %v2485, %v2455
        %v2487 = vadd.f32 %v2486, %v2456
        %v2488 = vadd.f32 %v2487, %v2457
        %v2489 = vadd.f32 %v2488, %v2458
        %v2490 = vadd.f32 %v2489, %v2459
        %v2491 = vadd.f32 %v2490, %v2460
        %v2492 = vadd.f32 %v2491, %v2461
        %v2493 = vadd.f32 %v2492, %v2462
        %v2494 = vadd.f32 %v2493, %v2463
        %v2495 = vadd.f32 %v2494, %v2464
        %v2496 = vadd.f32 %v2495, %v2465
        %v2497 = vrot.slane %v2496, 4
        %v2498 = vadd.f32 %v2496, %v2497
        %v2499 = vrot.slane %v2498, 2
        %v2500 = vadd.f32 %v2498, %v2499
        %v2501 = vrot.slane %v2500, 1
        %v2502 = vadd.f32 %v2500, %v2501
        %2503 = vst [vmem:[%s200] sm:$0x1] %v2502
        %v2504 = vmul.f32 %v2434, %v2434
        %v2505 = vmul.f32 %v2435, %v2435
        %v2506 = vmul.f32 %v2436, %v2436
        %v2507 = vmul.f32 %v2437, %v2437
        %v2508 = vmul.f32 %v2438, %v2438
        %v2509 = vmul.f32 %v2439, %v2439
        %v2510 = vmul.f32 %v2440, %v2440
        %v2511 = vmul.f32 %v2441, %v2441
        %v2512 = vmul.f32 %v2442, %v2442
        %v2513 = vmul.f32 %v2443, %v2443
        %v2514 = vmul.f32 %v2444, %v2444
        %v2515 = vmul.f32 %v2445, %v2445
        %v2516 = vmul.f32 %v2446, %v2446
        %v2517 = vmul.f32 %v2447, %v2447
        %v2518 = vmul.f32 %v2448, %v2448
        %v2519 = vmul.f32 %v2449, %v2449
        %v2520 = vmul.f32 %v2450, %v2450
        %v2521 = vmul.f32 %v2451, %v2451
        %v2522 = vmul.f32 %v2452, %v2452
        %v2523 = vmul.f32 %v2453, %v2453
        %v2524 = vmul.f32 %v2454, %v2454
        %v2525 = vmul.f32 %v2455, %v2455
        %v2526 = vmul.f32 %v2456, %v2456
        %v2527 = vmul.f32 %v2457, %v2457
        %v2528 = vmul.f32 %v2458, %v2458
        %v2529 = vmul.f32 %v2459, %v2459
        %v2530 = vmul.f32 %v2460, %v2460
        %v2531 = vmul.f32 %v2461, %v2461
        %v2532 = vmul.f32 %v2462, %v2462
        %v2533 = vmul.f32 %v2463, %v2463
        %v2534 = vmul.f32 %v2464, %v2464
        %v2535 = vmul.f32 %v2465, %v2465
        %v2536 = vadd.f32 %v2504, %v2505
        %v2537 = vadd.f32 %v2536, %v2506
        %v2538 = vadd.f32 %v2537, %v2507
        %v2539 = vadd.f32 %v2538, %v2508
        %v2540 = vadd.f32 %v2539, %v2509
        %v2541 = vadd.f32 %v2540, %v2510
        %v2542 = vadd.f32 %v2541, %v2511
        %v2543 = vadd.f32 %v2542, %v2512
        %v2544 = vadd.f32 %v2543, %v2513
        %v2545 = vadd.f32 %v2544, %v2514
        %v2546 = vadd.f32 %v2545, %v2515
        %v2547 = vadd.f32 %v2546, %v2516
        %v2548 = vadd.f32 %v2547, %v2517
        %v2549 = vadd.f32 %v2548, %v2518
        %v2550 = vadd.f32 %v2549, %v2519
        %v2551 = vadd.f32 %v2550, %v2520
        %v2552 = vadd.f32 %v2551, %v2521
        %v2553 = vadd.f32 %v2552, %v2522
        %v2554 = vadd.f32 %v2553, %v2523
        %v2555 = vadd.f32 %v2554, %v2524
        %v2556 = vadd.f32 %v2555, %v2525
        %v2557 = vadd.f32 %v2556, %v2526
        %v2558 = vadd.f32 %v2557, %v2527
        %v2559 = vadd.f32 %v2558, %v2528
        %v2560 = vadd.f32 %v2559, %v2529
        %v2561 = vadd.f32 %v2560, %v2530
        %v2562 = vadd.f32 %v2561, %v2531
        %v2563 = vadd.f32 %v2562, %v2532
        %v2564 = vadd.f32 %v2563, %v2533
        %v2565 = vadd.f32 %v2564, %v2534
        %v2566 = vadd.f32 %v2565, %v2535
        %v2567 = vrot.slane %v2566, 4
        %v2568 = vadd.f32 %v2566, %v2567
        %v2569 = vrot.slane %v2568, 2
        %v2570 = vadd.f32 %v2568, %v2569
        %v2571 = vrot.slane %v2570, 1
        %v2572 = vadd.f32 %v2570, %v2571
        %2573 = vst [vmem:[%s200 + $0x1] sm:$0x1] %v2572
        %s2574 = sand.u32 %s92, 1
        %s2575 = scalar_lea.sflag [#allocation3], %s2574
        %s2576 = sand.u32 %s92, 1
        %s2577 = smul.addr %s2576, 144
        %s2578 = scalar_lea.vmem [#allocation2], %s2577
        %s2579 = sand.u32 %s120, 1
        %s2580 = scalar_lea.sflag [#allocation5], %s2579
        %s2581 = sand.u32 %s120, 1
        %s2582 = smul.addr %s2581, 2
        %s2583 = scalar_lea.vmem [#allocation4], %s2582
        // Predicated region
        $region29: #{tpu_custom_call.1} parent=27 // pred_check
          %p2584 = pneg %p102
        $region30: #{tpu_custom_call.1} parent=27 // pred_check_branch
          %2586 = sbr.rel (%p2584) target = $region32
        $region31: #{tpu_custom_call.1} parent=27 // pred_region
          %s2588 = ssub.s32 2304, 2304
          %2589 = vsyncadd %s2575, %s2588
          %s2590 = smul.addr %s26, 36
          %s2591 = smul.addr %s25, 36
          %s2592 = sadd.s32 %s2590, %s2591
          %s2593 = smul.addr %s2592, 64
          %s2594 = scalar_lea.hbm %s2, %s2593
          %s2595 = sshll.u32 %s2578, 4
          %s2596 = int_to_ptr.vmem [resolvable:$true] %s2595
          %2601 = dma.vmem_to_hbm [thread:$0]  %s2596, 2304, %s2594, %s2575, 64, 64, 4
        $region32: #{tpu_custom_call.1} parent=27 // pred_fallthru
          _
        // Predicated region
        $region33: #{tpu_custom_call.1} parent=27 // pred_check
          %p2602 = pneg %p130
        $region34: #{tpu_custom_call.1} parent=27 // pred_check_branch
          %2604 = sbr.rel (%p2602) target = $region36
        $region35: #{tpu_custom_call.1} parent=27 // pred_region
          %s2606 = ssub.s32 32, 32
          %2607 = vsyncadd %s2580, %s2606
          %s2608 = sadd.s32 %s26, %s25
          %s2609 = smul.addr %s2608, 32
          %s2610 = scalar_lea.hbm %s3, %s2609
          %s2612 = sshll.u32 %s2583, 4
          %s2613 = int_to_ptr.vmem [resolvable:$true] %s2612
          %2615 = dma.vmem_to_hbm [thread:$0]  %s2613, 32, %s2610, %s2580
        $region36: #{tpu_custom_call.1} parent=27 // pred_fallthru
          _
      $region28: #{tpu_custom_call.1} parent=5 // pred_fallthru
        _
      %p2616 = scmp.le.s32.totalorder 2, %s16
      // Predicated region
      $region37: #{tpu_custom_call.1} parent=5 // pred_check
        %p2617 = pneg %p2616
      $region38: #{tpu_custom_call.1} parent=5 // pred_check_branch
        %2619 = sbr.rel (%p2617) target = $region40
      $region39: #{tpu_custom_call.1} parent=5 // pred_region
        %s2620 = ssub.s32 %s16, 2
        // Predicated region
        $region41: #{tpu_custom_call.1} parent=39 // pred_check
          %p2621 = pneg %p108
        $region42: #{tpu_custom_call.1} parent=39 // pred_check_branch
          %2623 = sbr.rel (%p2621) target = $region44
        $region43: #{tpu_custom_call.1} parent=39 // pred_region
          %s2624 = sand.u32 %s93, 1
          %s2625 = scalar_lea.sflag [#allocation3], %s2624
          %s2626 = sand.u32 %s93, 1
          %s2627 = smul.addr %s2626, 144
          %s2628 = scalar_lea.vmem [#allocation2], %s2627
          %2629 = dma.done %s2625, 2304
        $region44: #{tpu_custom_call.1} parent=39 // pred_fallthru
          _
        // Predicated region
        $region45: #{tpu_custom_call.1} parent=39 // pred_check
          %p2630 = pneg %p136
        $region46: #{tpu_custom_call.1} parent=39 // pred_check_branch
          %2632 = sbr.rel (%p2630) target = $region48
        $region47: #{tpu_custom_call.1} parent=39 // pred_region
          %s2633 = sand.u32 %s121, 1
          %s2634 = scalar_lea.sflag [#allocation5], %s2633
          %s2635 = sand.u32 %s121, 1
          %s2636 = smul.addr %s2635, 2
          %s2637 = scalar_lea.vmem [#allocation4], %s2636
          %2638 = dma.done %s2634, 32
        $region48: #{tpu_custom_call.1} parent=39 // pred_fallthru
          _
      $region40: #{tpu_custom_call.1} parent=5 // pred_fallthru
        _
    $region6: #{tpu_custom_call.1} parent=1 // loop_footer
      %s20 = sadd.s32 1, %s16
    $region7: #{tpu_custom_call.1} parent=1 // loop_footer_branch
      %15 = sbr.rel target = $region3
    $region8: #{tpu_custom_call.1} parent=1 // loop_exit
      _
    %2639 = vsyncpa [#allocation3], 1
    %s2640 = scalar_lea.sflag [#allocation3], 1
    %2641 = vsyncpa %s2640, 1
    %2642 = vsyncpa [#allocation5], 1
    %s2643 = scalar_lea.sflag [#allocation5], 1
    %2644 = vsyncpa %s2643, 1

</llo_original>
